<compile_context>
chip_gen: v7x
topology: tpu7x:2x2x1
jax: 0.10.0
libtpu: 0.0.40
codegen_flags: <defaults>
</compile_context>

<pallas_src>
import functools

import jax
import jax.numpy as jnp
from jax.experimental import pallas as pl
from jax.experimental.pallas import tpu as pltpu

BN_EPS = 1e-5


def _round_up(x, m):
    return (x + m - 1) // m * m


def _cdiv(a, b):
    return (a + b - 1) // b


def _set_conv_kernel(x_ref, w_ref, b_ref, gamma_ref, beta_ref, mask_ref, o_ref,
                     col_ref, y_ref, c_ref, r_ref, m_ref, *,
                     K, N, Hin, Wst, Wlog, CPAD, BC, conv_dtype):
    # x_ref:    (CPAD, NHW_in)      channel-major flat input slab (lane-dense)
    # w_ref:    (1, K*BC, K*CPAD)   rows = dx*BC + cout_local, cols = dy*CPAD + cin
    # b/gamma/beta_ref: (1, BC, 1)
    # mask_ref: (1, L_M)            1.0 where this layer's pooled output is valid
    # o_ref:    (BC, N*Hp*Wst)      H-repacked lane-dense output slab
    # col_ref:  (K*CPAD, L_Y)       im2col scratch (dy row-shifts only), conv_dtype
    # y_ref:    (K*BC, L_Y)         matmul result (per-dx partials), f32
    # c_ref:    (BC, L_C)           conv + bias + ReLU, f32
    # r_ref:    (BC, L_R)           row-max, f32
    # m_ref:    (BC, L_M)           pooled, f32
    NHW_in = x_ref.shape[1]
    L_Y = col_ref.shape[1]
    L_C = c_ref.shape[1]
    L_R = r_ref.shape[1]
    L_M = m_ref.shape[1]
    HWin = Hin * Wst
    Hp = Hin - 2 * (K - 1)
    Wp = Wlog - 2 * (K - 1)
    HWout = Hp * Wst

    # ---- im2col: only K row-shifted (dy) copies, cast to the MXU input dtype.
    #      Only the columns needed by valid outputs are ever read; unwritten
    #      tails are garbage that can only reach invalid (masked) positions.
    for dy in range(K):
        s = dy * Wst
        cols = min(L_Y, NHW_in - s)
        col_ref[dy * CPAD:(dy + 1) * CPAD, 0:cols] = (
            x_ref[:, s:s + cols].astype(conv_dtype))

    # ---- Conv2d: one deep MXU matmul (f32 accumulate), then K-1 lane-shifted
    #      adds to fold in the dx taps; bias + ReLU on the VPU.
    y_ref[...] = jnp.dot(w_ref[0], col_ref[...],
                         preferred_element_type=jnp.float32)
    acc = y_ref[0:BC, 0:L_C]
    for dx in range(1, K):
        acc = acc + y_ref[dx * BC:(dx + 1) * BC, dx:dx + L_C]
    c_ref[...] = jnp.maximum(acc + b_ref[0], 0.0)

    # ---- MaxPool2d (k=K, stride 1), separable: K-1 row maxes + K-1 col maxes.
    r = c_ref[:, 0:L_R]
    for py in range(1, K):
        r = jnp.maximum(r, c_ref[:, py * Wst:py * Wst + L_R])
    r_ref[...] = r
    m = r_ref[:, 0:L_M]
    for px in range(1, K):
        m = jnp.maximum(m, r_ref[:, px:px + L_M])
    m_ref[...] = m

    # ---- BatchNorm2d (training-mode batch stats over the valid pooled region):
    #      NaN-safe masked one-pass sum / sum-of-squares -> per-channel
    #      scale/shift.
    mm = jnp.where(mask_ref[...] > 0.5, m_ref[...], 0.0)
    inv_cnt = 1.0 / float(N * Hp * Wp)
    s1 = jnp.sum(mm, axis=1, keepdims=True)                      # (BC, 1)
    s2 = jnp.sum(mm * mm, axis=1, keepdims=True)                 # (BC, 1)
    mean = s1 * inv_cnt
    var = s2 * inv_cnt - mean * mean
    scale = gamma_ref[0] * jax.lax.rsqrt(var + BN_EPS)
    shift = beta_ref[0] - mean * scale

    # ---- Store, repacking the storage height from Hin down to the Hp valid
    #      rows so the next layer never computes over dead rows.
    for n in range(N):
        o_ref[:, n * HWout:(n + 1) * HWout] = (
            m_ref[:, n * HWin:n * HWin + HWout] * scale + shift)


def _set_conv_layer(x_flat, w_oihw, bias, gamma, beta, *, N, Hin, Wst, Wlog,
                    conv_dtype):
    """One set_conv layer.  x_flat: (Cin, N*Hin*Wst); valid width is Wlog<=Wst."""
    Cout, Cin, K, _ = w_oihw.shape
    HWin = Hin * Wst
    NHW_in = N * HWin
    assert x_flat.shape == (Cin, NHW_in), (x_flat.shape, (Cin, NHW_in))
    Ho, Wo = Hin - (K - 1), Wlog - (K - 1)
    Hp, Wp = Ho - (K - 1), Wo - (K - 1)
    assert Hp >= 1 and Wp >= 1

    CPAD = _round_up(Cin, 8)
    BC = min(128, _round_up(Cout, 8))      # Cout block (grid axis, "parallel")
    G = _cdiv(Cout, BC)
    Cout_pad = G * BC

    HWout = Hp * Wst
    NHW_out = N * HWout
    # Lane extents (multiples of 128) of the staged intermediates.
    L_M = _round_up((N - 1) * HWin + HWout, 128)      # pooled extent
    L_R = _round_up(L_M + (K - 1), 128)               # row-max extent
    L_C = _round_up(L_R + (K - 1) * Wst, 128)         # conv extent
    L_Y = _round_up(L_C + (K - 1), 128)               # matmul / im2col extent

    # Pad input channels to a sublane multiple once (first layer only) so the
    # im2col copies write full 8-row blocks and no pad rows need zeroing.
    if CPAD != Cin:
        x_flat = jnp.pad(x_flat, ((0, CPAD - Cin), (0, 0)))

    # Weights as (G, K*BC, K*CPAD): row = dx*BC + cout_local, col = dy*CPAD + cin.
    w = jnp.transpose(w_oihw.astype(jnp.float32), (3, 0, 2, 1))  # (dx,Cout,dy,Cin)
    w = jnp.pad(w, ((0, 0), (0, Cout_pad - Cout), (0, 0), (0, CPAD - Cin)))
    w = w.reshape(K, G, BC, K, CPAD).transpose(1, 0, 2, 3, 4)
    w_mat = w.reshape(G, K * BC, K * CPAD).astype(conv_dtype)

    def pack_vec(v):
        v = jnp.pad(v.astype(jnp.float32).reshape(-1), (0, Cout_pad - Cout))
        return v.reshape(G, BC, 1)

    # Validity mask of this layer's pooled output over the (Hin, Wst) storage
    # grid (static -> constant folded by XLA); applied as a NaN-safe select in
    # the kernel so unwritten scratch tails can never poison the BN statistics.
    Jp_max = (N - 1) * HWin + (Hp - 1) * Wst + (Wp - 1)
    jp = jnp.arange(L_M, dtype=jnp.int32)
    rem = jp % HWin
    mask = (((rem // Wst) < Hp) & ((rem % Wst) < Wp) & (jp <= Jp_max))
    mask = mask.astype(jnp.float32).reshape(1, L_M)

    kernel = functools.partial(
        _set_conv_kernel, K=K, N=N, Hin=Hin, Wst=Wst, Wlog=Wlog,
        CPAD=CPAD, BC=BC, conv_dtype=conv_dtype)

    conv_bytes = jnp.dtype(conv_dtype).itemsize
    scratch_shapes = [
        pltpu.VMEM((K * CPAD, L_Y), conv_dtype),   # im2col (dy shifts only)
        pltpu.VMEM((K * BC, L_Y), jnp.float32),    # matmul result (dx partials)
        pltpu.VMEM((BC, L_C), jnp.float32),        # conv + bias + ReLU
        pltpu.VMEM((BC, L_R), jnp.float32),        # row-max
        pltpu.VMEM((BC, L_M), jnp.float32),        # pooled
    ]
    scratch_bytes = (K * CPAD * L_Y * conv_bytes + K * BC * L_Y * 4
                     + BC * (L_C + L_R + L_M) * 4)
    io_bytes = 2 * (CPAD * NHW_in * 4 + L_M * 4
                    + K * BC * K * CPAD * conv_bytes + 3 * BC * 4
                    + BC * NHW_out * 4)
    vmem_limit = int(min(127 * 2**20,
                         (scratch_bytes + io_bytes) * 5 // 4 + 8 * 2**20))

    flops = 2 * G * (K * BC) * (K * CPAD) * L_Y + 14 * Cout_pad * L_C
    bytes_accessed = (4 * (CPAD * NHW_in + Cout_pad * NHW_out)
                      + conv_bytes * Cout_pad * K * K * CPAD)

    out = pl.pallas_call(
        kernel,
        out_shape=jax.ShapeDtypeStruct((Cout_pad, NHW_out), jnp.float32),
        grid=(G,),
        in_specs=[
            pl.BlockSpec((CPAD, NHW_in), lambda g: (0, 0)),            # x
            pl.BlockSpec((1, K * BC, K * CPAD), lambda g: (g, 0, 0)),  # w
            pl.BlockSpec((1, BC, 1), lambda g: (g, 0, 0)),             # bias
            pl.BlockSpec((1, BC, 1), lambda g: (g, 0, 0)),             # gamma
            pl.BlockSpec((1, BC, 1), lambda g: (g, 0, 0)),             # beta
            pl.BlockSpec((1, L_M), lambda g: (0, 0)),                  # mask
        ],
        out_specs=pl.BlockSpec((BC, NHW_out), lambda g: (g, 0)),
        scratch_shapes=scratch_shapes,
        compiler_params=pltpu.CompilerParams(
            dimension_semantics=("parallel",),
            vmem_limit_bytes=vmem_limit),
        cost_estimate=pl.CostEstimate(
            flops=flops, transcendentals=Cout_pad,
            bytes_accessed=bytes_accessed),
    )(x_flat.astype(jnp.float32), w_mat, pack_vec(bias), pack_vec(gamma),
      pack_vec(beta), mask)

    if Cout_pad != Cout:
        out = out[:Cout]
    return out, Hp, Wp


def b_encoder_conv_forward(x_nchw, layer_params, conv_dtype=jnp.bfloat16):
    """Pallas forward of b_encoder_conv.  NCHW in, NCHW out."""
    N, C0, H, W = x_nchw.shape
    # Single entry transpose to channel-major, then a free flatten.
    xf = jnp.transpose(x_nchw, (1, 0, 2, 3)).reshape(C0, N * H * W)
    xf = xf.astype(jnp.float32)
    Hin, Wst, Wlog = H, W, W
    for (w, b, g, bt) in layer_params:
        xf, Hp, Wp = _set_conv_layer(xf, w, b, g, bt, N=N, Hin=Hin, Wst=Wst,
                                     Wlog=Wlog, conv_dtype=conv_dtype)
        Hin, Wlog = Hp, Wp          # storage H is repacked to Hp by the kernel
    C_last = layer_params[-1][0].shape[0]
    out_full = xf.reshape(C_last, N, Hin, Wst)[:, :, :, :Wlog]
    return jnp.transpose(out_full, (1, 0, 2, 3))


# ----------------------------- pure-JAX reference -----------------------------
def _reference_set_conv(x, w, b, gamma, beta, conv_dtype):
    K = w.shape[2]
    y = jax.lax.conv_general_dilated(
        x.astype(conv_dtype), w.astype(conv_dtype),
        window_strides=(1, 1), padding='VALID',
        dimension_numbers=('NCHW', 'OIHW', 'NCHW'),
        preferred_element_type=jnp.float32)
    y = jnp.maximum(y + b.reshape(1, -1, 1, 1), 0.0)
    m = jax.lax.reduce_window(y, -jnp.inf, jax.lax.max,
                              (1, 1, K, K), (1, 1, 1, 1), 'VALID')
    mean = m.mean(axis=(0, 2, 3), keepdims=True)
    var = jnp.mean((m - mean) ** 2, axis=(0, 2, 3), keepdims=True)
    return (gamma.reshape(1, -1, 1, 1) * (m - mean) * jax.lax.rsqrt(var + BN_EPS)
            + beta.reshape(1, -1, 1, 1))


def _reference_encoder(x, params, conv_dtype):
    for (w, b, g, bt) in params:
        x = _reference_set_conv(x, w, b, g, bt, conv_dtype)
    return x


if __name__ == "__main__":
    N, H, W = 2, 24, 24
    image_channels = 3
    repr_sizes = [8, 8]          # small stand-in for the default [32, 64, 128, 256]
    K = 5
    chans = [image_channels] + repr_sizes

    key = jax.random.PRNGKey(0)
    params = []
    for cin, cout in zip(chans[:-1], chans[1:]):
        key, kw, kb, kg, kbt = jax.random.split(key, 5)
        w = 0.1 * jax.random.normal(kw, (cout, cin, K, K), dtype=jnp.float32)
        b = 0.1 * jax.random.normal(kb, (cout,), dtype=jnp.float32)
        g = 1.0 + 0.1 * jax.random.normal(kg, (cout,), dtype=jnp.float32)
        bt = 0.1 * jax.random.normal(kbt, (cout,), dtype=jnp.float32)
        params.append((w, b, g, bt))

    key, kx = jax.random.split(key)
    x = jax.random.normal(kx, (N, image_channels, H, W), dtype=jnp.float32)

    expected_hw = H - 2 * (K - 1) * len(repr_sizes)

    # Fast path: bf16 MXU matmul (f32 accumulation), validated against a
    # reference whose conv also uses bf16 inputs / f32 accumulation.
    fwd_bf16 = jax.jit(functools.partial(b_encoder_conv_forward,
                                         conv_dtype=jnp.bfloat16))
    out_bf16 = jax.block_until_ready(fwd_bf16(x, params))
    assert out_bf16.shape == (N, repr_sizes[-1], expected_hw, expected_hw), \
        out_bf16.shape
    ref_bf16 = _reference_encoder(x, params, jnp.bfloat16)
    err_bf16 = float(jnp.max(jnp.abs(out_bf16 - ref_bf16)))
    assert jnp.allclose(out_bf16, ref_bf16, atol=1e-2, rtol=1e-2), err_bf16

    # Full-precision path: matches the fp32 module semantics to tight tolerance.
    fwd_f32 = jax.jit(functools.partial(b_encoder_conv_forward,
                                        conv_dtype=jnp.float32))
    out_f32 = jax.block_until_ready(fwd_f32(x, params))
    assert out_f32.shape == (N, repr_sizes[-1], expected_hw, expected_hw), \
        out_f32.shape
    ref_f32 = _reference_encoder(x, params, jnp.float32)
    err_f32 = float(jnp.max(jnp.abs(out_f32 - ref_f32)))
    assert jnp.allclose(out_f32, ref_f32, atol=2e-3, rtol=2e-3), err_f32

    print("KERNEL_OK")
</pallas_src>

<mosaic_0001>
module attributes {stable_mosaic.version = 11 : i64} {
  func.func @_set_conv_kernel(%arg0: i32, %arg1: memref<8x1152xf32, #tpu.memory_space<vmem>>, %arg2: memref<1x40x40xbf16, #tpu.memory_space<vmem>>, %arg3: memref<1x8x1xf32, #tpu.memory_space<vmem>>, %arg4: memref<1x8x1xf32, #tpu.memory_space<vmem>>, %arg5: memref<1x8x1xf32, #tpu.memory_space<vmem>>, %arg6: memref<1x1024xf32, #tpu.memory_space<vmem>>, %arg7: memref<8x768xf32, #tpu.memory_space<vmem>>, %arg8: memref<40x1408xbf16, #tpu.memory_space<vmem>>, %arg9: memref<40x1408xf32, #tpu.memory_space<vmem>>, %arg10: memref<8x1280xf32, #tpu.memory_space<vmem>>, %arg11: memref<8x1152xf32, #tpu.memory_space<vmem>>, %arg12: memref<8x1024xf32, #tpu.memory_space<vmem>>) attributes {dimension_semantics = [#tpu.dimension_semantics<parallel>], iteration_bounds = array<i64: 1>, scalar_prefetch = 0 : i64, scratch_operands = 5 : i64, tpu.core_type = #tpu.core_type<tc>, window_params = [{pipeline_mode = #tpu.pipeline_mode<synchronous>, transform_indices = @transform_0, window_bounds = array<i64: 8, 1152>}, {transform_indices = @transform_1, window_bounds = array<i64: 1, 40, 40>}, {transform_indices = @transform_2, window_bounds = array<i64: 1, 8, 1>}, {transform_indices = @transform_3, window_bounds = array<i64: 1, 8, 1>}, {transform_indices = @transform_4, window_bounds = array<i64: 1, 8, 1>}, {pipeline_mode = #tpu.pipeline_mode<synchronous>, transform_indices = @transform_5, window_bounds = array<i64: 1, 1024>}, {transform_indices = @transform_6, window_bounds = array<i64: 8, 768>}]} {
    %c0 = arith.constant 0 : index
    %c0_0 = arith.constant 0 : index
    %0 = vector.load %arg1[%c0, %c0_0] : memref<8x1152xf32, #tpu.memory_space<vmem>>, vector<8x1152xf32>
    %1 = arith.truncf %0 : vector<8x1152xf32> to vector<8x1152xbf16>
    %c0_1 = arith.constant 0 : index
    %c0_2 = arith.constant 0 : index
    %2 = vector.load %arg8[%c0_1, %c0_2] : memref<40x1408xbf16, #tpu.memory_space<vmem>>, vector<8x1152xbf16>
    tpu.vector_store %arg8[%c0_1, %c0_2], %1 {strides = array<i32>} : memref<40x1408xbf16, #tpu.memory_space<vmem>>, vector<8x1152xbf16>,
    %c0_3 = arith.constant 0 : index
    %c24 = arith.constant 24 : index
    %3 = vector.load %arg1[%c0_3, %c24] : memref<8x1152xf32, #tpu.memory_space<vmem>>, vector<8x1128xf32>
    %4 = arith.truncf %3 : vector<8x1128xf32> to vector<8x1128xbf16>
    %c8 = arith.constant 8 : index
    %c0_4 = arith.constant 0 : index
    %5 = vector.load %arg8[%c8, %c0_4] : memref<40x1408xbf16, #tpu.memory_space<vmem>>, vector<8x1128xbf16>
    tpu.vector_store %arg8[%c8, %c0_4], %4 {strides = array<i32>} : memref<40x1408xbf16, #tpu.memory_space<vmem>>, vector<8x1128xbf16>,
    %c0_5 = arith.constant 0 : index
    %c48 = arith.constant 48 : index
    %6 = vector.load %arg1[%c0_5, %c48] : memref<8x1152xf32, #tpu.memory_space<vmem>>, vector<8x1104xf32>
    %7 = arith.truncf %6 : vector<8x1104xf32> to vector<8x1104xbf16>
    %c16 = arith.constant 16 : index
    %c0_6 = arith.constant 0 : index
    %8 = vector.load %arg8[%c16, %c0_6] : memref<40x1408xbf16, #tpu.memory_space<vmem>>, vector<8x1104xbf16>
    tpu.vector_store %arg8[%c16, %c0_6], %7 {strides = array<i32>} : memref<40x1408xbf16, #tpu.memory_space<vmem>>, vector<8x1104xbf16>,
    %c0_7 = arith.constant 0 : index
    %c72 = arith.constant 72 : index
    %9 = vector.load %arg1[%c0_7, %c72] : memref<8x1152xf32, #tpu.memory_space<vmem>>, vector<8x1080xf32>
    %10 = arith.truncf %9 : vector<8x1080xf32> to vector<8x1080xbf16>
    %c24_8 = arith.constant 24 : index
    %c0_9 = arith.constant 0 : index
    %11 = vector.load %arg8[%c24_8, %c0_9] : memref<40x1408xbf16, #tpu.memory_space<vmem>>, vector<8x1080xbf16>
    tpu.vector_store %arg8[%c24_8, %c0_9], %10 {strides = array<i32>} : memref<40x1408xbf16, #tpu.memory_space<vmem>>, vector<8x1080xbf16>,
    %c0_10 = arith.constant 0 : index
    %c96 = arith.constant 96 : index
    %12 = vector.load %arg1[%c0_10, %c96] : memref<8x1152xf32, #tpu.memory_space<vmem>>, vector<8x1056xf32>
    %13 = arith.truncf %12 : vector<8x1056xf32> to vector<8x1056xbf16>
    %c32 = arith.constant 32 : index
    %c0_11 = arith.constant 0 : index
    %14 = vector.load %arg8[%c32, %c0_11] : memref<40x1408xbf16, #tpu.memory_space<vmem>>, vector<8x1056xbf16>
    tpu.vector_store %arg8[%c32, %c0_11], %13 {strides = array<i32>} : memref<40x1408xbf16, #tpu.memory_space<vmem>>, vector<8x1056xbf16>,
    %c0_12 = arith.constant 0 : index
    %c0_13 = arith.constant 0 : index
    %c0_14 = arith.constant 0 : index
    %15 = vector.load %arg2[%c0_12, %c0_13, %c0_14] : memref<1x40x40xbf16, #tpu.memory_space<vmem>>, vector<1x40x40xbf16>
    %16 = vector.shape_cast %15 : vector<1x40x40xbf16> to vector<40x40xbf16>
    %c0_15 = arith.constant 0 : index
    %c0_16 = arith.constant 0 : index
    %17 = vector.load %arg8[%c0_15, %c0_16] : memref<40x1408xbf16, #tpu.memory_space<vmem>>, vector<40x1408xbf16>
    %cst = arith.constant dense<0.000000e+00> : vector<40x1408xf32>
    %18 = tpu.matmul %16, %17, %cst {dimension_numbers = #tpu.dot_dimension_numbers<[1], [0], [0], [1], [0, 0, 1, 1], [], []>} : vector<40x40xbf16>, vector<40x1408xbf16>, vector<40x1408xf32> -> vector<40x1408xf32>
    %c0_17 = arith.constant 0 : index
    %c0_18 = arith.constant 0 : index
    %19 = vector.load %arg9[%c0_17, %c0_18] : memref<40x1408xf32, #tpu.memory_space<vmem>>, vector<40x1408xf32>
    tpu.vector_store %arg9[%c0_17, %c0_18], %18 {strides = array<i32>} : memref<40x1408xf32, #tpu.memory_space<vmem>>, vector<40x1408xf32>,
    %c0_19 = arith.constant 0 : index
    %c0_20 = arith.constant 0 : index
    %20 = vector.load %arg9[%c0_19, %c0_20] : memref<40x1408xf32, #tpu.memory_space<vmem>>, vector<8x1280xf32>
    %c8_21 = arith.constant 8 : index
    %c1 = arith.constant 1 : index
    %21 = vector.load %arg9[%c8_21, %c1] : memref<40x1408xf32, #tpu.memory_space<vmem>>, vector<8x1280xf32>
    %22 = arith.addf %20, %21 : vector<8x1280xf32>
    %c16_22 = arith.constant 16 : index
    %c2 = arith.constant 2 : index
    %23 = vector.load %arg9[%c16_22, %c2] : memref<40x1408xf32, #tpu.memory_space<vmem>>, vector<8x1280xf32>
    %24 = arith.addf %22, %23 : vector<8x1280xf32>
    %c24_23 = arith.constant 24 : index
    %c3 = arith.constant 3 : index
    %25 = vector.load %arg9[%c24_23, %c3] : memref<40x1408xf32, #tpu.memory_space<vmem>>, vector<8x1280xf32>
    %26 = arith.addf %24, %25 : vector<8x1280xf32>
    %c32_24 = arith.constant 32 : index
    %c4 = arith.constant 4 : index
    %27 = vector.load %arg9[%c32_24, %c4] : memref<40x1408xf32, #tpu.memory_space<vmem>>, vector<8x1280xf32>
    %28 = arith.addf %26, %27 : vector<8x1280xf32>
    %c0_25 = arith.constant 0 : index
    %c0_26 = arith.constant 0 : index
    %c0_27 = arith.constant 0 : index
    %29 = vector.load %arg3[%c0_25, %c0_26, %c0_27] : memref<1x8x1xf32, #tpu.memory_space<vmem>>, vector<1x8x1xf32>
    %30 = vector.shape_cast %29 : vector<1x8x1xf32> to vector<8x1xf32>
    %31 = vector.broadcast %30 : vector<8x1xf32> to vector<8x1280xf32>
    %32 = arith.addf %28, %31 : vector<8x1280xf32>
    %cst_28 = arith.constant 0.000000e+00 : f32
    %33 = vector.broadcast %cst_28 : f32 to vector<8x1280xf32>
    %34 = arith.maximumf %32, %33 : vector<8x1280xf32>
    %c0_29 = arith.constant 0 : index
    %c0_30 = arith.constant 0 : index
    %35 = vector.load %arg10[%c0_29, %c0_30] : memref<8x1280xf32, #tpu.memory_space<vmem>>, vector<8x1280xf32>
    tpu.vector_store %arg10[%c0_29, %c0_30], %34 {strides = array<i32>} : memref<8x1280xf32, #tpu.memory_space<vmem>>, vector<8x1280xf32>,
    %c0_31 = arith.constant 0 : index
    %c0_32 = arith.constant 0 : index
    %36 = vector.load %arg10[%c0_31, %c0_32] : memref<8x1280xf32, #tpu.memory_space<vmem>>, vector<8x1152xf32>
    %c0_33 = arith.constant 0 : index
    %c24_34 = arith.constant 24 : index
    %37 = vector.load %arg10[%c0_33, %c24_34] : memref<8x1280xf32, #tpu.memory_space<vmem>>, vector<8x1152xf32>
    %38 = arith.maximumf %36, %37 : vector<8x1152xf32>
    %c0_35 = arith.constant 0 : index
    %c48_36 = arith.constant 48 : index
    %39 = vector.load %arg10[%c0_35, %c48_36] : memref<8x1280xf32, #tpu.memory_space<vmem>>, vector<8x1152xf32>
    %40 = arith.maximumf %38, %39 : vector<8x1152xf32>
    %c0_37 = arith.constant 0 : index
    %c72_38 = arith.constant 72 : index
    %41 = vector.load %arg10[%c0_37, %c72_38] : memref<8x1280xf32, #tpu.memory_space<vmem>>, vector<8x1152xf32>
    %42 = arith.maximumf %40, %41 : vector<8x1152xf32>
    %c0_39 = arith.constant 0 : index
    %c96_40 = arith.constant 96 : index
    %43 = vector.load %arg10[%c0_39, %c96_40] : memref<8x1280xf32, #tpu.memory_space<vmem>>, vector<8x1152xf32>
    %44 = arith.maximumf %42, %43 : vector<8x1152xf32>
    %c0_41 = arith.constant 0 : index
    %c0_42 = arith.constant 0 : index
    %45 = vector.load %arg11[%c0_41, %c0_42] : memref<8x1152xf32, #tpu.memory_space<vmem>>, vector<8x1152xf32>
    tpu.vector_store %arg11[%c0_41, %c0_42], %44 {strides = array<i32>} : memref<8x1152xf32, #tpu.memory_space<vmem>>, vector<8x1152xf32>,
    %c0_43 = arith.constant 0 : index
    %c0_44 = arith.constant 0 : index
    %46 = vector.load %arg11[%c0_43, %c0_44] : memref<8x1152xf32, #tpu.memory_space<vmem>>, vector<8x1024xf32>
    %c0_45 = arith.constant 0 : index
    %c1_46 = arith.constant 1 : index
    %47 = vector.load %arg11[%c0_45, %c1_46] : memref<8x1152xf32, #tpu.memory_space<vmem>>, vector<8x1024xf32>
    %48 = arith.maximumf %46, %47 : vector<8x1024xf32>
    %c0_47 = arith.constant 0 : index
    %c2_48 = arith.constant 2 : index
    %49 = vector.load %arg11[%c0_47, %c2_48] : memref<8x1152xf32, #tpu.memory_space<vmem>>, vector<8x1024xf32>
    %50 = arith.maximumf %48, %49 : vector<8x1024xf32>
    %c0_49 = arith.constant 0 : index
    %c3_50 = arith.constant 3 : index
    %51 = vector.load %arg11[%c0_49, %c3_50] : memref<8x1152xf32, #tpu.memory_space<vmem>>, vector<8x1024xf32>
    %52 = arith.maximumf %50, %51 : vector<8x1024xf32>
    %c0_51 = arith.constant 0 : index
    %c4_52 = arith.constant 4 : index
    %53 = vector.load %arg11[%c0_51, %c4_52] : memref<8x1152xf32, #tpu.memory_space<vmem>>, vector<8x1024xf32>
    %54 = arith.maximumf %52, %53 : vector<8x1024xf32>
    %c0_53 = arith.constant 0 : index
    %c0_54 = arith.constant 0 : index
    %55 = vector.load %arg12[%c0_53, %c0_54] : memref<8x1024xf32, #tpu.memory_space<vmem>>, vector<8x1024xf32>
    tpu.vector_store %arg12[%c0_53, %c0_54], %54 {strides = array<i32>} : memref<8x1024xf32, #tpu.memory_space<vmem>>, vector<8x1024xf32>,
    %c0_55 = arith.constant 0 : index
    %c0_56 = arith.constant 0 : index
    %56 = vector.load %arg6[%c0_55, %c0_56] : memref<1x1024xf32, #tpu.memory_space<vmem>>, vector<1x1024xf32>
    %cst_57 = arith.constant 5.000000e-01 : f32
    %57 = vector.broadcast %cst_57 : f32 to vector<1x1024xf32>
    %58 = arith.cmpf ogt, %56, %57 : vector<1x1024xf32>
    %c0_58 = arith.constant 0 : index
    %c0_59 = arith.constant 0 : index
    %59 = vector.load %arg12[%c0_58, %c0_59] : memref<8x1024xf32, #tpu.memory_space<vmem>>, vector<8x1024xf32>
    %cst_60 = arith.constant 0.000000e+00 : f32
    %60 = vector.shape_cast %58 : vector<1x1024xi1> to vector<1x1024xi1>
    %61 = vector.broadcast %60 : vector<1x1024xi1> to vector<8x1024xi1>
    %62 = vector.broadcast %cst_60 : f32 to vector<8x1024xf32>
    %63 = arith.select %61, %59, %62 : vector<8x1024xi1>, vector<8x1024xf32>
    %cst_61 = arith.constant dense<0.000000e+00> : vector<8xf32>
    %64 = vector.multi_reduction <add>, %63, %cst_61 [1] : vector<8x1024xf32> to vector<8xf32>
    %65 = vector.shape_cast %64 : vector<8xf32> to vector<8x1xf32>
    %66 = arith.mulf %63, %63 : vector<8x1024xf32>
    %cst_62 = arith.constant dense<0.000000e+00> : vector<8xf32>
    %67 = vector.multi_reduction <add>, %66, %cst_62 [1] : vector<8x1024xf32> to vector<8xf32>
    %68 = vector.shape_cast %67 : vector<8xf32> to vector<8x1xf32>
    %cst_63 = arith.constant 0.001953125 : f32
    %69 = vector.broadcast %cst_63 : f32 to vector<8x1xf32>
    %70 = arith.mulf %65, %69 : vector<8x1xf32>
    %cst_64 = arith.constant 0.001953125 : f32
    %71 = vector.broadcast %cst_64 : f32 to vector<8x1xf32>
    %72 = arith.mulf %68, %71 : vector<8x1xf32>
    %73 = arith.mulf %70, %70 : vector<8x1xf32>
    %74 = arith.subf %72, %73 : vector<8x1xf32>
    %c0_65 = arith.constant 0 : index
    %c0_66 = arith.constant 0 : index
    %c0_67 = arith.constant 0 : index
    %75 = vector.load %arg4[%c0_65, %c0_66, %c0_67] : memref<1x8x1xf32, #tpu.memory_space<vmem>>, vector<1x8x1xf32>
    %76 = vector.shape_cast %75 : vector<1x8x1xf32> to vector<8x1xf32>
    %cst_68 = arith.constant 9.99999974E-6 : f32
    %77 = vector.broadcast %cst_68 : f32 to vector<8x1xf32>
    %78 = arith.addf %74, %77 : vector<8x1xf32>
    %79 = math.rsqrt %78 : vector<8x1xf32>
    %80 = arith.mulf %76, %79 : vector<8x1xf32>
    %c0_69 = arith.constant 0 : index
    %c0_70 = arith.constant 0 : index
    %c0_71 = arith.constant 0 : index
    %81 = vector.load %arg5[%c0_69, %c0_70, %c0_71] : memref<1x8x1xf32, #tpu.memory_space<vmem>>, vector<1x8x1xf32>
    %82 = vector.shape_cast %81 : vector<1x8x1xf32> to vector<8x1xf32>
    %83 = arith.mulf %70, %80 : vector<8x1xf32>
    %84 = arith.subf %82, %83 : vector<8x1xf32>
    %c0_72 = arith.constant 0 : index
    %c0_73 = arith.constant 0 : index
    %85 = vector.load %arg12[%c0_72, %c0_73] : memref<8x1024xf32, #tpu.memory_space<vmem>>, vector<8x384xf32>
    %86 = vector.broadcast %80 : vector<8x1xf32> to vector<8x384xf32>
    %87 = arith.mulf %85, %86 : vector<8x384xf32>
    %88 = vector.broadcast %84 : vector<8x1xf32> to vector<8x384xf32>
    %89 = arith.addf %87, %88 : vector<8x384xf32>
    %c0_74 = arith.constant 0 : index
    %c0_75 = arith.constant 0 : index
    %90 = vector.load %arg7[%c0_74, %c0_75] : memref<8x768xf32, #tpu.memory_space<vmem>>, vector<8x384xf32>
    tpu.vector_store %arg7[%c0_74, %c0_75], %89 {strides = array<i32>} : memref<8x768xf32, #tpu.memory_space<vmem>>, vector<8x384xf32>,
    %c0_76 = arith.constant 0 : index
    %c576 = arith.constant 576 : index
    %91 = vector.load %arg12[%c0_76, %c576] : memref<8x1024xf32, #tpu.memory_space<vmem>>, vector<8x384xf32>
    %92 = vector.broadcast %80 : vector<8x1xf32> to vector<8x384xf32>
    %93 = arith.mulf %91, %92 : vector<8x384xf32>
    %94 = vector.broadcast %84 : vector<8x1xf32> to vector<8x384xf32>
    %95 = arith.addf %93, %94 : vector<8x384xf32>
    %c0_77 = arith.constant 0 : index
    %c384 = arith.constant 384 : index
    %96 = vector.load %arg7[%c0_77, %c384] : memref<8x768xf32, #tpu.memory_space<vmem>>, vector<8x384xf32>
    tpu.vector_store %arg7[%c0_77, %c384], %95 {strides = array<i32>} : memref<8x768xf32, #tpu.memory_space<vmem>>, vector<8x384xf32>,
    return
  }
  func.func @transform_0(%arg0: i32) -> (i32, i32) {
    %c0_i32 = arith.constant 0 : i32
    %c0_i32_0 = arith.constant 0 : i32
    %c0_i32_1 = arith.constant 0 : i32
    return %c0_i32, %c0_i32_0 : i32, i32
  }
  func.func @transform_1(%arg0: i32) -> (i32, i32, i32) {
    %c0_i32 = arith.constant 0 : i32
    %c0_i32_0 = arith.constant 0 : i32
    %c0_i32_1 = arith.constant 0 : i32
    return %arg0, %c0_i32, %c0_i32_0 : i32, i32, i32
  }
  func.func @transform_2(%arg0: i32) -> (i32, i32, i32) {
    %c0_i32 = arith.constant 0 : i32
    %c0_i32_0 = arith.constant 0 : i32
    %c0_i32_1 = arith.constant 0 : i32
    return %arg0, %c0_i32, %c0_i32_0 : i32, i32, i32
  }
  func.func @transform_3(%arg0: i32) -> (i32, i32, i32) {
    %c0_i32 = arith.constant 0 : i32
    %c0_i32_0 = arith.constant 0 : i32
    %c0_i32_1 = arith.constant 0 : i32
    return %arg0, %c0_i32, %c0_i32_0 : i32, i32, i32
  }
  func.func @transform_4(%arg0: i32) -> (i32, i32, i32) {
    %c0_i32 = arith.constant 0 : i32
    %c0_i32_0 = arith.constant 0 : i32
    %c0_i32_1 = arith.constant 0 : i32
    return %arg0, %c0_i32, %c0_i32_0 : i32, i32, i32
  }
  func.func @transform_5(%arg0: i32) -> (i32, i32) {
    %c0_i32 = arith.constant 0 : i32
    %c0_i32_0 = arith.constant 0 : i32
    %c0_i32_1 = arith.constant 0 : i32
    return %c0_i32, %c0_i32_0 : i32, i32
  }
  func.func @transform_6(%arg0: i32) -> (i32, i32) {
    %c0_i32 = arith.constant 0 : i32
    %c0_i32_0 = arith.constant 0 : i32
    return %arg0, %c0_i32 : i32, i32
  }
}

module attributes {stable_mosaic.version = 11 : i64} {
  func.func @_set_conv_kernel(%arg0: i32, %arg1: memref<8x768xf32, #tpu.memory_space<vmem>>, %arg2: memref<1x40x40xbf16, #tpu.memory_space<vmem>>, %arg3: memref<1x8x1xf32, #tpu.memory_space<vmem>>, %arg4: memref<1x8x1xf32, #tpu.memory_space<vmem>>, %arg5: memref<1x8x1xf32, #tpu.memory_space<vmem>>, %arg6: memref<1x640xf32, #tpu.memory_space<vmem>>, %arg7: memref<8x384xf32, #tpu.memory_space<vmem>>, %arg8: memref<40x1024xbf16, #tpu.memory_space<vmem>>, %arg9: memref<40x1024xf32, #tpu.memory_space<vmem>>, %arg10: memref<8x896xf32, #tpu.memory_space<vmem>>, %arg11: memref<8x768xf32, #tpu.memory_space<vmem>>, %arg12: memref<8x640xf32, #tpu.memory_space<vmem>>) attributes {dimension_semantics = [#tpu.dimension_semantics<parallel>], iteration_bounds = array<i64: 1>, scalar_prefetch = 0 : i64, scratch_operands = 5 : i64, tpu.core_type = #tpu.core_type<tc>, window_params = [{pipeline_mode = #tpu.pipeline_mode<synchronous>, transform_indices = @transform_0, window_bounds = array<i64: 8, 768>}, {transform_indices = @transform_1, window_bounds = array<i64: 1, 40, 40>}, {transform_indices = @transform_2, window_bounds = array<i64: 1, 8, 1>}, {transform_indices = @transform_3, window_bounds = array<i64: 1, 8, 1>}, {transform_indices = @transform_4, window_bounds = array<i64: 1, 8, 1>}, {pipeline_mode = #tpu.pipeline_mode<synchronous>, transform_indices = @transform_5, window_bounds = array<i64: 1, 640>}, {transform_indices = @transform_6, window_bounds = array<i64: 8, 384>}]} {
    %c0 = arith.constant 0 : index
    %c0_0 = arith.constant 0 : index
    %0 = vector.load %arg1[%c0, %c0_0] : memref<8x768xf32, #tpu.memory_space<vmem>>, vector<8x768xf32>
    %1 = arith.truncf %0 : vector<8x768xf32> to vector<8x768xbf16>
    %c0_1 = arith.constant 0 : index
    %c0_2 = arith.constant 0 : index
    %2 = vector.load %arg8[%c0_1, %c0_2] : memref<40x1024xbf16, #tpu.memory_space<vmem>>, vector<8x768xbf16>
    tpu.vector_store %arg8[%c0_1, %c0_2], %1 {strides = array<i32>} : memref<40x1024xbf16, #tpu.memory_space<vmem>>, vector<8x768xbf16>,
    %c0_3 = arith.constant 0 : index
    %c24 = arith.constant 24 : index
    %3 = vector.load %arg1[%c0_3, %c24] : memref<8x768xf32, #tpu.memory_space<vmem>>, vector<8x744xf32>
    %4 = arith.truncf %3 : vector<8x744xf32> to vector<8x744xbf16>
    %c8 = arith.constant 8 : index
    %c0_4 = arith.constant 0 : index
    %5 = vector.load %arg8[%c8, %c0_4] : memref<40x1024xbf16, #tpu.memory_space<vmem>>, vector<8x744xbf16>
    tpu.vector_store %arg8[%c8, %c0_4], %4 {strides = array<i32>} : memref<40x1024xbf16, #tpu.memory_space<vmem>>, vector<8x744xbf16>,
    %c0_5 = arith.constant 0 : index
    %c48 = arith.constant 48 : index
    %6 = vector.load %arg1[%c0_5, %c48] : memref<8x768xf32, #tpu.memory_space<vmem>>, vector<8x720xf32>
    %7 = arith.truncf %6 : vector<8x720xf32> to vector<8x720xbf16>
    %c16 = arith.constant 16 : index
    %c0_6 = arith.constant 0 : index
    %8 = vector.load %arg8[%c16, %c0_6] : memref<40x1024xbf16, #tpu.memory_space<vmem>>, vector<8x720xbf16>
    tpu.vector_store %arg8[%c16, %c0_6], %7 {strides = array<i32>} : memref<40x1024xbf16, #tpu.memory_space<vmem>>, vector<8x720xbf16>,
    %c0_7 = arith.constant 0 : index
    %c72 = arith.constant 72 : index
    %9 = vector.load %arg1[%c0_7, %c72] : memref<8x768xf32, #tpu.memory_space<vmem>>, vector<8x696xf32>
    %10 = arith.truncf %9 : vector<8x696xf32> to vector<8x696xbf16>
    %c24_8 = arith.constant 24 : index
    %c0_9 = arith.constant 0 : index
    %11 = vector.load %arg8[%c24_8, %c0_9] : memref<40x1024xbf16, #tpu.memory_space<vmem>>, vector<8x696xbf16>
    tpu.vector_store %arg8[%c24_8, %c0_9], %10 {strides = array<i32>} : memref<40x1024xbf16, #tpu.memory_space<vmem>>, vector<8x696xbf16>,
    %c0_10 = arith.constant 0 : index
    %c96 = arith.constant 96 : index
    %12 = vector.load %arg1[%c0_10, %c96] : memref<8x768xf32, #tpu.memory_space<vmem>>, vector<8x672xf32>
    %13 = arith.truncf %12 : vector<8x672xf32> to vector<8x672xbf16>
    %c32 = arith.constant 32 : index
    %c0_11 = arith.constant 0 : index
    %14 = vector.load %arg8[%c32, %c0_11] : memref<40x1024xbf16, #tpu.memory_space<vmem>>, vector<8x672xbf16>
    tpu.vector_store %arg8[%c32, %c0_11], %13 {strides = array<i32>} : memref<40x1024xbf16, #tpu.memory_space<vmem>>, vector<8x672xbf16>,
    %c0_12 = arith.constant 0 : index
    %c0_13 = arith.constant 0 : index
    %c0_14 = arith.constant 0 : index
    %15 = vector.load %arg2[%c0_12, %c0_13, %c0_14] : memref<1x40x40xbf16, #tpu.memory_space<vmem>>, vector<1x40x40xbf16>
    %16 = vector.shape_cast %15 : vector<1x40x40xbf16> to vector<40x40xbf16>
    %c0_15 = arith.constant 0 : index
    %c0_16 = arith.constant 0 : index
    %17 = vector.load %arg8[%c0_15, %c0_16] : memref<40x1024xbf16, #tpu.memory_space<vmem>>, vector<40x1024xbf16>
    %cst = arith.constant dense<0.000000e+00> : vector<40x1024xf32>
    %18 = tpu.matmul %16, %17, %cst {dimension_numbers = #tpu.dot_dimension_numbers<[1], [0], [0], [1], [0, 0, 1, 1], [], []>} : vector<40x40xbf16>, vector<40x1024xbf16>, vector<40x1024xf32> -> vector<40x1024xf32>
    %c0_17 = arith.constant 0 : index
    %c0_18 = arith.constant 0 : index
    %19 = vector.load %arg9[%c0_17, %c0_18] : memref<40x1024xf32, #tpu.memory_space<vmem>>, vector<40x1024xf32>
    tpu.vector_store %arg9[%c0_17, %c0_18], %18 {strides = array<i32>} : memref<40x1024xf32, #tpu.memory_space<vmem>>, vector<40x1024xf32>,
    %c0_19 = arith.constant 0 : index
    %c0_20 = arith.constant 0 : index
    %20 = vector.load %arg9[%c0_19, %c0_20] : memref<40x1024xf32, #tpu.memory_space<vmem>>, vector<8x896xf32>
    %c8_21 = arith.constant 8 : index
    %c1 = arith.constant 1 : index
    %21 = vector.load %arg9[%c8_21, %c1] : memref<40x1024xf32, #tpu.memory_space<vmem>>, vector<8x896xf32>
    %22 = arith.addf %20, %21 : vector<8x896xf32>
    %c16_22 = arith.constant 16 : index
    %c2 = arith.constant 2 : index
    %23 = vector.load %arg9[%c16_22, %c2] : memref<40x1024xf32, #tpu.memory_space<vmem>>, vector<8x896xf32>
    %24 = arith.addf %22, %23 : vector<8x896xf32>
    %c24_23 = arith.constant 24 : index
    %c3 = arith.constant 3 : index
    %25 = vector.load %arg9[%c24_23, %c3] : memref<40x1024xf32, #tpu.memory_space<vmem>>, vector<8x896xf32>
    %26 = arith.addf %24, %25 : vector<8x896xf32>
    %c32_24 = arith.constant 32 : index
    %c4 = arith.constant 4 : index
    %27 = vector.load %arg9[%c32_24, %c4] : memref<40x1024xf32, #tpu.memory_space<vmem>>, vector<8x896xf32>
    %28 = arith.addf %26, %27 : vector<8x896xf32>
    %c0_25 = arith.constant 0 : index
    %c0_26 = arith.constant 0 : index
    %c0_27 = arith.constant 0 : index
    %29 = vector.load %arg3[%c0_25, %c0_26, %c0_27] : memref<1x8x1xf32, #tpu.memory_space<vmem>>, vector<1x8x1xf32>
    %30 = vector.shape_cast %29 : vector<1x8x1xf32> to vector<8x1xf32>
    %31 = vector.broadcast %30 : vector<8x1xf32> to vector<8x896xf32>
    %32 = arith.addf %28, %31 : vector<8x896xf32>
    %cst_28 = arith.constant 0.000000e+00 : f32
    %33 = vector.broadcast %cst_28 : f32 to vector<8x896xf32>
    %34 = arith.maximumf %32, %33 : vector<8x896xf32>
    %c0_29 = arith.constant 0 : index
    %c0_30 = arith.constant 0 : index
    %35 = vector.load %arg10[%c0_29, %c0_30] : memref<8x896xf32, #tpu.memory_space<vmem>>, vector<8x896xf32>
    tpu.vector_store %arg10[%c0_29, %c0_30], %34 {strides = array<i32>} : memref<8x896xf32, #tpu.memory_space<vmem>>, vector<8x896xf32>,
    %c0_31 = arith.constant 0 : index
    %c0_32 = arith.constant 0 : index
    %36 = vector.load %arg10[%c0_31, %c0_32] : memref<8x896xf32, #tpu.memory_space<vmem>>, vector<8x768xf32>
    %c0_33 = arith.constant 0 : index
    %c24_34 = arith.constant 24 : index
    %37 = vector.load %arg10[%c0_33, %c24_34] : memref<8x896xf32, #tpu.memory_space<vmem>>, vector<8x768xf32>
    %38 = arith.maximumf %36, %37 : vector<8x768xf32>
    %c0_35 = arith.constant 0 : index
    %c48_36 = arith.constant 48 : index
    %39 = vector.load %arg10[%c0_35, %c48_36] : memref<8x896xf32, #tpu.memory_space<vmem>>, vector<8x768xf32>
    %40 = arith.maximumf %38, %39 : vector<8x768xf32>
    %c0_37 = arith.constant 0 : index
    %c72_38 = arith.constant 72 : index
    %41 = vector.load %arg10[%c0_37, %c72_38] : memref<8x896xf32, #tpu.memory_space<vmem>>, vector<8x768xf32>
    %42 = arith.maximumf %40, %41 : vector<8x768xf32>
    %c0_39 = arith.constant 0 : index
    %c96_40 = arith.constant 96 : index
    %43 = vector.load %arg10[%c0_39, %c96_40] : memref<8x896xf32, #tpu.memory_space<vmem>>, vector<8x768xf32>
    %44 = arith.maximumf %42, %43 : vector<8x768xf32>
    %c0_41 = arith.constant 0 : index
    %c0_42 = arith.constant 0 : index
    %45 = vector.load %arg11[%c0_41, %c0_42] : memref<8x768xf32, #tpu.memory_space<vmem>>, vector<8x768xf32>
    tpu.vector_store %arg11[%c0_41, %c0_42], %44 {strides = array<i32>} : memref<8x768xf32, #tpu.memory_space<vmem>>, vector<8x768xf32>,
    %c0_43 = arith.constant 0 : index
    %c0_44 = arith.constant 0 : index
    %46 = vector.load %arg11[%c0_43, %c0_44] : memref<8x768xf32, #tpu.memory_space<vmem>>, vector<8x640xf32>
    %c0_45 = arith.constant 0 : index
    %c1_46 = arith.constant 1 : index
    %47 = vector.load %arg11[%c0_45, %c1_46] : memref<8x768xf32, #tpu.memory_space<vmem>>, vector<8x640xf32>
    %48 = arith.maximumf %46, %47 : vector<8x640xf32>
    %c0_47 = arith.constant 0 : index
    %c2_48 = arith.constant 2 : index
    %49 = vector.load %arg11[%c0_47, %c2_48] : memref<8x768xf32, #tpu.memory_space<vmem>>, vector<8x640xf32>
    %50 = arith.maximumf %48, %49 : vector<8x640xf32>
    %c0_49 = arith.constant 0 : index
    %c3_50 = arith.constant 3 : index
    %51 = vector.load %arg11[%c0_49, %c3_50] : memref<8x768xf32, #tpu.memory_space<vmem>>, vector<8x640xf32>
    %52 = arith.maximumf %50, %51 : vector<8x640xf32>
    %c0_51 = arith.constant 0 : index
    %c4_52 = arith.constant 4 : index
    %53 = vector.load %arg11[%c0_51, %c4_52] : memref<8x768xf32, #tpu.memory_space<vmem>>, vector<8x640xf32>
    %54 = arith.maximumf %52, %53 : vector<8x640xf32>
    %c0_53 = arith.constant 0 : index
    %c0_54 = arith.constant 0 : index
    %55 = vector.load %arg12[%c0_53, %c0_54] : memref<8x640xf32, #tpu.memory_space<vmem>>, vector<8x640xf32>
    tpu.vector_store %arg12[%c0_53, %c0_54], %54 {strides = array<i32>} : memref<8x640xf32, #tpu.memory_space<vmem>>, vector<8x640xf32>,
    %c0_55 = arith.constant 0 : index
    %c0_56 = arith.constant 0 : index
    %56 = vector.load %arg6[%c0_55, %c0_56] : memref<1x640xf32, #tpu.memory_space<vmem>>, vector<1x640xf32>
    %cst_57 = arith.constant 5.000000e-01 : f32
    %57 = vector.broadcast %cst_57 : f32 to vector<1x640xf32>
    %58 = arith.cmpf ogt, %56, %57 : vector<1x640xf32>
    %c0_58 = arith.constant 0 : index
    %c0_59 = arith.constant 0 : index
    %59 = vector.load %arg12[%c0_58, %c0_59] : memref<8x640xf32, #tpu.memory_space<vmem>>, vector<8x640xf32>
    %cst_60 = arith.constant 0.000000e+00 : f32
    %60 = vector.shape_cast %58 : vector<1x640xi1> to vector<1x640xi1>
    %61 = vector.broadcast %60 : vector<1x640xi1> to vector<8x640xi1>
    %62 = vector.broadcast %cst_60 : f32 to vector<8x640xf32>
    %63 = arith.select %61, %59, %62 : vector<8x640xi1>, vector<8x640xf32>
    %cst_61 = arith.constant dense<0.000000e+00> : vector<8xf32>
    %64 = vector.multi_reduction <add>, %63, %cst_61 [1] : vector<8x640xf32> to vector<8xf32>
    %65 = vector.shape_cast %64 : vector<8xf32> to vector<8x1xf32>
    %66 = arith.mulf %63, %63 : vector<8x640xf32>
    %cst_62 = arith.constant dense<0.000000e+00> : vector<8xf32>
    %67 = vector.multi_reduction <add>, %66, %cst_62 [1] : vector<8x640xf32> to vector<8xf32>
    %68 = vector.shape_cast %67 : vector<8xf32> to vector<8x1xf32>
    %cst_63 = arith.constant 7.812500e-03 : f32
    %69 = vector.broadcast %cst_63 : f32 to vector<8x1xf32>
    %70 = arith.mulf %65, %69 : vector<8x1xf32>
    %cst_64 = arith.constant 7.812500e-03 : f32
    %71 = vector.broadcast %cst_64 : f32 to vector<8x1xf32>
    %72 = arith.mulf %68, %71 : vector<8x1xf32>
    %73 = arith.mulf %70, %70 : vector<8x1xf32>
    %74 = arith.subf %72, %73 : vector<8x1xf32>
    %c0_65 = arith.constant 0 : index
    %c0_66 = arith.constant 0 : index
    %c0_67 = arith.constant 0 : index
    %75 = vector.load %arg4[%c0_65, %c0_66, %c0_67] : memref<1x8x1xf32, #tpu.memory_space<vmem>>, vector<1x8x1xf32>
    %76 = vector.shape_cast %75 : vector<1x8x1xf32> to vector<8x1xf32>
    %cst_68 = arith.constant 9.99999974E-6 : f32
    %77 = vector.broadcast %cst_68 : f32 to vector<8x1xf32>
    %78 = arith.addf %74, %77 : vector<8x1xf32>
    %79 = math.rsqrt %78 : vector<8x1xf32>
    %80 = arith.mulf %76, %79 : vector<8x1xf32>
    %c0_69 = arith.constant 0 : index
    %c0_70 = arith.constant 0 : index
    %c0_71 = arith.constant 0 : index
    %81 = vector.load %arg5[%c0_69, %c0_70, %c0_71] : memref<1x8x1xf32, #tpu.memory_space<vmem>>, vector<1x8x1xf32>
    %82 = vector.shape_cast %81 : vector<1x8x1xf32> to vector<8x1xf32>
    %83 = arith.mulf %70, %80 : vector<8x1xf32>
    %84 = arith.subf %82, %83 : vector<8x1xf32>
    %c0_72 = arith.constant 0 : index
    %c0_73 = arith.constant 0 : index
    %85 = vector.load %arg12[%c0_72, %c0_73] : memref<8x640xf32, #tpu.memory_space<vmem>>, vector<8x192xf32>
    %86 = vector.broadcast %80 : vector<8x1xf32> to vector<8x192xf32>
    %87 = arith.mulf %85, %86 : vector<8x192xf32>
    %88 = vector.broadcast %84 : vector<8x1xf32> to vector<8x192xf32>
    %89 = arith.addf %87, %88 : vector<8x192xf32>
    %c0_74 = arith.constant 0 : index
    %c0_75 = arith.constant 0 : index
    %90 = vector.load %arg7[%c0_74, %c0_75] : memref<8x384xf32, #tpu.memory_space<vmem>>, vector<8x192xf32>
    tpu.vector_store %arg7[%c0_74, %c0_75], %89 {strides = array<i32>} : memref<8x384xf32, #tpu.memory_space<vmem>>, vector<8x192xf32>,
    %c0_76 = arith.constant 0 : index
    %c384 = arith.constant 384 : index
    %91 = vector.load %arg12[%c0_76, %c384] : memref<8x640xf32, #tpu.memory_space<vmem>>, vector<8x192xf32>
    %92 = vector.broadcast %80 : vector<8x1xf32> to vector<8x192xf32>
    %93 = arith.mulf %91, %92 : vector<8x192xf32>
    %94 = vector.broadcast %84 : vector<8x1xf32> to vector<8x192xf32>
    %95 = arith.addf %93, %94 : vector<8x192xf32>
    %c0_77 = arith.constant 0 : index
    %c192 = arith.constant 192 : index
    %96 = vector.load %arg7[%c0_77, %c192] : memref<8x384xf32, #tpu.memory_space<vmem>>, vector<8x192xf32>
    tpu.vector_store %arg7[%c0_77, %c192], %95 {strides = array<i32>} : memref<8x384xf32, #tpu.memory_space<vmem>>, vector<8x192xf32>,
    return
  }
  func.func @transform_0(%arg0: i32) -> (i32, i32) {
    %c0_i32 = arith.constant 0 : i32
    %c0_i32_0 = arith.constant 0 : i32
    %c0_i32_1 = arith.constant 0 : i32
    return %c0_i32, %c0_i32_0 : i32, i32
  }
  func.func @transform_1(%arg0: i32) -> (i32, i32, i32) {
    %c0_i32 = arith.constant 0 : i32
    %c0_i32_0 = arith.constant 0 : i32
    %c0_i32_1 = arith.constant 0 : i32
    return %arg0, %c0_i32, %c0_i32_0 : i32, i32, i32
  }
  func.func @transform_2(%arg0: i32) -> (i32, i32, i32) {
    %c0_i32 = arith.constant 0 : i32
    %c0_i32_0 = arith.constant 0 : i32
    %c0_i32_1 = arith.constant 0 : i32
    return %arg0, %c0_i32, %c0_i32_0 : i32, i32, i32
  }
  func.func @transform_3(%arg0: i32) -> (i32, i32, i32) {
    %c0_i32 = arith.constant 0 : i32
    %c0_i32_0 = arith.constant 0 : i32
    %c0_i32_1 = arith.constant 0 : i32
    return %arg0, %c0_i32, %c0_i32_0 : i32, i32, i32
  }
  func.func @transform_4(%arg0: i32) -> (i32, i32, i32) {
    %c0_i32 = arith.constant 0 : i32
    %c0_i32_0 = arith.constant 0 : i32
    %c0_i32_1 = arith.constant 0 : i32
    return %arg0, %c0_i32, %c0_i32_0 : i32, i32, i32
  }
  func.func @transform_5(%arg0: i32) -> (i32, i32) {
    %c0_i32 = arith.constant 0 : i32
    %c0_i32_0 = arith.constant 0 : i32
    %c0_i32_1 = arith.constant 0 : i32
    return %c0_i32, %c0_i32_0 : i32, i32
  }
  func.func @transform_6(%arg0: i32) -> (i32, i32) {
    %c0_i32 = arith.constant 0 : i32
    %c0_i32_0 = arith.constant 0 : i32
    return %arg0, %c0_i32 : i32, i32
  }
}

</mosaic_0001>

<llo_original>
// kernel: b_encoder_conv_forward.3
$region0: #{b_encoder_conv_forward.3}
  #allocation0 [shape = 'u32[]', space=smem, size = 0x4, offset = 0x4, fixed_abs, tag = 'smem constant byte address 0x4 - core index']
  #allocation1 [shape = 'u32[144,128]{1,0:T(1,128)}', space=vmem, size = 0x12000, scoped, tag = 'internal scratch']
  #allocation2 [shape = 'bf16[40,1024]{1,0:T(8,128)(2,1)}', space=vmem, size = 0x14000, scoped, tag = 'scratch operand']
  #allocation3 [shape = 'f32[40,1024]{1,0:T(8,128)}', space=vmem, size = 0x28000, scoped, tag = 'scratch operand']
  #allocation4 [shape = 'f32[8,896]{1,0:T(8,128)}', space=vmem, size = 0x7000, scoped, tag = 'scratch operand']
  #allocation5 [shape = 'f32[8,768]{1,0:T(8,128)}', space=vmem, size = 0x6000, scoped, tag = 'scratch operand']
  #allocation6 [shape = 'f32[8,640]{1,0:T(8,128)}', space=vmem, size = 0x5000, scoped, tag = 'scratch operand']
  %s0 = inlined_call_operand.vmem [shape: f32[8,768], index: 0, kind: input, shape index: {}]
  %s1 = inlined_call_operand.vmem [shape: bf16[1,40,40], index: 1, kind: input, shape index: {}]
  %s2 = inlined_call_operand.vmem [shape: f32[1,8,1], index: 2, kind: input, shape index: {}]
  %s3 = inlined_call_operand.vmem [shape: f32[1,8,1], index: 3, kind: input, shape index: {}]
  %s4 = inlined_call_operand.vmem [shape: f32[1,8,1], index: 4, kind: input, shape index: {}]
  %s5 = inlined_call_operand.vmem [shape: f32[1,640], index: 5, kind: input, shape index: {}]
  %s6 = inlined_call_operand.vmem [shape: f32[8,384], index: 6, kind: output, shape index: {}]
  %s7 = sld [smem:[#allocation0]]
  $region34: #{b_encoder_conv_forward.3} parent=0
    _
  %s9 = ssub.s32 1, %s7
  %s10 = scalar_select 0, %s9, %s7
  // Predicated region
  $region2: #{b_encoder_conv_forward.3} parent=0 // pred_check
    _
  $region3: #{b_encoder_conv_forward.3} parent=0 // pred_check_branch
    %12 = sbr.rel (0) target = $region5
  $region4: #{b_encoder_conv_forward.3} parent=0 // pred_region
    _
  $region5: #{b_encoder_conv_forward.3} parent=0 // pred_fallthru
    _
  // Predicated region
  $region6: #{b_encoder_conv_forward.3} parent=0 // pred_check
    _
  $region7: #{b_encoder_conv_forward.3} parent=0 // pred_check_branch
    %14 = sbr.rel (0) target = $region9
  $region8: #{b_encoder_conv_forward.3} parent=0 // pred_region
    _
  $region9: #{b_encoder_conv_forward.3} parent=0 // pred_fallthru
    _
  // Predicated region
  $region10: #{b_encoder_conv_forward.3} parent=0 // pred_check
    _
  $region11: #{b_encoder_conv_forward.3} parent=0 // pred_check_branch
    %16 = sbr.rel (0) target = $region13
  $region12: #{b_encoder_conv_forward.3} parent=0 // pred_region
    _
  $region13: #{b_encoder_conv_forward.3} parent=0 // pred_fallthru
    _
  // Predicated region
  $region14: #{b_encoder_conv_forward.3} parent=0 // pred_check
    _
  $region15: #{b_encoder_conv_forward.3} parent=0 // pred_check_branch
    %18 = sbr.rel (0) target = $region17
  $region16: #{b_encoder_conv_forward.3} parent=0 // pred_region
    _
  $region17: #{b_encoder_conv_forward.3} parent=0 // pred_fallthru
    _
  // Predicated region
  $region18: #{b_encoder_conv_forward.3} parent=0 // pred_check
    _
  $region19: #{b_encoder_conv_forward.3} parent=0 // pred_check_branch
    %20 = sbr.rel (0) target = $region21
  $region20: #{b_encoder_conv_forward.3} parent=0 // pred_region
    _
  $region21: #{b_encoder_conv_forward.3} parent=0 // pred_fallthru
    _
  // Predicated region
  $region22: #{b_encoder_conv_forward.3} parent=0 // pred_check
    _
  $region23: #{b_encoder_conv_forward.3} parent=0 // pred_check_branch
    %22 = sbr.rel (0) target = $region25
  $region24: #{b_encoder_conv_forward.3} parent=0 // pred_region
    _
  $region25: #{b_encoder_conv_forward.3} parent=0 // pred_fallthru
    _
  %v24 = vld [vmem:[%s0] sm:$0xff]
  %v25 = vld [vmem:[%s0 + $0x8] sm:$0xff]
  %v26 = vld [vmem:[%s0 + $0x10] sm:$0xff]
  %v27 = vld [vmem:[%s0 + $0x18] sm:$0xff]
  %v28 = vld [vmem:[%s0 + $0x20] sm:$0xff]
  %v29 = vld [vmem:[%s0 + $0x28] sm:$0xff]
  %v30 = vpack.c.bf16 %v24, %v24
  %v31 = vpack.c.bf16 %v25, %v25
  %v32 = vpack.c.bf16 %v26, %v26
  %v33 = vpack.c.bf16 %v27, %v27
  %v34 = vpack.c.bf16 %v28, %v28
  %v35 = vpack.c.bf16 %v29, %v29
  %v42 = vunpack.c.l.b16 %v30
  %v43 = vunpack.c.l.b16 %v31
  %v44 = vunpack.c.l.b16 %v32
  %v45 = vunpack.c.l.b16 %v33
  %v46 = vunpack.c.l.b16 %v34
  %v47 = vunpack.c.l.b16 %v35
  %v48 = vpack.c.b16 %v43, %v42
  %v49 = vpack.c.b16 %v45, %v44
  %v50 = vpack.c.b16 %v47, %v46
  %54 = vst [vmem:[#allocation2] sm:$0xff] %v48
  %55 = vst [vmem:[#allocation2 + $0x8] sm:$0xff] %v49
  %56 = vst [vmem:[#allocation2 + $0x10] sm:$0xff] %v50
  %v57 = vld [vmem:[%s0] sm:$0xff]
  %v58 = vld [vmem:[%s0 + $0x8] sm:$0xff]
  %v59 = vld [vmem:[%s0 + $0x10] sm:$0xff]
  %v60 = vld [vmem:[%s0 + $0x18] sm:$0xff]
  %v61 = vld [vmem:[%s0 + $0x20] sm:$0xff]
  %v62 = vld [vmem:[%s0 + $0x28] sm:$0xff]
  %v63 = vpack.c.bf16 %v57, %v57
  %v64 = vpack.c.bf16 %v58, %v58
  %v65 = vpack.c.bf16 %v59, %v59
  %v66 = vpack.c.bf16 %v60, %v60
  %v67 = vpack.c.bf16 %v61, %v61
  %v68 = vpack.c.bf16 %v62, %v62
  %v75 = vunpack.c.l.b16 %v63
  %v76 = vunpack.c.l.b16 %v64
  %v77 = vunpack.c.l.b16 %v65
  %v78 = vunpack.c.l.b16 %v66
  %v79 = vunpack.c.l.b16 %v67
  %v80 = vunpack.c.l.b16 %v68
  %v81 = vpack.c.b16 %v76, %v75
  %v82 = vpack.c.b16 %v78, %v77
  %v83 = vpack.c.b16 %v80, %v79
  %84 = vrot.lane.b32.xlu0 %v81, 104
  %v85 = vpop.permute.xlu0 %84
  %86 = vrot.lane.b32.xlu0 %v82, 104
  %v87 = vpop.permute.xlu0 %86
  %88 = vrot.lane.b32.xlu0 %v83, 104
  %v89 = vpop.permute.xlu0 %88
  %v90 = vrot.slane %v85, 4
  %v91 = vrot.slane %v87, 4
  %v92 = vrot.slane %v89, 4
  %vm93 = vcmask 1043456
  %v94 = vsel %vm93, %v90, %v91
  %vm95 = vcmask 850944
  %v96 = vsel %vm95, %v85, %v94
  %v97 = vsel %vm93, %v91, %v92
  %v98 = vsel %vm95, %v87, %v97
  %v99 = vsel %vm95, %v89, %v92
  %103 = vst [vmem:[#allocation2 + $0x20] sm:$0xff] %v96
  %104 = vst [vmem:[#allocation2 + $0x28] sm:$0xff] %v98
  %vm105 = vcmask 1043456
  %vm106 = vcmask 850948
  %vm107 = vmor %vm106, %vm105
  %108 = vst.msk [vmem:[#allocation2 + $0x30] sm:$0xff] %vm107, %v99
  %v109 = vld [vmem:[%s0] sm:$0xff]
  %v110 = vld [vmem:[%s0 + $0x8] sm:$0xff]
  %v111 = vld [vmem:[%s0 + $0x10] sm:$0xff]
  %v112 = vld [vmem:[%s0 + $0x18] sm:$0xff]
  %v113 = vld [vmem:[%s0 + $0x20] sm:$0xff]
  %v114 = vld [vmem:[%s0 + $0x28] sm:$0xff]
  %v115 = vpack.c.bf16 %v109, %v109
  %v116 = vpack.c.bf16 %v110, %v110
  %v117 = vpack.c.bf16 %v111, %v111
  %v118 = vpack.c.bf16 %v112, %v112
  %v119 = vpack.c.bf16 %v113, %v113
  %v120 = vpack.c.bf16 %v114, %v114
  %v127 = vunpack.c.l.b16 %v115
  %v128 = vunpack.c.l.b16 %v116
  %v129 = vunpack.c.l.b16 %v117
  %v130 = vunpack.c.l.b16 %v118
  %v131 = vunpack.c.l.b16 %v119
  %v132 = vunpack.c.l.b16 %v120
  %v133 = vpack.c.b16 %v128, %v127
  %v134 = vpack.c.b16 %v130, %v129
  %v135 = vpack.c.b16 %v132, %v131
  %136 = vrot.lane.b32.xlu0 %v133, 80
  %v137 = vpop.permute.xlu0 %136
  %138 = vrot.lane.b32.xlu0 %v134, 80
  %v139 = vpop.permute.xlu0 %138
  %140 = vrot.lane.b32.xlu0 %v135, 80
  %v141 = vpop.permute.xlu0 %140
  %v142 = vrot.slane %v137, 4
  %v143 = vrot.slane %v139, 4
  %v144 = vrot.slane %v141, 4
  %v145 = vsel %vm93, %v142, %v143
  %vm146 = vcmask 654336
  %v147 = vsel %vm146, %v137, %v145
  %v148 = vsel %vm93, %v143, %v144
  %v149 = vsel %vm146, %v139, %v148
  %v150 = vsel %vm146, %v141, %v144
  %154 = vst [vmem:[#allocation2 + $0x40] sm:$0xff] %v147
  %155 = vst [vmem:[#allocation2 + $0x48] sm:$0xff] %v149
  %vm156 = vcmask 654340
  %vm157 = vmor %vm156, %vm105
  %158 = vst.msk [vmem:[#allocation2 + $0x50] sm:$0xff] %vm157, %v150
  %v159 = vld [vmem:[%s0] sm:$0xff]
  %v160 = vld [vmem:[%s0 + $0x8] sm:$0xff]
  %v161 = vld [vmem:[%s0 + $0x10] sm:$0xff]
  %v162 = vld [vmem:[%s0 + $0x18] sm:$0xff]
  %v163 = vld [vmem:[%s0 + $0x20] sm:$0xff]
  %v164 = vld [vmem:[%s0 + $0x28] sm:$0xff]
  %v165 = vpack.c.bf16 %v159, %v159
  %v166 = vpack.c.bf16 %v160, %v160
  %v167 = vpack.c.bf16 %v161, %v161
  %v168 = vpack.c.bf16 %v162, %v162
  %v169 = vpack.c.bf16 %v163, %v163
  %v170 = vpack.c.bf16 %v164, %v164
  %v177 = vunpack.c.l.b16 %v165
  %v178 = vunpack.c.l.b16 %v166
  %v179 = vunpack.c.l.b16 %v167
  %v180 = vunpack.c.l.b16 %v168
  %v181 = vunpack.c.l.b16 %v169
  %v182 = vunpack.c.l.b16 %v170
  %v183 = vpack.c.b16 %v178, %v177
  %v184 = vpack.c.b16 %v180, %v179
  %v185 = vpack.c.b16 %v182, %v181
  %186 = vrot.lane.b32.xlu0 %v183, 56
  %v187 = vpop.permute.xlu0 %186
  %188 = vrot.lane.b32.xlu0 %v184, 56
  %v189 = vpop.permute.xlu0 %188
  %190 = vrot.lane.b32.xlu0 %v185, 56
  %v191 = vpop.permute.xlu0 %190
  %v192 = vrot.slane %v187, 4
  %v193 = vrot.slane %v189, 4
  %v194 = vrot.slane %v191, 4
  %v195 = vsel %vm93, %v192, %v193
  %vm196 = vcmask 457728
  %v197 = vsel %vm196, %v187, %v195
  %v198 = vsel %vm93, %v193, %v194
  %v199 = vsel %vm196, %v189, %v198
  %v200 = vsel %vm196, %v191, %v194
  %204 = vst [vmem:[#allocation2 + $0x60] sm:$0xff] %v197
  %205 = vst [vmem:[#allocation2 + $0x68] sm:$0xff] %v199
  %vm206 = vcmask 457732
  %vm207 = vmor %vm206, %vm105
  %208 = vst.msk [vmem:[#allocation2 + $0x70] sm:$0xff] %vm207, %v200
  %v209 = vld [vmem:[%s0] sm:$0xff]
  %v210 = vld [vmem:[%s0 + $0x8] sm:$0xff]
  %v211 = vld [vmem:[%s0 + $0x10] sm:$0xff]
  %v212 = vld [vmem:[%s0 + $0x18] sm:$0xff]
  %v213 = vld [vmem:[%s0 + $0x20] sm:$0xff]
  %v214 = vld [vmem:[%s0 + $0x28] sm:$0xff]
  %v215 = vpack.c.bf16 %v209, %v209
  %v216 = vpack.c.bf16 %v210, %v210
  %v217 = vpack.c.bf16 %v211, %v211
  %v218 = vpack.c.bf16 %v212, %v212
  %v219 = vpack.c.bf16 %v213, %v213
  %v220 = vpack.c.bf16 %v214, %v214
  %v227 = vunpack.c.l.b16 %v215
  %v228 = vunpack.c.l.b16 %v216
  %v229 = vunpack.c.l.b16 %v217
  %v230 = vunpack.c.l.b16 %v218
  %v231 = vunpack.c.l.b16 %v219
  %v232 = vunpack.c.l.b16 %v220
  %v233 = vpack.c.b16 %v228, %v227
  %v234 = vpack.c.b16 %v230, %v229
  %v235 = vpack.c.b16 %v232, %v231
  %236 = vrot.lane.b32.xlu0 %v233, 32
  %v237 = vpop.permute.xlu0 %236
  %238 = vrot.lane.b32.xlu0 %v234, 32
  %v239 = vpop.permute.xlu0 %238
  %240 = vrot.lane.b32.xlu0 %v235, 32
  %v241 = vpop.permute.xlu0 %240
  %v242 = vrot.slane %v237, 4
  %v243 = vrot.slane %v239, 4
  %v244 = vrot.slane %v241, 4
  %v245 = vsel %vm93, %v242, %v243
  %vm246 = vcmask 261120
  %v247 = vsel %vm246, %v237, %v245
  %v248 = vsel %vm93, %v243, %v244
  %v249 = vsel %vm246, %v239, %v248
  %v250 = vsel %vm246, %v241, %v244
  %254 = vst [vmem:[#allocation2 + $0x80] sm:$0xff] %v247
  %255 = vst [vmem:[#allocation2 + $0x88] sm:$0xff] %v249
  %vm256 = vcmask 261124
  %vm257 = vmor %vm256, %vm105
  %258 = vst.msk [vmem:[#allocation2 + $0x90] sm:$0xff] %vm257, %v250
  %v259 = vld [vmem:[%s1] sm:$0xf]
  %v260 = vld [vmem:[%s1 + $0x4] sm:$0xf]
  %v261 = vld [vmem:[%s1 + $0x8] sm:$0xf]
  %v262 = vld [vmem:[%s1 + $0xc] sm:$0xf]
  %v263 = vld [vmem:[%s1 + $0x10] sm:$0xf]
  %v264 = vld [vmem:[#allocation2] sm:$0xff]
  %v265 = vld [vmem:[#allocation2 + $0x8] sm:$0xff]
  %v266 = vld [vmem:[#allocation2 + $0x10] sm:$0xff]
  %v267 = vld [vmem:[#allocation2 + $0x18] sm:$0xff]
  %v268 = vld [vmem:[#allocation2 + $0x20] sm:$0xff]
  %v269 = vld [vmem:[#allocation2 + $0x28] sm:$0xff]
  %v270 = vld [vmem:[#allocation2 + $0x30] sm:$0xff]
  %v271 = vld [vmem:[#allocation2 + $0x38] sm:$0xff]
  %v272 = vld [vmem:[#allocation2 + $0x40] sm:$0xff]
  %v273 = vld [vmem:[#allocation2 + $0x48] sm:$0xff]
  %v274 = vld [vmem:[#allocation2 + $0x50] sm:$0xff]
  %v275 = vld [vmem:[#allocation2 + $0x58] sm:$0xff]
  %v276 = vld [vmem:[#allocation2 + $0x60] sm:$0xff]
  %v277 = vld [vmem:[#allocation2 + $0x68] sm:$0xff]
  %v278 = vld [vmem:[#allocation2 + $0x70] sm:$0xff]
  %v279 = vld [vmem:[#allocation2 + $0x78] sm:$0xff]
  %v280 = vld [vmem:[#allocation2 + $0x80] sm:$0xff]
  %v281 = vld [vmem:[#allocation2 + $0x88] sm:$0xff]
  %v282 = vld [vmem:[#allocation2 + $0x90] sm:$0xff]
  %v283 = vld [vmem:[#allocation2 + $0x98] sm:$0xff]
  %v289 = vunpack.c.l.b16 %v259
  %v290 = vunpack.c.l.b16 %v260
  %v291 = vunpack.c.l.b16 %v261
  %v292 = vunpack.c.l.b16 %v262
  %v293 = vunpack.c.l.b16 %v263
  %v294 = vpack.c.b16 %v290, %v289
  %v295 = vpack.c.b16 %v292, %v291
  %v296 = vpack.c.b16 %v293, %v293
  %v317 = vunpack.c.l.b16 %v264
  %v318 = vunpack.c.h.b16 %v264
  %v319 = vunpack.c.l.b16 %v265
  %v320 = vunpack.c.h.b16 %v265
  %v321 = vunpack.c.l.b16 %v266
  %v322 = vunpack.c.h.b16 %v266
  %v323 = vunpack.c.l.b16 %v267
  %v324 = vunpack.c.h.b16 %v267
  %v325 = vunpack.c.l.b16 %v268
  %v326 = vunpack.c.h.b16 %v268
  %v327 = vunpack.c.l.b16 %v269
  %v328 = vunpack.c.h.b16 %v269
  %v329 = vunpack.c.l.b16 %v270
  %v330 = vunpack.c.h.b16 %v270
  %v331 = vunpack.c.l.b16 %v271
  %v332 = vunpack.c.h.b16 %v271
  %v333 = vunpack.c.l.b16 %v272
  %v334 = vunpack.c.h.b16 %v272
  %v335 = vunpack.c.l.b16 %v273
  %v336 = vunpack.c.h.b16 %v273
  %v337 = vunpack.c.l.b16 %v274
  %v338 = vunpack.c.h.b16 %v274
  %v339 = vunpack.c.l.b16 %v275
  %v340 = vunpack.c.h.b16 %v275
  %v341 = vunpack.c.l.b16 %v276
  %v342 = vunpack.c.h.b16 %v276
  %v343 = vunpack.c.l.b16 %v277
  %v344 = vunpack.c.h.b16 %v277
  %v345 = vunpack.c.l.b16 %v278
  %v346 = vunpack.c.h.b16 %v278
  %v347 = vunpack.c.l.b16 %v279
  %v348 = vunpack.c.h.b16 %v279
  %v349 = vunpack.c.l.b16 %v280
  %v350 = vunpack.c.h.b16 %v280
  %v351 = vunpack.c.l.b16 %v281
  %v352 = vunpack.c.h.b16 %v281
  %v353 = vunpack.c.l.b16 %v282
  %v354 = vunpack.c.h.b16 %v282
  %v355 = vunpack.c.l.b16 %v283
  %v356 = vunpack.c.h.b16 %v283
  %v357 = vpack.c.b16 %v325, %v317
  %v358 = vpack.c.b16 %v326, %v318
  %v359 = vpack.c.b16 %v327, %v319
  %v360 = vpack.c.b16 %v328, %v320
  %v361 = vpack.c.b16 %v329, %v321
  %v362 = vpack.c.b16 %v330, %v322
  %v363 = vpack.c.b16 %v331, %v323
  %v364 = vpack.c.b16 %v332, %v324
  %v365 = vpack.c.b16 %v341, %v333
  %v366 = vpack.c.b16 %v342, %v334
  %v367 = vpack.c.b16 %v343, %v335
  %v368 = vpack.c.b16 %v344, %v336
  %v369 = vpack.c.b16 %v345, %v337
  %v370 = vpack.c.b16 %v346, %v338
  %v371 = vpack.c.b16 %v347, %v339
  %v372 = vpack.c.b16 %v348, %v340
  %v373 = vpack.c.b16 %v349, %v349
  %v374 = vpack.c.b16 %v350, %v350
  %v375 = vpack.c.b16 %v351, %v351
  %v376 = vpack.c.b16 %v352, %v352
  %v377 = vpack.c.b16 %v353, %v353
  %v378 = vpack.c.b16 %v354, %v354
  %v379 = vpack.c.b16 %v355, %v355
  %v380 = vpack.c.b16 %v356, %v356
  %vm397 = vcmask 326656
  %v399 = vsel %vm397, %v294, 0
  %v402 = vsel %vm397, %v295, 0
  %v405 = vsel %vm397, %v296, 0
  %v408 = vsel %vm105, %v373, 0
  %v411 = vsel %vm105, %v374, 0
  %v414 = vsel %vm105, %v375, 0
  %v417 = vsel %vm105, %v376, 0
  %v420 = vsel %vm105, %v377, 0
  %v423 = vsel %vm105, %v378, 0
  %v426 = vsel %vm105, %v379, 0
  %v429 = vsel %vm105, %v380, 0
  %431 = vmatprep.subr.bf16.mxu0 %v358
  %432 = vmatpush1.bf16.msra.mxu0 %v357
  %433 = vmatprep.subr.bf16.mxu0 %v366
  %434 = vmatpush1.bf16.msra.mxu0 %v365
  %435 = vmatprep.subr.bf16.mxu0 %v411
  %436 = vmatpush1.bf16.msra.mxu0 %v408
  %437 = vmatprep.subr.bf16.mxu0 0
  %438 = vmatpush1.bf16.msra.mxu0 0
  %439 = vmatprep.subr.bf16.mxu0 0
  %440 = vmatpush1.bf16.msra.mxu0 0
  %441 = vmatprep.subr.bf16.mxu0 0
  %442 = vmatpush1.bf16.msra.mxu0 0
  %443 = vmatprep.subr.bf16.mxu0 0
  %444 = vmatpush1.bf16.msra.mxu0 0
  %445 = vmatprep.subr.bf16.mxu0 0
  %446 = vmatpush1.bf16.msra.mxu0 0
  %447 = vmatprep.subr.bf16.mxu0 0
  %448 = vmatpush1.bf16.msra.mxu0 0
  %449 = vmatprep.subr.bf16.mxu0 0
  %450 = vmatpush1.bf16.msra.mxu0 0
  %451 = vmatprep.subr.bf16.mxu0 0
  %452 = vmatpush1.bf16.msra.mxu0 0
  %453 = vmatprep.subr.bf16.mxu0 0
  %454 = vmatpush1.bf16.msra.mxu0 0
  %455 = vmatprep.subr.bf16.mxu0 0
  %456 = vmatpush1.bf16.msra.mxu0 0
  %457 = vmatprep.subr.bf16.mxu0 0
  %458 = vmatpush1.bf16.msra.mxu0 0
  %459 = vmatprep.subr.bf16.mxu0 0
  %460 = vmatpush1.bf16.msra.mxu0 0
  %461 = vmatprep.subr.bf16.mxu0 0
  %462 = vmatpush1.bf16.msra.mxu0 0
  %463 = vmatprep.mubr.bf16.mxu0 0
  %464 = vmatmul.mubr.bf16.gmra.mrb[0].mxu0 %v399
  %v465 = vpop.f32.mrb[0].mxu0
  %v466 = vadd.f32 0.0, %v465
  %v467 = vpop.f32.mrb[0].mxu0
  %v468 = vadd.f32 0.0, %v467
  %v469 = vpop.f32.mrb[0].mxu0
  %v470 = vadd.f32 0.0, %v469
  %v471 = vpop.f32.mrb[0].mxu0
  %v472 = vadd.f32 0.0, %v471
  %473 = vmatprep.mubr.bf16.mxu0 0
  %474 = vmatmul.mubr.bf16.gmra.mrb[0].mxu0 %v402
  %v475 = vpop.f32.mrb[0].mxu0
  %v476 = vadd.f32 0.0, %v475
  %v477 = vpop.f32.mrb[0].mxu0
  %v478 = vadd.f32 0.0, %v477
  %v479 = vpop.f32.mrb[0].mxu0
  %v480 = vadd.f32 0.0, %v479
  %v481 = vpop.f32.mrb[0].mxu0
  %v482 = vadd.f32 0.0, %v481
  %483 = vmatprep.mubr.bf16.mxu0 0
  %484 = vmatmul.mubr.bf16.gmra.mrb[0].mxu0 %v405
  %v485 = vpop.f32.mrb[0].mxu0
  %v486 = vadd.f32 0.0, %v485
  %v487 = vpop.f32.mrb[0].mxu0
  %v488 = vadd.f32 0.0, %v487
  %v489 = vpop.f32.mrb[0].mxu0
  %v490 = vpop.f32.mrb[0].mxu0
  %491 = vdwg.mxu0
  %492 = vmatprep.subr.bf16.mxu0 %v360
  %493 = vmatpush1.bf16.msra.mxu0 %v359
  %494 = vmatprep.subr.bf16.mxu0 %v368
  %495 = vmatpush1.bf16.msra.mxu0 %v367
  %496 = vmatprep.subr.bf16.mxu0 %v417
  %497 = vmatpush1.bf16.msra.mxu0 %v414
  %498 = vmatprep.subr.bf16.mxu0 0
  %499 = vmatpush1.bf16.msra.mxu0 0
  %500 = vmatprep.subr.bf16.mxu0 0
  %501 = vmatpush1.bf16.msra.mxu0 0
  %502 = vmatprep.subr.bf16.mxu0 0
  %503 = vmatpush1.bf16.msra.mxu0 0
  %504 = vmatprep.subr.bf16.mxu0 0
  %505 = vmatpush1.bf16.msra.mxu0 0
  %506 = vmatprep.subr.bf16.mxu0 0
  %507 = vmatpush1.bf16.msra.mxu0 0
  %508 = vmatprep.subr.bf16.mxu0 0
  %509 = vmatpush1.bf16.msra.mxu0 0
  %510 = vmatprep.subr.bf16.mxu0 0
  %511 = vmatpush1.bf16.msra.mxu0 0
  %512 = vmatprep.subr.bf16.mxu0 0
  %513 = vmatpush1.bf16.msra.mxu0 0
  %514 = vmatprep.subr.bf16.mxu0 0
  %515 = vmatpush1.bf16.msra.mxu0 0
  %516 = vmatprep.subr.bf16.mxu0 0
  %517 = vmatpush1.bf16.msra.mxu0 0
  %518 = vmatprep.subr.bf16.mxu0 0
  %519 = vmatpush1.bf16.msra.mxu0 0
  %520 = vmatprep.subr.bf16.mxu0 0
  %521 = vmatpush1.bf16.msra.mxu0 0
  %522 = vmatprep.subr.bf16.mxu0 0
  %523 = vmatpush1.bf16.msra.mxu0 0
  %524 = vmatprep.mubr.bf16.mxu0 0
  %525 = vmatmul.mubr.bf16.gmra.mrb[0].mxu0 %v399
  %v526 = vpop.f32.mrb[0].mxu0
  %v527 = vadd.f32 0.0, %v526
  %v528 = vpop.f32.mrb[0].mxu0
  %v529 = vadd.f32 0.0, %v528
  %v530 = vpop.f32.mrb[0].mxu0
  %v531 = vadd.f32 0.0, %v530
  %v532 = vpop.f32.mrb[0].mxu0
  %v533 = vadd.f32 0.0, %v532
  %534 = vmatprep.mubr.bf16.mxu0 0
  %535 = vmatmul.mubr.bf16.gmra.mrb[0].mxu0 %v402
  %v536 = vpop.f32.mrb[0].mxu0
  %v537 = vadd.f32 0.0, %v536
  %v538 = vpop.f32.mrb[0].mxu0
  %v539 = vadd.f32 0.0, %v538
  %v540 = vpop.f32.mrb[0].mxu0
  %v541 = vadd.f32 0.0, %v540
  %v542 = vpop.f32.mrb[0].mxu0
  %v543 = vadd.f32 0.0, %v542
  %544 = vmatprep.mubr.bf16.mxu0 0
  %545 = vmatmul.mubr.bf16.gmra.mrb[0].mxu0 %v405
  %v546 = vpop.f32.mrb[0].mxu0
  %v547 = vadd.f32 0.0, %v546
  %v548 = vpop.f32.mrb[0].mxu0
  %v549 = vadd.f32 0.0, %v548
  %v550 = vpop.f32.mrb[0].mxu0
  %v551 = vpop.f32.mrb[0].mxu0
  %552 = vdwg.mxu0
  %553 = vmatprep.subr.bf16.mxu0 %v362
  %554 = vmatpush1.bf16.msra.mxu0 %v361
  %555 = vmatprep.subr.bf16.mxu0 %v370
  %556 = vmatpush1.bf16.msra.mxu0 %v369
  %557 = vmatprep.subr.bf16.mxu0 %v423
  %558 = vmatpush1.bf16.msra.mxu0 %v420
  %559 = vmatprep.subr.bf16.mxu0 0
  %560 = vmatpush1.bf16.msra.mxu0 0
  %561 = vmatprep.subr.bf16.mxu0 0
  %562 = vmatpush1.bf16.msra.mxu0 0
  %563 = vmatprep.subr.bf16.mxu0 0
  %564 = vmatpush1.bf16.msra.mxu0 0
  %565 = vmatprep.subr.bf16.mxu0 0
  %566 = vmatpush1.bf16.msra.mxu0 0
  %567 = vmatprep.subr.bf16.mxu0 0
  %568 = vmatpush1.bf16.msra.mxu0 0
  %569 = vmatprep.subr.bf16.mxu0 0
  %570 = vmatpush1.bf16.msra.mxu0 0
  %571 = vmatprep.subr.bf16.mxu0 0
  %572 = vmatpush1.bf16.msra.mxu0 0
  %573 = vmatprep.subr.bf16.mxu0 0
  %574 = vmatpush1.bf16.msra.mxu0 0
  %575 = vmatprep.subr.bf16.mxu0 0
  %576 = vmatpush1.bf16.msra.mxu0 0
  %577 = vmatprep.subr.bf16.mxu0 0
  %578 = vmatpush1.bf16.msra.mxu0 0
  %579 = vmatprep.subr.bf16.mxu0 0
  %580 = vmatpush1.bf16.msra.mxu0 0
  %581 = vmatprep.subr.bf16.mxu0 0
  %582 = vmatpush1.bf16.msra.mxu0 0
  %583 = vmatprep.subr.bf16.mxu0 0
  %584 = vmatpush1.bf16.msra.mxu0 0
  %585 = vmatprep.mubr.bf16.mxu0 0
  %586 = vmatmul.mubr.bf16.gmra.mrb[0].mxu0 %v399
  %v587 = vpop.f32.mrb[0].mxu0
  %v588 = vadd.f32 0.0, %v587
  %v589 = vpop.f32.mrb[0].mxu0
  %v590 = vadd.f32 0.0, %v589
  %v591 = vpop.f32.mrb[0].mxu0
  %v592 = vadd.f32 0.0, %v591
  %v593 = vpop.f32.mrb[0].mxu0
  %v594 = vadd.f32 0.0, %v593
  %595 = vmatprep.mubr.bf16.mxu0 0
  %596 = vmatmul.mubr.bf16.gmra.mrb[0].mxu0 %v402
  %v597 = vpop.f32.mrb[0].mxu0
  %v598 = vadd.f32 0.0, %v597
  %v599 = vpop.f32.mrb[0].mxu0
  %v600 = vadd.f32 0.0, %v599
  %v601 = vpop.f32.mrb[0].mxu0
  %v602 = vadd.f32 0.0, %v601
  %v603 = vpop.f32.mrb[0].mxu0
  %v604 = vadd.f32 0.0, %v603
  %605 = vmatprep.mubr.bf16.mxu0 0
  %606 = vmatmul.mubr.bf16.gmra.mrb[0].mxu0 %v405
  %v607 = vpop.f32.mrb[0].mxu0
  %v608 = vadd.f32 0.0, %v607
  %v609 = vpop.f32.mrb[0].mxu0
  %v610 = vadd.f32 0.0, %v609
  %v611 = vpop.f32.mrb[0].mxu0
  %v612 = vpop.f32.mrb[0].mxu0
  %613 = vdwg.mxu0
  %614 = vmatprep.subr.bf16.mxu0 %v364
  %615 = vmatpush1.bf16.msra.mxu0 %v363
  %616 = vmatprep.subr.bf16.mxu0 %v372
  %617 = vmatpush1.bf16.msra.mxu0 %v371
  %618 = vmatprep.subr.bf16.mxu0 %v429
  %619 = vmatpush1.bf16.msra.mxu0 %v426
  %620 = vmatprep.subr.bf16.mxu0 0
  %621 = vmatpush1.bf16.msra.mxu0 0
  %622 = vmatprep.subr.bf16.mxu0 0
  %623 = vmatpush1.bf16.msra.mxu0 0
  %624 = vmatprep.subr.bf16.mxu0 0
  %625 = vmatpush1.bf16.msra.mxu0 0
  %626 = vmatprep.subr.bf16.mxu0 0
  %627 = vmatpush1.bf16.msra.mxu0 0
  %628 = vmatprep.subr.bf16.mxu0 0
  %629 = vmatpush1.bf16.msra.mxu0 0
  %630 = vmatprep.subr.bf16.mxu0 0
  %631 = vmatpush1.bf16.msra.mxu0 0
  %632 = vmatprep.subr.bf16.mxu0 0
  %633 = vmatpush1.bf16.msra.mxu0 0
  %634 = vmatprep.subr.bf16.mxu0 0
  %635 = vmatpush1.bf16.msra.mxu0 0
  %636 = vmatprep.subr.bf16.mxu0 0
  %637 = vmatpush1.bf16.msra.mxu0 0
  %638 = vmatprep.subr.bf16.mxu0 0
  %639 = vmatpush1.bf16.msra.mxu0 0
  %640 = vmatprep.subr.bf16.mxu0 0
  %641 = vmatpush1.bf16.msra.mxu0 0
  %642 = vmatprep.subr.bf16.mxu0 0
  %643 = vmatpush1.bf16.msra.mxu0 0
  %644 = vmatprep.subr.bf16.mxu0 0
  %645 = vmatpush1.bf16.msra.mxu0 0
  %646 = vmatprep.mubr.bf16.mxu0 0
  %647 = vmatmul.mubr.bf16.gmra.mrb[0].mxu0 %v399
  %v648 = vpop.f32.mrb[0].mxu0
  %v649 = vadd.f32 0.0, %v648
  %v650 = vpop.f32.mrb[0].mxu0
  %v651 = vadd.f32 0.0, %v650
  %v652 = vpop.f32.mrb[0].mxu0
  %v653 = vadd.f32 0.0, %v652
  %v654 = vpop.f32.mrb[0].mxu0
  %v655 = vadd.f32 0.0, %v654
  %656 = vmatprep.mubr.bf16.mxu0 0
  %657 = vmatmul.mubr.bf16.gmra.mrb[0].mxu0 %v402
  %v658 = vpop.f32.mrb[0].mxu0
  %v659 = vadd.f32 0.0, %v658
  %v660 = vpop.f32.mrb[0].mxu0
  %v661 = vadd.f32 0.0, %v660
  %v662 = vpop.f32.mrb[0].mxu0
  %v663 = vadd.f32 0.0, %v662
  %v664 = vpop.f32.mrb[0].mxu0
  %v665 = vadd.f32 0.0, %v664
  %666 = vmatprep.mubr.bf16.mxu0 0
  %667 = vmatmul.mubr.bf16.gmra.mrb[0].mxu0 %v405
  %v668 = vpop.f32.mrb[0].mxu0
  %v669 = vadd.f32 0.0, %v668
  %v670 = vpop.f32.mrb[0].mxu0
  %v671 = vadd.f32 0.0, %v670
  %v672 = vpop.f32.mrb[0].mxu0
  %v673 = vpop.f32.mrb[0].mxu0
  %674 = vdwg.mxu0
  %675 = vst [vmem:[#allocation3] sm:$0xff] %v466
  %676 = vst [vmem:[#allocation3 + $0x8] sm:$0xff] %v468
  %677 = vst [vmem:[#allocation3 + $0x10] sm:$0xff] %v527
  %678 = vst [vmem:[#allocation3 + $0x18] sm:$0xff] %v529
  %679 = vst [vmem:[#allocation3 + $0x20] sm:$0xff] %v588
  %680 = vst [vmem:[#allocation3 + $0x28] sm:$0xff] %v590
  %681 = vst [vmem:[#allocation3 + $0x30] sm:$0xff] %v649
  %682 = vst [vmem:[#allocation3 + $0x38] sm:$0xff] %v651
  %683 = vst [vmem:[#allocation3 + $0x40] sm:$0xff] %v470
  %684 = vst [vmem:[#allocation3 + $0x48] sm:$0xff] %v472
  %685 = vst [vmem:[#allocation3 + $0x50] sm:$0xff] %v531
  %686 = vst [vmem:[#allocation3 + $0x58] sm:$0xff] %v533
  %687 = vst [vmem:[#allocation3 + $0x60] sm:$0xff] %v592
  %688 = vst [vmem:[#allocation3 + $0x68] sm:$0xff] %v594
  %689 = vst [vmem:[#allocation3 + $0x70] sm:$0xff] %v653
  %690 = vst [vmem:[#allocation3 + $0x78] sm:$0xff] %v655
  %691 = vst [vmem:[#allocation3 + $0x80] sm:$0xff] %v476
  %692 = vst [vmem:[#allocation3 + $0x88] sm:$0xff] %v478
  %693 = vst [vmem:[#allocation3 + $0x90] sm:$0xff] %v537
  %694 = vst [vmem:[#allocation3 + $0x98] sm:$0xff] %v539
  %695 = vst [vmem:[#allocation3 + $0xa0] sm:$0xff] %v598
  %696 = vst [vmem:[#allocation3 + $0xa8] sm:$0xff] %v600
  %697 = vst [vmem:[#allocation3 + $0xb0] sm:$0xff] %v659
  %698 = vst [vmem:[#allocation3 + $0xb8] sm:$0xff] %v661
  %699 = vst [vmem:[#allocation3 + $0xc0] sm:$0xff] %v480
  %700 = vst [vmem:[#allocation3 + $0xc8] sm:$0xff] %v482
  %701 = vst [vmem:[#allocation3 + $0xd0] sm:$0xff] %v541
  %702 = vst [vmem:[#allocation3 + $0xd8] sm:$0xff] %v543
  %703 = vst [vmem:[#allocation3 + $0xe0] sm:$0xff] %v602
  %704 = vst [vmem:[#allocation3 + $0xe8] sm:$0xff] %v604
  %705 = vst [vmem:[#allocation3 + $0xf0] sm:$0xff] %v663
  %706 = vst [vmem:[#allocation3 + $0xf8] sm:$0xff] %v665
  %707 = vst [vmem:[#allocation3 + $0x100] sm:$0xff] %v486
  %708 = vst [vmem:[#allocation3 + $0x108] sm:$0xff] %v488
  %709 = vst [vmem:[#allocation3 + $0x110] sm:$0xff] %v547
  %710 = vst [vmem:[#allocation3 + $0x118] sm:$0xff] %v549
  %711 = vst [vmem:[#allocation3 + $0x120] sm:$0xff] %v608
  %712 = vst [vmem:[#allocation3 + $0x128] sm:$0xff] %v610
  %713 = vst [vmem:[#allocation3 + $0x130] sm:$0xff] %v669
  %714 = vst [vmem:[#allocation3 + $0x138] sm:$0xff] %v671
  %v715 = vld [vmem:[#allocation3] sm:$0xff]
  %v716 = vld [vmem:[#allocation3 + $0x8] sm:$0xff]
  %v717 = vld [vmem:[#allocation3 + $0x10] sm:$0xff]
  %v718 = vld [vmem:[#allocation3 + $0x18] sm:$0xff]
  %v719 = vld [vmem:[#allocation3 + $0x20] sm:$0xff]
  %v720 = vld [vmem:[#allocation3 + $0x28] sm:$0xff]
  %v721 = vld [vmem:[#allocation3 + $0x30] sm:$0xff]
  %v722 = vld [vmem:[#allocation3 + $0x40] sm:$0xff]
  %v723 = vld [vmem:[#allocation3 + $0x48] sm:$0xff]
  %v724 = vld [vmem:[#allocation3 + $0x50] sm:$0xff]
  %v725 = vld [vmem:[#allocation3 + $0x58] sm:$0xff]
  %v726 = vld [vmem:[#allocation3 + $0x60] sm:$0xff]
  %v727 = vld [vmem:[#allocation3 + $0x68] sm:$0xff]
  %v728 = vld [vmem:[#allocation3 + $0x70] sm:$0xff]
  %v729 = vld [vmem:[#allocation3 + $0x78] sm:$0xff]
  %738 = vrot.lane.b32.xlu0 %v722, 127
  %v739 = vpop.permute.xlu0 %738
  %740 = vrot.lane.b32.xlu0 %v723, 127
  %v741 = vpop.permute.xlu0 %740
  %742 = vrot.lane.b32.xlu0 %v724, 127
  %v743 = vpop.permute.xlu0 %742
  %744 = vrot.lane.b32.xlu0 %v725, 127
  %v745 = vpop.permute.xlu0 %744
  %746 = vrot.lane.b32.xlu0 %v726, 127
  %v747 = vpop.permute.xlu0 %746
  %748 = vrot.lane.b32.xlu0 %v727, 127
  %v749 = vpop.permute.xlu0 %748
  %750 = vrot.lane.b32.xlu0 %v728, 127
  %v751 = vpop.permute.xlu0 %750
  %752 = vrot.lane.b32.xlu0 %v729, 127
  %v753 = vpop.permute.xlu0 %752
  %vm754 = vcmask 1039360
  %v755 = vsel %vm754, %v739, %v741
  %v756 = vsel %vm754, %v741, %v743
  %v757 = vsel %vm754, %v743, %v745
  %v758 = vsel %vm754, %v745, %v747
  %v759 = vsel %vm754, %v747, %v749
  %v760 = vsel %vm754, %v749, %v751
  %v761 = vsel %vm754, %v751, %v753
  %v769 = vadd.f32 %v715, %v755
  %v770 = vadd.f32 %v716, %v756
  %v771 = vadd.f32 %v717, %v757
  %v772 = vadd.f32 %v718, %v758
  %v773 = vadd.f32 %v719, %v759
  %v774 = vadd.f32 %v720, %v760
  %v775 = vadd.f32 %v721, %v761
  %v776 = vld [vmem:[#allocation3 + $0x80] sm:$0xff]
  %v777 = vld [vmem:[#allocation3 + $0x88] sm:$0xff]
  %v778 = vld [vmem:[#allocation3 + $0x90] sm:$0xff]
  %v779 = vld [vmem:[#allocation3 + $0x98] sm:$0xff]
  %v780 = vld [vmem:[#allocation3 + $0xa0] sm:$0xff]
  %v781 = vld [vmem:[#allocation3 + $0xa8] sm:$0xff]
  %v782 = vld [vmem:[#allocation3 + $0xb0] sm:$0xff]
  %v783 = vld [vmem:[#allocation3 + $0xb8] sm:$0xff]
  %792 = vrot.lane.b32.xlu0 %v776, 126
  %v793 = vpop.permute.xlu0 %792
  %794 = vrot.lane.b32.xlu0 %v777, 126
  %v795 = vpop.permute.xlu0 %794
  %796 = vrot.lane.b32.xlu0 %v778, 126
  %v797 = vpop.permute.xlu0 %796
  %798 = vrot.lane.b32.xlu0 %v779, 126
  %v799 = vpop.permute.xlu0 %798
  %800 = vrot.lane.b32.xlu0 %v780, 126
  %v801 = vpop.permute.xlu0 %800
  %802 = vrot.lane.b32.xlu0 %v781, 126
  %v803 = vpop.permute.xlu0 %802
  %804 = vrot.lane.b32.xlu0 %v782, 126
  %v805 = vpop.permute.xlu0 %804
  %806 = vrot.lane.b32.xlu0 %v783, 126
  %v807 = vpop.permute.xlu0 %806
  %vm808 = vcmask 1031168
  %v809 = vsel %vm808, %v793, %v795
  %v810 = vsel %vm808, %v795, %v797
  %v811 = vsel %vm808, %v797, %v799
  %v812 = vsel %vm808, %v799, %v801
  %v813 = vsel %vm808, %v801, %v803
  %v814 = vsel %vm808, %v803, %v805
  %v815 = vsel %vm808, %v805, %v807
  %v823 = vadd.f32 %v769, %v809
  %v824 = vadd.f32 %v770, %v810
  %v825 = vadd.f32 %v771, %v811
  %v826 = vadd.f32 %v772, %v812
  %v827 = vadd.f32 %v773, %v813
  %v828 = vadd.f32 %v774, %v814
  %v829 = vadd.f32 %v775, %v815
  %v830 = vld [vmem:[#allocation3 + $0xc0] sm:$0xff]
  %v831 = vld [vmem:[#allocation3 + $0xc8] sm:$0xff]
  %v832 = vld [vmem:[#allocation3 + $0xd0] sm:$0xff]
  %v833 = vld [vmem:[#allocation3 + $0xd8] sm:$0xff]
  %v834 = vld [vmem:[#allocation3 + $0xe0] sm:$0xff]
  %v835 = vld [vmem:[#allocation3 + $0xe8] sm:$0xff]
  %v836 = vld [vmem:[#allocation3 + $0xf0] sm:$0xff]
  %v837 = vld [vmem:[#allocation3 + $0xf8] sm:$0xff]
  %846 = vrot.lane.b32.xlu0 %v830, 125
  %v847 = vpop.permute.xlu0 %846
  %848 = vrot.lane.b32.xlu0 %v831, 125
  %v849 = vpop.permute.xlu0 %848
  %850 = vrot.lane.b32.xlu0 %v832, 125
  %v851 = vpop.permute.xlu0 %850
  %852 = vrot.lane.b32.xlu0 %v833, 125
  %v853 = vpop.permute.xlu0 %852
  %854 = vrot.lane.b32.xlu0 %v834, 125
  %v855 = vpop.permute.xlu0 %854
  %856 = vrot.lane.b32.xlu0 %v835, 125
  %v857 = vpop.permute.xlu0 %856
  %858 = vrot.lane.b32.xlu0 %v836, 125
  %v859 = vpop.permute.xlu0 %858
  %860 = vrot.lane.b32.xlu0 %v837, 125
  %v861 = vpop.permute.xlu0 %860
  %vm862 = vcmask 1022976
  %v863 = vsel %vm862, %v847, %v849
  %v864 = vsel %vm862, %v849, %v851
  %v865 = vsel %vm862, %v851, %v853
  %v866 = vsel %vm862, %v853, %v855
  %v867 = vsel %vm862, %v855, %v857
  %v868 = vsel %vm862, %v857, %v859
  %v869 = vsel %vm862, %v859, %v861
  %v877 = vadd.f32 %v823, %v863
  %v878 = vadd.f32 %v824, %v864
  %v879 = vadd.f32 %v825, %v865
  %v880 = vadd.f32 %v826, %v866
  %v881 = vadd.f32 %v827, %v867
  %v882 = vadd.f32 %v828, %v868
  %v883 = vadd.f32 %v829, %v869
  %v884 = vld [vmem:[#allocation3 + $0x100] sm:$0xff]
  %v885 = vld [vmem:[#allocation3 + $0x108] sm:$0xff]
  %v886 = vld [vmem:[#allocation3 + $0x110] sm:$0xff]
  %v887 = vld [vmem:[#allocation3 + $0x118] sm:$0xff]
  %v888 = vld [vmem:[#allocation3 + $0x120] sm:$0xff]
  %v889 = vld [vmem:[#allocation3 + $0x128] sm:$0xff]
  %v890 = vld [vmem:[#allocation3 + $0x130] sm:$0xff]
  %v891 = vld [vmem:[#allocation3 + $0x138] sm:$0xff]
  %900 = vrot.lane.b32.xlu0 %v884, 124
  %v901 = vpop.permute.xlu0 %900
  %902 = vrot.lane.b32.xlu0 %v885, 124
  %v903 = vpop.permute.xlu0 %902
  %904 = vrot.lane.b32.xlu0 %v886, 124
  %v905 = vpop.permute.xlu0 %904
  %906 = vrot.lane.b32.xlu0 %v887, 124
  %v907 = vpop.permute.xlu0 %906
  %908 = vrot.lane.b32.xlu0 %v888, 124
  %v909 = vpop.permute.xlu0 %908
  %910 = vrot.lane.b32.xlu0 %v889, 124
  %v911 = vpop.permute.xlu0 %910
  %912 = vrot.lane.b32.xlu0 %v890, 124
  %v913 = vpop.permute.xlu0 %912
  %914 = vrot.lane.b32.xlu0 %v891, 124
  %v915 = vpop.permute.xlu0 %914
  %vm916 = vcmask 1014784
  %v917 = vsel %vm916, %v901, %v903
  %v918 = vsel %vm916, %v903, %v905
  %v919 = vsel %vm916, %v905, %v907
  %v920 = vsel %vm916, %v907, %v909
  %v921 = vsel %vm916, %v909, %v911
  %v922 = vsel %vm916, %v911, %v913
  %v923 = vsel %vm916, %v913, %v915
  %v931 = vadd.f32 %v877, %v917
  %v932 = vadd.f32 %v878, %v918
  %v933 = vadd.f32 %v879, %v919
  %v934 = vadd.f32 %v880, %v920
  %v935 = vadd.f32 %v881, %v921
  %v936 = vadd.f32 %v882, %v922
  %v937 = vadd.f32 %v883, %v923
  %v938 = vld [vmem:[%s2] sm:$0xff]
  %940 = vset.pattern.permute.xlu0 0
  %941 = vperm.xlu0 %940, %v938
  %v942 = vpop.permute.xlu0 %941
  %v944 = vadd.f32 %v931, %v942
  %v945 = vadd.f32 %v932, %v942
  %v946 = vadd.f32 %v933, %v942
  %v947 = vadd.f32 %v934, %v942
  %v948 = vadd.f32 %v935, %v942
  %v949 = vadd.f32 %v936, %v942
  %v950 = vadd.f32 %v937, %v942
  %v951 = vmax.f32 %v944, 0.0
  %v952 = vmax.f32 %v945, 0.0
  %v953 = vmax.f32 %v946, 0.0
  %v954 = vmax.f32 %v947, 0.0
  %v955 = vmax.f32 %v948, 0.0
  %v956 = vmax.f32 %v949, 0.0
  %v957 = vmax.f32 %v950, 0.0
  %958 = vst [vmem:[#allocation4] sm:$0xff] %v951
  %959 = vst [vmem:[#allocation4 + $0x8] sm:$0xff] %v952
  %960 = vst [vmem:[#allocation4 + $0x10] sm:$0xff] %v953
  %961 = vst [vmem:[#allocation4 + $0x18] sm:$0xff] %v954
  %962 = vst [vmem:[#allocation4 + $0x20] sm:$0xff] %v955
  %963 = vst [vmem:[#allocation4 + $0x28] sm:$0xff] %v956
  %964 = vst [vmem:[#allocation4 + $0x30] sm:$0xff] %v957
  %v965 = vld [vmem:[#allocation4] sm:$0xff]
  %v966 = vld [vmem:[#allocation4 + $0x8] sm:$0xff]
  %v967 = vld [vmem:[#allocation4 + $0x10] sm:$0xff]
  %v968 = vld [vmem:[#allocation4 + $0x18] sm:$0xff]
  %v969 = vld [vmem:[#allocation4 + $0x20] sm:$0xff]
  %v970 = vld [vmem:[#allocation4 + $0x28] sm:$0xff]
  %v971 = vld [vmem:[#allocation4] sm:$0xff]
  %v972 = vld [vmem:[#allocation4 + $0x8] sm:$0xff]
  %v973 = vld [vmem:[#allocation4 + $0x10] sm:$0xff]
  %v974 = vld [vmem:[#allocation4 + $0x18] sm:$0xff]
  %v975 = vld [vmem:[#allocation4 + $0x20] sm:$0xff]
  %v976 = vld [vmem:[#allocation4 + $0x28] sm:$0xff]
  %v977 = vld [vmem:[#allocation4 + $0x30] sm:$0xff]
  %985 = vrot.lane.b32.xlu0 %v971, 104
  %v986 = vpop.permute.xlu0 %985
  %987 = vrot.lane.b32.xlu0 %v972, 104
  %v988 = vpop.permute.xlu0 %987
  %989 = vrot.lane.b32.xlu0 %v973, 104
  %v990 = vpop.permute.xlu0 %989
  %991 = vrot.lane.b32.xlu0 %v974, 104
  %v992 = vpop.permute.xlu0 %991
  %993 = vrot.lane.b32.xlu0 %v975, 104
  %v994 = vpop.permute.xlu0 %993
  %995 = vrot.lane.b32.xlu0 %v976, 104
  %v996 = vpop.permute.xlu0 %995
  %997 = vrot.lane.b32.xlu0 %v977, 104
  %v998 = vpop.permute.xlu0 %997
  %vm999 = vcmask 850944
  %v1000 = vsel %vm999, %v986, %v988
  %v1001 = vsel %vm999, %v988, %v990
  %v1002 = vsel %vm999, %v990, %v992
  %v1003 = vsel %vm999, %v992, %v994
  %v1004 = vsel %vm999, %v994, %v996
  %v1005 = vsel %vm999, %v996, %v998
  %v1012 = vmax.f32 %v965, %v1000
  %v1013 = vmax.f32 %v966, %v1001
  %v1014 = vmax.f32 %v967, %v1002
  %v1015 = vmax.f32 %v968, %v1003
  %v1016 = vmax.f32 %v969, %v1004
  %v1017 = vmax.f32 %v970, %v1005
  %1018 = vrot.lane.b32.xlu0 %v971, 80
  %v1019 = vpop.permute.xlu0 %1018
  %1020 = vrot.lane.b32.xlu0 %v972, 80
  %v1021 = vpop.permute.xlu0 %1020
  %1022 = vrot.lane.b32.xlu0 %v973, 80
  %v1023 = vpop.permute.xlu0 %1022
  %1024 = vrot.lane.b32.xlu0 %v974, 80
  %v1025 = vpop.permute.xlu0 %1024
  %1026 = vrot.lane.b32.xlu0 %v975, 80
  %v1027 = vpop.permute.xlu0 %1026
  %1028 = vrot.lane.b32.xlu0 %v976, 80
  %v1029 = vpop.permute.xlu0 %1028
  %1030 = vrot.lane.b32.xlu0 %v977, 80
  %v1031 = vpop.permute.xlu0 %1030
  %vm1032 = vcmask 654336
  %v1033 = vsel %vm1032, %v1019, %v1021
  %v1034 = vsel %vm1032, %v1021, %v1023
  %v1035 = vsel %vm1032, %v1023, %v1025
  %v1036 = vsel %vm1032, %v1025, %v1027
  %v1037 = vsel %vm1032, %v1027, %v1029
  %v1038 = vsel %vm1032, %v1029, %v1031
  %v1045 = vmax.f32 %v1012, %v1033
  %v1046 = vmax.f32 %v1013, %v1034
  %v1047 = vmax.f32 %v1014, %v1035
  %v1048 = vmax.f32 %v1015, %v1036
  %v1049 = vmax.f32 %v1016, %v1037
  %v1050 = vmax.f32 %v1017, %v1038
  %1051 = vrot.lane.b32.xlu0 %v971, 56
  %v1052 = vpop.permute.xlu0 %1051
  %1053 = vrot.lane.b32.xlu0 %v972, 56
  %v1054 = vpop.permute.xlu0 %1053
  %1055 = vrot.lane.b32.xlu0 %v973, 56
  %v1056 = vpop.permute.xlu0 %1055
  %1057 = vrot.lane.b32.xlu0 %v974, 56
  %v1058 = vpop.permute.xlu0 %1057
  %1059 = vrot.lane.b32.xlu0 %v975, 56
  %v1060 = vpop.permute.xlu0 %1059
  %1061 = vrot.lane.b32.xlu0 %v976, 56
  %v1062 = vpop.permute.xlu0 %1061
  %1063 = vrot.lane.b32.xlu0 %v977, 56
  %v1064 = vpop.permute.xlu0 %1063
  %vm1065 = vcmask 457728
  %v1066 = vsel %vm1065, %v1052, %v1054
  %v1067 = vsel %vm1065, %v1054, %v1056
  %v1068 = vsel %vm1065, %v1056, %v1058
  %v1069 = vsel %vm1065, %v1058, %v1060
  %v1070 = vsel %vm1065, %v1060, %v1062
  %v1071 = vsel %vm1065, %v1062, %v1064
  %v1078 = vmax.f32 %v1045, %v1066
  %v1079 = vmax.f32 %v1046, %v1067
  %v1080 = vmax.f32 %v1047, %v1068
  %v1081 = vmax.f32 %v1048, %v1069
  %v1082 = vmax.f32 %v1049, %v1070
  %v1083 = vmax.f32 %v1050, %v1071
  %1084 = vrot.lane.b32.xlu0 %v971, 32
  %v1085 = vpop.permute.xlu0 %1084
  %1086 = vrot.lane.b32.xlu0 %v972, 32
  %v1087 = vpop.permute.xlu0 %1086
  %1088 = vrot.lane.b32.xlu0 %v973, 32
  %v1089 = vpop.permute.xlu0 %1088
  %1090 = vrot.lane.b32.xlu0 %v974, 32
  %v1091 = vpop.permute.xlu0 %1090
  %1092 = vrot.lane.b32.xlu0 %v975, 32
  %v1093 = vpop.permute.xlu0 %1092
  %1094 = vrot.lane.b32.xlu0 %v976, 32
  %v1095 = vpop.permute.xlu0 %1094
  %1096 = vrot.lane.b32.xlu0 %v977, 32
  %v1097 = vpop.permute.xlu0 %1096
  %vm1098 = vcmask 261120
  %v1099 = vsel %vm1098, %v1085, %v1087
  %v1100 = vsel %vm1098, %v1087, %v1089
  %v1101 = vsel %vm1098, %v1089, %v1091
  %v1102 = vsel %vm1098, %v1091, %v1093
  %v1103 = vsel %vm1098, %v1093, %v1095
  %v1104 = vsel %vm1098, %v1095, %v1097
  %v1111 = vmax.f32 %v1078, %v1099
  %v1112 = vmax.f32 %v1079, %v1100
  %v1113 = vmax.f32 %v1080, %v1101
  %v1114 = vmax.f32 %v1081, %v1102
  %v1115 = vmax.f32 %v1082, %v1103
  %v1116 = vmax.f32 %v1083, %v1104
  %1117 = vst [vmem:[#allocation5] sm:$0xff] %v1111
  %1118 = vst [vmem:[#allocation5 + $0x8] sm:$0xff] %v1112
  %1119 = vst [vmem:[#allocation5 + $0x10] sm:$0xff] %v1113
  %1120 = vst [vmem:[#allocation5 + $0x18] sm:$0xff] %v1114
  %1121 = vst [vmem:[#allocation5 + $0x20] sm:$0xff] %v1115
  %1122 = vst [vmem:[#allocation5 + $0x28] sm:$0xff] %v1116
  %v1123 = vld [vmem:[#allocation5] sm:$0xff]
  %v1124 = vld [vmem:[#allocation5 + $0x8] sm:$0xff]
  %v1125 = vld [vmem:[#allocation5 + $0x10] sm:$0xff]
  %v1126 = vld [vmem:[#allocation5 + $0x18] sm:$0xff]
  %v1127 = vld [vmem:[#allocation5 + $0x20] sm:$0xff]
  %v1128 = vld [vmem:[#allocation5] sm:$0xff]
  %v1129 = vld [vmem:[#allocation5 + $0x8] sm:$0xff]
  %v1130 = vld [vmem:[#allocation5 + $0x10] sm:$0xff]
  %v1131 = vld [vmem:[#allocation5 + $0x18] sm:$0xff]
  %v1132 = vld [vmem:[#allocation5 + $0x20] sm:$0xff]
  %v1133 = vld [vmem:[#allocation5 + $0x28] sm:$0xff]
  %1140 = vrot.lane.b32.xlu0 %v1128, 127
  %v1141 = vpop.permute.xlu0 %1140
  %1142 = vrot.lane.b32.xlu0 %v1129, 127
  %v1143 = vpop.permute.xlu0 %1142
  %1144 = vrot.lane.b32.xlu0 %v1130, 127
  %v1145 = vpop.permute.xlu0 %1144
  %1146 = vrot.lane.b32.xlu0 %v1131, 127
  %v1147 = vpop.permute.xlu0 %1146
  %1148 = vrot.lane.b32.xlu0 %v1132, 127
  %v1149 = vpop.permute.xlu0 %1148
  %1150 = vrot.lane.b32.xlu0 %v1133, 127
  %v1151 = vpop.permute.xlu0 %1150
  %v1152 = vsel %vm754, %v1141, %v1143
  %v1153 = vsel %vm754, %v1143, %v1145
  %v1154 = vsel %vm754, %v1145, %v1147
  %v1155 = vsel %vm754, %v1147, %v1149
  %v1156 = vsel %vm754, %v1149, %v1151
  %v1162 = vmax.f32 %v1123, %v1152
  %v1163 = vmax.f32 %v1124, %v1153
  %v1164 = vmax.f32 %v1125, %v1154
  %v1165 = vmax.f32 %v1126, %v1155
  %v1166 = vmax.f32 %v1127, %v1156
  %1167 = vrot.lane.b32.xlu0 %v1128, 126
  %v1168 = vpop.permute.xlu0 %1167
  %1169 = vrot.lane.b32.xlu0 %v1129, 126
  %v1170 = vpop.permute.xlu0 %1169
  %1171 = vrot.lane.b32.xlu0 %v1130, 126
  %v1172 = vpop.permute.xlu0 %1171
  %1173 = vrot.lane.b32.xlu0 %v1131, 126
  %v1174 = vpop.permute.xlu0 %1173
  %1175 = vrot.lane.b32.xlu0 %v1132, 126
  %v1176 = vpop.permute.xlu0 %1175
  %1177 = vrot.lane.b32.xlu0 %v1133, 126
  %v1178 = vpop.permute.xlu0 %1177
  %v1179 = vsel %vm808, %v1168, %v1170
  %v1180 = vsel %vm808, %v1170, %v1172
  %v1181 = vsel %vm808, %v1172, %v1174
  %v1182 = vsel %vm808, %v1174, %v1176
  %v1183 = vsel %vm808, %v1176, %v1178
  %v1189 = vmax.f32 %v1162, %v1179
  %v1190 = vmax.f32 %v1163, %v1180
  %v1191 = vmax.f32 %v1164, %v1181
  %v1192 = vmax.f32 %v1165, %v1182
  %v1193 = vmax.f32 %v1166, %v1183
  %1194 = vrot.lane.b32.xlu0 %v1128, 125
  %v1195 = vpop.permute.xlu0 %1194
  %1196 = vrot.lane.b32.xlu0 %v1129, 125
  %v1197 = vpop.permute.xlu0 %1196
  %1198 = vrot.lane.b32.xlu0 %v1130, 125
  %v1199 = vpop.permute.xlu0 %1198
  %1200 = vrot.lane.b32.xlu0 %v1131, 125
  %v1201 = vpop.permute.xlu0 %1200
  %1202 = vrot.lane.b32.xlu0 %v1132, 125
  %v1203 = vpop.permute.xlu0 %1202
  %1204 = vrot.lane.b32.xlu0 %v1133, 125
  %v1205 = vpop.permute.xlu0 %1204
  %v1206 = vsel %vm862, %v1195, %v1197
  %v1207 = vsel %vm862, %v1197, %v1199
  %v1208 = vsel %vm862, %v1199, %v1201
  %v1209 = vsel %vm862, %v1201, %v1203
  %v1210 = vsel %vm862, %v1203, %v1205
  %v1216 = vmax.f32 %v1189, %v1206
  %v1217 = vmax.f32 %v1190, %v1207
  %v1218 = vmax.f32 %v1191, %v1208
  %v1219 = vmax.f32 %v1192, %v1209
  %v1220 = vmax.f32 %v1193, %v1210
  %1221 = vrot.lane.b32.xlu0 %v1128, 124
  %v1222 = vpop.permute.xlu0 %1221
  %1223 = vrot.lane.b32.xlu0 %v1129, 124
  %v1224 = vpop.permute.xlu0 %1223
  %1225 = vrot.lane.b32.xlu0 %v1130, 124
  %v1226 = vpop.permute.xlu0 %1225
  %1227 = vrot.lane.b32.xlu0 %v1131, 124
  %v1228 = vpop.permute.xlu0 %1227
  %1229 = vrot.lane.b32.xlu0 %v1132, 124
  %v1230 = vpop.permute.xlu0 %1229
  %1231 = vrot.lane.b32.xlu0 %v1133, 124
  %v1232 = vpop.permute.xlu0 %1231
  %v1233 = vsel %vm916, %v1222, %v1224
  %v1234 = vsel %vm916, %v1224, %v1226
  %v1235 = vsel %vm916, %v1226, %v1228
  %v1236 = vsel %vm916, %v1228, %v1230
  %v1237 = vsel %vm916, %v1230, %v1232
  %v1243 = vmax.f32 %v1216, %v1233
  %v1244 = vmax.f32 %v1217, %v1234
  %v1245 = vmax.f32 %v1218, %v1235
  %v1246 = vmax.f32 %v1219, %v1236
  %v1247 = vmax.f32 %v1220, %v1237
  %1248 = vst [vmem:[#allocation6] sm:$0xff] %v1243
  %1249 = vst [vmem:[#allocation6 + $0x8] sm:$0xff] %v1244
  %1250 = vst [vmem:[#allocation6 + $0x10] sm:$0xff] %v1245
  %1251 = vst [vmem:[#allocation6 + $0x18] sm:$0xff] %v1246
  %1252 = vst [vmem:[#allocation6 + $0x20] sm:$0xff] %v1247
  %v1253 = vld [vmem:[%s5] sm:$0x1f]
  %vm1254 = vcmp.gt.f32.partialorder %v1253, 0.5
  %v1255 = vld [vmem:[#allocation6] sm:$0xff]
  %v1256 = vld [vmem:[#allocation6 + $0x8] sm:$0xff]
  %v1257 = vld [vmem:[#allocation6 + $0x10] sm:$0xff]
  %v1258 = vld [vmem:[#allocation6 + $0x18] sm:$0xff]
  %v1259 = vld [vmem:[#allocation6 + $0x20] sm:$0xff]
  %v1260 = vsel %vm1254, 1, 0
  %v1261 = vlaneseq
  %v1262 = vshrl.u32 %v1261, 7
  %v1263 = vsub.s32 0, %v1262
  %v1264 = vrot.slane %v1260, %v1263
  %v1265 = vlaneseq
  %v1266 = vshrl.u32 %v1265, 7
  %v1267 = vsub.s32 1, %v1266
  %v1268 = vrot.slane %v1260, %v1267
  %v1269 = vlaneseq
  %v1270 = vshrl.u32 %v1269, 7
  %v1271 = vsub.s32 2, %v1270
  %v1272 = vrot.slane %v1260, %v1271
  %v1273 = vlaneseq
  %v1274 = vshrl.u32 %v1273, 7
  %v1275 = vsub.s32 3, %v1274
  %v1276 = vrot.slane %v1260, %v1275
  %v1277 = vlaneseq
  %v1278 = vshrl.u32 %v1277, 7
  %v1279 = vsub.s32 4, %v1278
  %v1280 = vrot.slane %v1260, %v1279
  %vm1281 = vcmp.eq.s32.totalorder %v1264, 1
  %vm1282 = vcmp.eq.s32.totalorder %v1268, 1
  %vm1283 = vcmp.eq.s32.totalorder %v1272, 1
  %vm1284 = vcmp.eq.s32.totalorder %v1276, 1
  %vm1285 = vcmp.eq.s32.totalorder %v1280, 1
  %v1286 = vsel %vm1281, %v1255, 0.0
  %v1287 = vsel %vm1282, %v1256, 0.0
  %v1288 = vsel %vm1283, %v1257, 0.0
  %v1289 = vsel %vm1284, %v1258, 0.0
  %v1290 = vsel %vm1285, %v1259, 0.0
  %v1291 = vadd.f32 %v1286, %v1287
  %v1292 = vadd.f32 %v1291, %v1288
  %v1293 = vadd.f32 %v1292, %v1289
  %v1294 = vadd.f32 %v1293, %v1290
  %1295 = vadd.xlane.f32.xlu0 %v1294
  %v1296 = vpop.xlane.xlu0 %1295
  %v1297 = vmul.f32 %v1286, %v1286
  %v1298 = vmul.f32 %v1287, %v1287
  %v1299 = vmul.f32 %v1288, %v1288
  %v1300 = vmul.f32 %v1289, %v1289
  %v1301 = vmul.f32 %v1290, %v1290
  %v1302 = vadd.f32 %v1297, %v1298
  %v1303 = vadd.f32 %v1302, %v1299
  %v1304 = vadd.f32 %v1303, %v1300
  %v1305 = vadd.f32 %v1304, %v1301
  %1306 = vadd.xlane.f32.xlu0 %v1305
  %v1307 = vpop.xlane.xlu0 %1306
  %v1308 = vmul.f32 %v1296, 0.0078125
  %v1309 = vmul.f32 %v1307, 0.0078125
  %v1310 = vmul.f32 %v1308, %v1308
  %v1311 = vsub.f32 %v1309, %v1310
  %v1312 = vld [vmem:[%s3] sm:$0xff]
  %v1313 = vadd.f32 %v1311, 1e-05
  %v1314 = vrsqrt.pop %v1313
  %v1315 = vmul.f32 %v1312, %v1314
  %v1316 = vld [vmem:[%s4] sm:$0xff]
  %v1317 = vmul.f32 %v1308, %v1315
  %v1318 = vsub.f32 %v1316, %v1317
  %v1319 = vld [vmem:[#allocation6] sm:$0xff]
  %v1320 = vld [vmem:[#allocation6 + $0x8] sm:$0xff]
  %1322 = vset.pattern.permute.xlu0 0
  %1323 = vperm.xlu0 %1322, %v1315
  %v1324 = vpop.permute.xlu0 %1323
  %v1326 = vmul.f32 %v1319, %v1324
  %v1327 = vmul.f32 %v1320, %v1324
  %1329 = vset.pattern.permute.xlu0 0
  %1330 = vperm.xlu0 %1329, %v1318
  %v1331 = vpop.permute.xlu0 %1330
  %v1333 = vadd.f32 %v1326, %v1331
  %v1334 = vadd.f32 %v1327, %v1331
  %1335 = vst [vmem:[%s6] sm:$0xff] %v1333
  %vm1336 = vcmask 523264
  %1337 = vst.msk [vmem:[%s6 + $0x8] sm:$0xff] %vm1336, %v1334
  %v1338 = vld [vmem:[#allocation6 + $0x18] sm:$0xff]
  %v1339 = vld [vmem:[#allocation6 + $0x20] sm:$0xff]
  %v1340 = vmul.f32 %v1338, %v1324
  %v1341 = vmul.f32 %v1339, %v1324
  %v1342 = vadd.f32 %v1340, %v1331
  %v1343 = vadd.f32 %v1341, %v1331
  %1346 = vrot.lane.b32.xlu0 %v1342, 64
  %v1347 = vpop.permute.xlu0 %1346
  %1348 = vrot.lane.b32.xlu0 %v1343, 64
  %v1349 = vpop.permute.xlu0 %1348
  %v1350 = vsel %vm1336, %v1347, %v1349
  %vm1353 = vcmask 1048064
  %1354 = vst.msk [vmem:[%s6 + $0x8] sm:$0xff] %vm1353, %v1347
  %1355 = vst [vmem:[%s6 + $0x10] sm:$0xff] %v1350
  // Predicated region
  $region26: #{b_encoder_conv_forward.3} parent=0 // pred_check
    _
  $region27: #{b_encoder_conv_forward.3} parent=0 // pred_check_branch
    %1357 = sbr.rel (0) target = $region29
  $region28: #{b_encoder_conv_forward.3} parent=0 // pred_region
    _
  $region29: #{b_encoder_conv_forward.3} parent=0 // pred_fallthru
    _
  // Predicated region
  $region30: #{b_encoder_conv_forward.3} parent=0 // pred_check
    _
  $region31: #{b_encoder_conv_forward.3} parent=0 // pred_check_branch
    %1359 = sbr.rel (0) target = $region33
  $region32: #{b_encoder_conv_forward.3} parent=0 // pred_region
    _
  $region33: #{b_encoder_conv_forward.3} parent=0 // pred_fallthru
    _

// kernel: b_encoder_conv_forward.2
$region0: #{b_encoder_conv_forward.2}
  #allocation0 [shape = 'u32[]', space=smem, size = 0x4, offset = 0x4, fixed_abs, tag = 'smem constant byte address 0x4 - core index']
  #allocation1 [shape = 'u32[144,128]{1,0:T(1,128)}', space=vmem, size = 0x12000, scoped, tag = 'internal scratch']
  #allocation2 [shape = 'bf16[40,1408]{1,0:T(8,128)(2,1)}', space=vmem, size = 0x1b800, scoped, tag = 'scratch operand']
  #allocation3 [shape = 'f32[40,1408]{1,0:T(8,128)}', space=vmem, size = 0x37000, scoped, tag = 'scratch operand']
  #allocation4 [shape = 'f32[8,1280]{1,0:T(8,128)}', space=vmem, size = 0xa000, scoped, tag = 'scratch operand']
  #allocation5 [shape = 'f32[8,1152]{1,0:T(8,128)}', space=vmem, size = 0x9000, scoped, tag = 'scratch operand']
  #allocation6 [shape = 'f32[8,1024]{1,0:T(8,128)}', space=vmem, size = 0x8000, scoped, tag = 'scratch operand']
  %s0 = inlined_call_operand.vmem [shape: f32[8,1152], index: 0, kind: input, shape index: {}]
  %s1 = inlined_call_operand.vmem [shape: bf16[1,40,40], index: 1, kind: input, shape index: {}]
  %s2 = inlined_call_operand.vmem [shape: f32[1,8,1], index: 2, kind: input, shape index: {}]
  %s3 = inlined_call_operand.vmem [shape: f32[1,8,1], index: 3, kind: input, shape index: {}]
  %s4 = inlined_call_operand.vmem [shape: f32[1,8,1], index: 4, kind: input, shape index: {}]
  %s5 = inlined_call_operand.vmem [shape: f32[1,1024], index: 5, kind: input, shape index: {}]
  %s6 = inlined_call_operand.vmem [shape: f32[8,768], index: 6, kind: output, shape index: {}]
  %s7 = sld [smem:[#allocation0]]
  $region34: #{b_encoder_conv_forward.2} parent=0
    _
  %s9 = ssub.s32 1, %s7
  %s10 = scalar_select 0, %s9, %s7
  // Predicated region
  $region2: #{b_encoder_conv_forward.2} parent=0 // pred_check
    _
  $region3: #{b_encoder_conv_forward.2} parent=0 // pred_check_branch
    %12 = sbr.rel (0) target = $region5
  $region4: #{b_encoder_conv_forward.2} parent=0 // pred_region
    _
  $region5: #{b_encoder_conv_forward.2} parent=0 // pred_fallthru
    _
  // Predicated region
  $region6: #{b_encoder_conv_forward.2} parent=0 // pred_check
    _
  $region7: #{b_encoder_conv_forward.2} parent=0 // pred_check_branch
    %14 = sbr.rel (0) target = $region9
  $region8: #{b_encoder_conv_forward.2} parent=0 // pred_region
    _
  $region9: #{b_encoder_conv_forward.2} parent=0 // pred_fallthru
    _
  // Predicated region
  $region10: #{b_encoder_conv_forward.2} parent=0 // pred_check
    _
  $region11: #{b_encoder_conv_forward.2} parent=0 // pred_check_branch
    %16 = sbr.rel (0) target = $region13
  $region12: #{b_encoder_conv_forward.2} parent=0 // pred_region
    _
  $region13: #{b_encoder_conv_forward.2} parent=0 // pred_fallthru
    _
  // Predicated region
  $region14: #{b_encoder_conv_forward.2} parent=0 // pred_check
    _
  $region15: #{b_encoder_conv_forward.2} parent=0 // pred_check_branch
    %18 = sbr.rel (0) target = $region17
  $region16: #{b_encoder_conv_forward.2} parent=0 // pred_region
    _
  $region17: #{b_encoder_conv_forward.2} parent=0 // pred_fallthru
    _
  // Predicated region
  $region18: #{b_encoder_conv_forward.2} parent=0 // pred_check
    _
  $region19: #{b_encoder_conv_forward.2} parent=0 // pred_check_branch
    %20 = sbr.rel (0) target = $region21
  $region20: #{b_encoder_conv_forward.2} parent=0 // pred_region
    _
  $region21: #{b_encoder_conv_forward.2} parent=0 // pred_fallthru
    _
  // Predicated region
  $region22: #{b_encoder_conv_forward.2} parent=0 // pred_check
    _
  $region23: #{b_encoder_conv_forward.2} parent=0 // pred_check_branch
    %22 = sbr.rel (0) target = $region25
  $region24: #{b_encoder_conv_forward.2} parent=0 // pred_region
    _
  $region25: #{b_encoder_conv_forward.2} parent=0 // pred_fallthru
    _
  %v24 = vld [vmem:[%s0] sm:$0xff]
  %v25 = vld [vmem:[%s0 + $0x8] sm:$0xff]
  %v26 = vld [vmem:[%s0 + $0x10] sm:$0xff]
  %v27 = vld [vmem:[%s0 + $0x18] sm:$0xff]
  %v28 = vld [vmem:[%s0 + $0x20] sm:$0xff]
  %v29 = vld [vmem:[%s0 + $0x28] sm:$0xff]
  %v30 = vld [vmem:[%s0 + $0x30] sm:$0xff]
  %v31 = vld [vmem:[%s0 + $0x38] sm:$0xff]
  %v32 = vld [vmem:[%s0 + $0x40] sm:$0xff]
  %v33 = vpack.c.bf16 %v24, %v24
  %v34 = vpack.c.bf16 %v25, %v25
  %v35 = vpack.c.bf16 %v26, %v26
  %v36 = vpack.c.bf16 %v27, %v27
  %v37 = vpack.c.bf16 %v28, %v28
  %v38 = vpack.c.bf16 %v29, %v29
  %v39 = vpack.c.bf16 %v30, %v30
  %v40 = vpack.c.bf16 %v31, %v31
  %v41 = vpack.c.bf16 %v32, %v32
  %v51 = vunpack.c.l.b16 %v33
  %v52 = vunpack.c.l.b16 %v34
  %v53 = vunpack.c.l.b16 %v35
  %v54 = vunpack.c.l.b16 %v36
  %v55 = vunpack.c.l.b16 %v37
  %v56 = vunpack.c.l.b16 %v38
  %v57 = vunpack.c.l.b16 %v39
  %v58 = vunpack.c.l.b16 %v40
  %v59 = vunpack.c.l.b16 %v41
  %v60 = vpack.c.b16 %v52, %v51
  %v61 = vpack.c.b16 %v54, %v53
  %v62 = vpack.c.b16 %v56, %v55
  %v63 = vpack.c.b16 %v58, %v57
  %v64 = vpack.c.b16 %v59, %v59
  %70 = vst [vmem:[#allocation2] sm:$0xff] %v60
  %71 = vst [vmem:[#allocation2 + $0x8] sm:$0xff] %v61
  %72 = vst [vmem:[#allocation2 + $0x10] sm:$0xff] %v62
  %73 = vst [vmem:[#allocation2 + $0x18] sm:$0xff] %v63
  %74 = vst [vmem:[#allocation2 + $0x20] sm:$0xf] %v64
  %v75 = vld [vmem:[%s0] sm:$0xff]
  %v76 = vld [vmem:[%s0 + $0x8] sm:$0xff]
  %v77 = vld [vmem:[%s0 + $0x10] sm:$0xff]
  %v78 = vld [vmem:[%s0 + $0x18] sm:$0xff]
  %v79 = vld [vmem:[%s0 + $0x20] sm:$0xff]
  %v80 = vld [vmem:[%s0 + $0x28] sm:$0xff]
  %v81 = vld [vmem:[%s0 + $0x30] sm:$0xff]
  %v82 = vld [vmem:[%s0 + $0x38] sm:$0xff]
  %v83 = vld [vmem:[%s0 + $0x40] sm:$0xff]
  %v84 = vpack.c.bf16 %v75, %v75
  %v85 = vpack.c.bf16 %v76, %v76
  %v86 = vpack.c.bf16 %v77, %v77
  %v87 = vpack.c.bf16 %v78, %v78
  %v88 = vpack.c.bf16 %v79, %v79
  %v89 = vpack.c.bf16 %v80, %v80
  %v90 = vpack.c.bf16 %v81, %v81
  %v91 = vpack.c.bf16 %v82, %v82
  %v92 = vpack.c.bf16 %v83, %v83
  %v102 = vunpack.c.l.b16 %v84
  %v103 = vunpack.c.l.b16 %v85
  %v104 = vunpack.c.l.b16 %v86
  %v105 = vunpack.c.l.b16 %v87
  %v106 = vunpack.c.l.b16 %v88
  %v107 = vunpack.c.l.b16 %v89
  %v108 = vunpack.c.l.b16 %v90
  %v109 = vunpack.c.l.b16 %v91
  %v110 = vunpack.c.l.b16 %v92
  %v111 = vpack.c.b16 %v103, %v102
  %v112 = vpack.c.b16 %v105, %v104
  %v113 = vpack.c.b16 %v107, %v106
  %v114 = vpack.c.b16 %v109, %v108
  %v115 = vpack.c.b16 %v110, %v110
  %116 = vrot.lane.b32.xlu0 %v111, 104
  %v117 = vpop.permute.xlu0 %116
  %118 = vrot.lane.b32.xlu0 %v112, 104
  %v119 = vpop.permute.xlu0 %118
  %120 = vrot.lane.b32.xlu0 %v113, 104
  %v121 = vpop.permute.xlu0 %120
  %122 = vrot.lane.b32.xlu0 %v114, 104
  %v123 = vpop.permute.xlu0 %122
  %124 = vrot.lane.b32.xlu0 %v115, 104
  %v125 = vpop.permute.xlu0 %124
  %v126 = vrot.slane %v117, 4
  %v127 = vrot.slane %v119, 4
  %v128 = vrot.slane %v121, 4
  %v129 = vrot.slane %v123, 4
  %v130 = vrot.slane %v125, 4
  %vm131 = vcmask 1043456
  %v132 = vsel %vm131, %v126, %v127
  %vm133 = vcmask 850944
  %v134 = vsel %vm133, %v117, %v132
  %v135 = vsel %vm131, %v127, %v128
  %v136 = vsel %vm133, %v119, %v135
  %v137 = vsel %vm131, %v128, %v129
  %v138 = vsel %vm133, %v121, %v137
  %v139 = vsel %vm131, %v129, %v130
  %v140 = vsel %vm133, %v123, %v139
  %146 = vst [vmem:[#allocation2 + $0x2c] sm:$0xff] %v134
  %147 = vst [vmem:[#allocation2 + $0x34] sm:$0xff] %v136
  %148 = vst [vmem:[#allocation2 + $0x3c] sm:$0xff] %v138
  %149 = vst [vmem:[#allocation2 + $0x44] sm:$0xff] %v140
  %vm150 = vcmask 846848
  %151 = vst.msk [vmem:[#allocation2 + $0x4c] sm:$0xf] %vm150, %v125
  %v152 = vld [vmem:[%s0] sm:$0xff]
  %v153 = vld [vmem:[%s0 + $0x8] sm:$0xff]
  %v154 = vld [vmem:[%s0 + $0x10] sm:$0xff]
  %v155 = vld [vmem:[%s0 + $0x18] sm:$0xff]
  %v156 = vld [vmem:[%s0 + $0x20] sm:$0xff]
  %v157 = vld [vmem:[%s0 + $0x28] sm:$0xff]
  %v158 = vld [vmem:[%s0 + $0x30] sm:$0xff]
  %v159 = vld [vmem:[%s0 + $0x38] sm:$0xff]
  %v160 = vld [vmem:[%s0 + $0x40] sm:$0xff]
  %v161 = vpack.c.bf16 %v152, %v152
  %v162 = vpack.c.bf16 %v153, %v153
  %v163 = vpack.c.bf16 %v154, %v154
  %v164 = vpack.c.bf16 %v155, %v155
  %v165 = vpack.c.bf16 %v156, %v156
  %v166 = vpack.c.bf16 %v157, %v157
  %v167 = vpack.c.bf16 %v158, %v158
  %v168 = vpack.c.bf16 %v159, %v159
  %v169 = vpack.c.bf16 %v160, %v160
  %v179 = vunpack.c.l.b16 %v161
  %v180 = vunpack.c.l.b16 %v162
  %v181 = vunpack.c.l.b16 %v163
  %v182 = vunpack.c.l.b16 %v164
  %v183 = vunpack.c.l.b16 %v165
  %v184 = vunpack.c.l.b16 %v166
  %v185 = vunpack.c.l.b16 %v167
  %v186 = vunpack.c.l.b16 %v168
  %v187 = vunpack.c.l.b16 %v169
  %v188 = vpack.c.b16 %v180, %v179
  %v189 = vpack.c.b16 %v182, %v181
  %v190 = vpack.c.b16 %v184, %v183
  %v191 = vpack.c.b16 %v186, %v185
  %v192 = vpack.c.b16 %v187, %v187
  %193 = vrot.lane.b32.xlu0 %v188, 80
  %v194 = vpop.permute.xlu0 %193
  %195 = vrot.lane.b32.xlu0 %v189, 80
  %v196 = vpop.permute.xlu0 %195
  %197 = vrot.lane.b32.xlu0 %v190, 80
  %v198 = vpop.permute.xlu0 %197
  %199 = vrot.lane.b32.xlu0 %v191, 80
  %v200 = vpop.permute.xlu0 %199
  %201 = vrot.lane.b32.xlu0 %v192, 80
  %v202 = vpop.permute.xlu0 %201
  %v203 = vrot.slane %v194, 4
  %v204 = vrot.slane %v196, 4
  %v205 = vrot.slane %v198, 4
  %v206 = vrot.slane %v200, 4
  %v207 = vrot.slane %v202, 4
  %v208 = vsel %vm131, %v203, %v204
  %vm209 = vcmask 654336
  %v210 = vsel %vm209, %v194, %v208
  %v211 = vsel %vm131, %v204, %v205
  %v212 = vsel %vm209, %v196, %v211
  %v213 = vsel %vm131, %v205, %v206
  %v214 = vsel %vm209, %v198, %v213
  %v215 = vsel %vm131, %v206, %v207
  %v216 = vsel %vm209, %v200, %v215
  %222 = vst [vmem:[#allocation2 + $0x58] sm:$0xff] %v210
  %223 = vst [vmem:[#allocation2 + $0x60] sm:$0xff] %v212
  %224 = vst [vmem:[#allocation2 + $0x68] sm:$0xff] %v214
  %225 = vst [vmem:[#allocation2 + $0x70] sm:$0xff] %v216
  %vm226 = vcmask 650240
  %227 = vst.msk [vmem:[#allocation2 + $0x78] sm:$0xf] %vm226, %v202
  %v228 = vld [vmem:[%s0] sm:$0xff]
  %v229 = vld [vmem:[%s0 + $0x8] sm:$0xff]
  %v230 = vld [vmem:[%s0 + $0x10] sm:$0xff]
  %v231 = vld [vmem:[%s0 + $0x18] sm:$0xff]
  %v232 = vld [vmem:[%s0 + $0x20] sm:$0xff]
  %v233 = vld [vmem:[%s0 + $0x28] sm:$0xff]
  %v234 = vld [vmem:[%s0 + $0x30] sm:$0xff]
  %v235 = vld [vmem:[%s0 + $0x38] sm:$0xff]
  %v236 = vld [vmem:[%s0 + $0x40] sm:$0xff]
  %v237 = vpack.c.bf16 %v228, %v228
  %v238 = vpack.c.bf16 %v229, %v229
  %v239 = vpack.c.bf16 %v230, %v230
  %v240 = vpack.c.bf16 %v231, %v231
  %v241 = vpack.c.bf16 %v232, %v232
  %v242 = vpack.c.bf16 %v233, %v233
  %v243 = vpack.c.bf16 %v234, %v234
  %v244 = vpack.c.bf16 %v235, %v235
  %v245 = vpack.c.bf16 %v236, %v236
  %v255 = vunpack.c.l.b16 %v237
  %v256 = vunpack.c.l.b16 %v238
  %v257 = vunpack.c.l.b16 %v239
  %v258 = vunpack.c.l.b16 %v240
  %v259 = vunpack.c.l.b16 %v241
  %v260 = vunpack.c.l.b16 %v242
  %v261 = vunpack.c.l.b16 %v243
  %v262 = vunpack.c.l.b16 %v244
  %v263 = vunpack.c.l.b16 %v245
  %v264 = vpack.c.b16 %v256, %v255
  %v265 = vpack.c.b16 %v258, %v257
  %v266 = vpack.c.b16 %v260, %v259
  %v267 = vpack.c.b16 %v262, %v261
  %v268 = vpack.c.b16 %v263, %v263
  %269 = vrot.lane.b32.xlu0 %v264, 56
  %v270 = vpop.permute.xlu0 %269
  %271 = vrot.lane.b32.xlu0 %v265, 56
  %v272 = vpop.permute.xlu0 %271
  %273 = vrot.lane.b32.xlu0 %v266, 56
  %v274 = vpop.permute.xlu0 %273
  %275 = vrot.lane.b32.xlu0 %v267, 56
  %v276 = vpop.permute.xlu0 %275
  %277 = vrot.lane.b32.xlu0 %v268, 56
  %v278 = vpop.permute.xlu0 %277
  %v279 = vrot.slane %v270, 4
  %v280 = vrot.slane %v272, 4
  %v281 = vrot.slane %v274, 4
  %v282 = vrot.slane %v276, 4
  %v283 = vrot.slane %v278, 4
  %v284 = vsel %vm131, %v279, %v280
  %vm285 = vcmask 457728
  %v286 = vsel %vm285, %v270, %v284
  %v287 = vsel %vm131, %v280, %v281
  %v288 = vsel %vm285, %v272, %v287
  %v289 = vsel %vm131, %v281, %v282
  %v290 = vsel %vm285, %v274, %v289
  %v291 = vsel %vm131, %v282, %v283
  %v292 = vsel %vm285, %v276, %v291
  %298 = vst [vmem:[#allocation2 + $0x84] sm:$0xff] %v286
  %299 = vst [vmem:[#allocation2 + $0x8c] sm:$0xff] %v288
  %300 = vst [vmem:[#allocation2 + $0x94] sm:$0xff] %v290
  %301 = vst [vmem:[#allocation2 + $0x9c] sm:$0xff] %v292
  %vm302 = vcmask 453632
  %303 = vst.msk [vmem:[#allocation2 + $0xa4] sm:$0xf] %vm302, %v278
  %v304 = vld [vmem:[%s0] sm:$0xff]
  %v305 = vld [vmem:[%s0 + $0x8] sm:$0xff]
  %v306 = vld [vmem:[%s0 + $0x10] sm:$0xff]
  %v307 = vld [vmem:[%s0 + $0x18] sm:$0xff]
  %v308 = vld [vmem:[%s0 + $0x20] sm:$0xff]
  %v309 = vld [vmem:[%s0 + $0x28] sm:$0xff]
  %v310 = vld [vmem:[%s0 + $0x30] sm:$0xff]
  %v311 = vld [vmem:[%s0 + $0x38] sm:$0xff]
  %v312 = vld [vmem:[%s0 + $0x40] sm:$0xff]
  %v313 = vpack.c.bf16 %v304, %v304
  %v314 = vpack.c.bf16 %v305, %v305
  %v315 = vpack.c.bf16 %v306, %v306
  %v316 = vpack.c.bf16 %v307, %v307
  %v317 = vpack.c.bf16 %v308, %v308
  %v318 = vpack.c.bf16 %v309, %v309
  %v319 = vpack.c.bf16 %v310, %v310
  %v320 = vpack.c.bf16 %v311, %v311
  %v321 = vpack.c.bf16 %v312, %v312
  %v331 = vunpack.c.l.b16 %v313
  %v332 = vunpack.c.l.b16 %v314
  %v333 = vunpack.c.l.b16 %v315
  %v334 = vunpack.c.l.b16 %v316
  %v335 = vunpack.c.l.b16 %v317
  %v336 = vunpack.c.l.b16 %v318
  %v337 = vunpack.c.l.b16 %v319
  %v338 = vunpack.c.l.b16 %v320
  %v339 = vunpack.c.l.b16 %v321
  %v340 = vpack.c.b16 %v332, %v331
  %v341 = vpack.c.b16 %v334, %v333
  %v342 = vpack.c.b16 %v336, %v335
  %v343 = vpack.c.b16 %v338, %v337
  %v344 = vpack.c.b16 %v339, %v339
  %345 = vrot.lane.b32.xlu0 %v340, 32
  %v346 = vpop.permute.xlu0 %345
  %347 = vrot.lane.b32.xlu0 %v341, 32
  %v348 = vpop.permute.xlu0 %347
  %349 = vrot.lane.b32.xlu0 %v342, 32
  %v350 = vpop.permute.xlu0 %349
  %351 = vrot.lane.b32.xlu0 %v343, 32
  %v352 = vpop.permute.xlu0 %351
  %353 = vrot.lane.b32.xlu0 %v344, 32
  %v354 = vpop.permute.xlu0 %353
  %v355 = vrot.slane %v346, 4
  %v356 = vrot.slane %v348, 4
  %v357 = vrot.slane %v350, 4
  %v358 = vrot.slane %v352, 4
  %v359 = vrot.slane %v354, 4
  %v360 = vsel %vm131, %v355, %v356
  %vm361 = vcmask 261120
  %v362 = vsel %vm361, %v346, %v360
  %v363 = vsel %vm131, %v356, %v357
  %v364 = vsel %vm361, %v348, %v363
  %v365 = vsel %vm131, %v357, %v358
  %v366 = vsel %vm361, %v350, %v365
  %v367 = vsel %vm131, %v358, %v359
  %v368 = vsel %vm361, %v352, %v367
  %374 = vst [vmem:[#allocation2 + $0xb0] sm:$0xff] %v362
  %375 = vst [vmem:[#allocation2 + $0xb8] sm:$0xff] %v364
  %376 = vst [vmem:[#allocation2 + $0xc0] sm:$0xff] %v366
  %377 = vst [vmem:[#allocation2 + $0xc8] sm:$0xff] %v368
  %vm378 = vcmask 257024
  %379 = vst.msk [vmem:[#allocation2 + $0xd0] sm:$0xf] %vm378, %v354
  %v380 = vld [vmem:[%s1] sm:$0xf]
  %v381 = vld [vmem:[%s1 + $0x4] sm:$0xf]
  %v382 = vld [vmem:[%s1 + $0x8] sm:$0xf]
  %v383 = vld [vmem:[%s1 + $0xc] sm:$0xf]
  %v384 = vld [vmem:[%s1 + $0x10] sm:$0xf]
  %v385 = vld [vmem:[#allocation2] sm:$0xff]
  %v386 = vld [vmem:[#allocation2 + $0x8] sm:$0xff]
  %v387 = vld [vmem:[#allocation2 + $0x10] sm:$0xff]
  %v388 = vld [vmem:[#allocation2 + $0x18] sm:$0xff]
  %v389 = vld [vmem:[#allocation2 + $0x20] sm:$0xff]
  %v390 = vld [vmem:[#allocation2 + $0x28] sm:$0xf]
  %v391 = vld [vmem:[#allocation2 + $0x2c] sm:$0xff]
  %v392 = vld [vmem:[#allocation2 + $0x34] sm:$0xff]
  %v393 = vld [vmem:[#allocation2 + $0x3c] sm:$0xff]
  %v394 = vld [vmem:[#allocation2 + $0x44] sm:$0xff]
  %v395 = vld [vmem:[#allocation2 + $0x4c] sm:$0xff]
  %v396 = vld [vmem:[#allocation2 + $0x54] sm:$0xf]
  %v397 = vld [vmem:[#allocation2 + $0x58] sm:$0xff]
  %v398 = vld [vmem:[#allocation2 + $0x60] sm:$0xff]
  %v399 = vld [vmem:[#allocation2 + $0x68] sm:$0xff]
  %v400 = vld [vmem:[#allocation2 + $0x70] sm:$0xff]
  %v401 = vld [vmem:[#allocation2 + $0x78] sm:$0xff]
  %v402 = vld [vmem:[#allocation2 + $0x80] sm:$0xf]
  %v403 = vld [vmem:[#allocation2 + $0x84] sm:$0xff]
  %v404 = vld [vmem:[#allocation2 + $0x8c] sm:$0xff]
  %v405 = vld [vmem:[#allocation2 + $0x94] sm:$0xff]
  %v406 = vld [vmem:[#allocation2 + $0x9c] sm:$0xff]
  %v407 = vld [vmem:[#allocation2 + $0xa4] sm:$0xff]
  %v408 = vld [vmem:[#allocation2 + $0xac] sm:$0xf]
  %v409 = vld [vmem:[#allocation2 + $0xb0] sm:$0xff]
  %v410 = vld [vmem:[#allocation2 + $0xb8] sm:$0xff]
  %v411 = vld [vmem:[#allocation2 + $0xc0] sm:$0xff]
  %v412 = vld [vmem:[#allocation2 + $0xc8] sm:$0xff]
  %v413 = vld [vmem:[#allocation2 + $0xd0] sm:$0xff]
  %v414 = vld [vmem:[#allocation2 + $0xd8] sm:$0xf]
  %v420 = vunpack.c.l.b16 %v380
  %v421 = vunpack.c.l.b16 %v381
  %v422 = vunpack.c.l.b16 %v382
  %v423 = vunpack.c.l.b16 %v383
  %v424 = vunpack.c.l.b16 %v384
  %v425 = vpack.c.b16 %v421, %v420
  %v426 = vpack.c.b16 %v423, %v422
  %v427 = vpack.c.b16 %v424, %v424
  %v458 = vunpack.c.l.b16 %v385
  %v459 = vunpack.c.h.b16 %v385
  %v460 = vunpack.c.l.b16 %v386
  %v461 = vunpack.c.h.b16 %v386
  %v462 = vunpack.c.l.b16 %v387
  %v463 = vunpack.c.h.b16 %v387
  %v464 = vunpack.c.l.b16 %v388
  %v465 = vunpack.c.h.b16 %v388
  %v466 = vunpack.c.l.b16 %v389
  %v467 = vunpack.c.h.b16 %v389
  %v468 = vunpack.c.l.b16 %v390
  %v469 = vunpack.c.l.b16 %v391
  %v470 = vunpack.c.h.b16 %v391
  %v471 = vunpack.c.l.b16 %v392
  %v472 = vunpack.c.h.b16 %v392
  %v473 = vunpack.c.l.b16 %v393
  %v474 = vunpack.c.h.b16 %v393
  %v475 = vunpack.c.l.b16 %v394
  %v476 = vunpack.c.h.b16 %v394
  %v477 = vunpack.c.l.b16 %v395
  %v478 = vunpack.c.h.b16 %v395
  %v479 = vunpack.c.l.b16 %v396
  %v480 = vunpack.c.l.b16 %v397
  %v481 = vunpack.c.h.b16 %v397
  %v482 = vunpack.c.l.b16 %v398
  %v483 = vunpack.c.h.b16 %v398
  %v484 = vunpack.c.l.b16 %v399
  %v485 = vunpack.c.h.b16 %v399
  %v486 = vunpack.c.l.b16 %v400
  %v487 = vunpack.c.h.b16 %v400
  %v488 = vunpack.c.l.b16 %v401
  %v489 = vunpack.c.h.b16 %v401
  %v490 = vunpack.c.l.b16 %v402
  %v491 = vunpack.c.l.b16 %v403
  %v492 = vunpack.c.h.b16 %v403
  %v493 = vunpack.c.l.b16 %v404
  %v494 = vunpack.c.h.b16 %v404
  %v495 = vunpack.c.l.b16 %v405
  %v496 = vunpack.c.h.b16 %v405
  %v497 = vunpack.c.l.b16 %v406
  %v498 = vunpack.c.h.b16 %v406
  %v499 = vunpack.c.l.b16 %v407
  %v500 = vunpack.c.h.b16 %v407
  %v501 = vunpack.c.l.b16 %v408
  %v502 = vunpack.c.l.b16 %v409
  %v503 = vunpack.c.h.b16 %v409
  %v504 = vunpack.c.l.b16 %v410
  %v505 = vunpack.c.h.b16 %v410
  %v506 = vunpack.c.l.b16 %v411
  %v507 = vunpack.c.h.b16 %v411
  %v508 = vunpack.c.l.b16 %v412
  %v509 = vunpack.c.h.b16 %v412
  %v510 = vunpack.c.l.b16 %v413
  %v511 = vunpack.c.h.b16 %v413
  %v512 = vunpack.c.l.b16 %v414
  %v513 = vpack.c.b16 %v469, %v458
  %v514 = vpack.c.b16 %v470, %v459
  %v515 = vpack.c.b16 %v471, %v460
  %v516 = vpack.c.b16 %v472, %v461
  %v517 = vpack.c.b16 %v473, %v462
  %v518 = vpack.c.b16 %v474, %v463
  %v519 = vpack.c.b16 %v475, %v464
  %v520 = vpack.c.b16 %v476, %v465
  %v521 = vpack.c.b16 %v477, %v466
  %v522 = vpack.c.b16 %v478, %v467
  %v523 = vpack.c.b16 %v479, %v468
  %v524 = vpack.c.b16 %v491, %v480
  %v525 = vpack.c.b16 %v492, %v481
  %v526 = vpack.c.b16 %v493, %v482
  %v527 = vpack.c.b16 %v494, %v483
  %v528 = vpack.c.b16 %v495, %v484
  %v529 = vpack.c.b16 %v496, %v485
  %v530 = vpack.c.b16 %v497, %v486
  %v531 = vpack.c.b16 %v498, %v487
  %v532 = vpack.c.b16 %v499, %v488
  %v533 = vpack.c.b16 %v500, %v489
  %v534 = vpack.c.b16 %v501, %v490
  %v535 = vpack.c.b16 %v502, %v502
  %v536 = vpack.c.b16 %v503, %v503
  %v537 = vpack.c.b16 %v504, %v504
  %v538 = vpack.c.b16 %v505, %v505
  %v539 = vpack.c.b16 %v506, %v506
  %v540 = vpack.c.b16 %v507, %v507
  %v541 = vpack.c.b16 %v508, %v508
  %v542 = vpack.c.b16 %v509, %v509
  %v543 = vpack.c.b16 %v510, %v510
  %v544 = vpack.c.b16 %v511, %v511
  %v545 = vpack.c.b16 %v512, %v512
  %vm568 = vcmask 326656
  %v570 = vsel %vm568, %v425, 0
  %v573 = vsel %vm568, %v426, 0
  %v576 = vsel %vm568, %v427, 0
  %vm578 = vcmask 1043456
  %v580 = vsel %vm578, %v535, 0
  %v583 = vsel %vm578, %v536, 0
  %v586 = vsel %vm578, %v537, 0
  %v589 = vsel %vm578, %v538, 0
  %v592 = vsel %vm578, %v539, 0
  %v595 = vsel %vm578, %v540, 0
  %v598 = vsel %vm578, %v541, 0
  %v601 = vsel %vm578, %v542, 0
  %v604 = vsel %vm578, %v543, 0
  %v607 = vsel %vm578, %v544, 0
  %v610 = vsel %vm578, %v545, 0
  %612 = vmatprep.subr.bf16.mxu0 %v514
  %613 = vmatpush1.bf16.msra.mxu0 %v513
  %614 = vmatprep.subr.bf16.mxu0 %v525
  %615 = vmatpush1.bf16.msra.mxu0 %v524
  %616 = vmatprep.subr.bf16.mxu0 %v583
  %617 = vmatpush1.bf16.msra.mxu0 %v580
  %618 = vmatprep.subr.bf16.mxu0 0
  %619 = vmatpush1.bf16.msra.mxu0 0
  %620 = vmatprep.subr.bf16.mxu0 0
  %621 = vmatpush1.bf16.msra.mxu0 0
  %622 = vmatprep.subr.bf16.mxu0 0
  %623 = vmatpush1.bf16.msra.mxu0 0
  %624 = vmatprep.subr.bf16.mxu0 0
  %625 = vmatpush1.bf16.msra.mxu0 0
  %626 = vmatprep.subr.bf16.mxu0 0
  %627 = vmatpush1.bf16.msra.mxu0 0
  %628 = vmatprep.subr.bf16.mxu0 0
  %629 = vmatpush1.bf16.msra.mxu0 0
  %630 = vmatprep.subr.bf16.mxu0 0
  %631 = vmatpush1.bf16.msra.mxu0 0
  %632 = vmatprep.subr.bf16.mxu0 0
  %633 = vmatpush1.bf16.msra.mxu0 0
  %634 = vmatprep.subr.bf16.mxu0 0
  %635 = vmatpush1.bf16.msra.mxu0 0
  %636 = vmatprep.subr.bf16.mxu0 0
  %637 = vmatpush1.bf16.msra.mxu0 0
  %638 = vmatprep.subr.bf16.mxu0 0
  %639 = vmatpush1.bf16.msra.mxu0 0
  %640 = vmatprep.subr.bf16.mxu0 0
  %641 = vmatpush1.bf16.msra.mxu0 0
  %642 = vmatprep.subr.bf16.mxu0 0
  %643 = vmatpush1.bf16.msra.mxu0 0
  %644 = vmatprep.mubr.bf16.mxu0 0
  %645 = vmatmul.mubr.bf16.gmra.mrb[0].mxu0 %v570
  %v646 = vpop.f32.mrb[0].mxu0
  %v647 = vadd.f32 0.0, %v646
  %v648 = vpop.f32.mrb[0].mxu0
  %v649 = vadd.f32 0.0, %v648
  %v650 = vpop.f32.mrb[0].mxu0
  %v651 = vadd.f32 0.0, %v650
  %v652 = vpop.f32.mrb[0].mxu0
  %v653 = vadd.f32 0.0, %v652
  %654 = vmatprep.mubr.bf16.mxu0 0
  %655 = vmatmul.mubr.bf16.gmra.mrb[0].mxu0 %v573
  %v656 = vpop.f32.mrb[0].mxu0
  %v657 = vadd.f32 0.0, %v656
  %v658 = vpop.f32.mrb[0].mxu0
  %v659 = vadd.f32 0.0, %v658
  %v660 = vpop.f32.mrb[0].mxu0
  %v661 = vadd.f32 0.0, %v660
  %v662 = vpop.f32.mrb[0].mxu0
  %v663 = vadd.f32 0.0, %v662
  %664 = vmatprep.mubr.bf16.mxu0 0
  %665 = vmatmul.mubr.bf16.gmra.mrb[0].mxu0 %v576
  %v666 = vpop.f32.mrb[0].mxu0
  %v667 = vadd.f32 0.0, %v666
  %v668 = vpop.f32.mrb[0].mxu0
  %v669 = vadd.f32 0.0, %v668
  %v670 = vpop.f32.mrb[0].mxu0
  %v671 = vpop.f32.mrb[0].mxu0
  %672 = vdwg.mxu0
  %673 = vmatprep.subr.bf16.mxu0 %v516
  %674 = vmatpush1.bf16.msra.mxu0 %v515
  %675 = vmatprep.subr.bf16.mxu0 %v527
  %676 = vmatpush1.bf16.msra.mxu0 %v526
  %677 = vmatprep.subr.bf16.mxu0 %v589
  %678 = vmatpush1.bf16.msra.mxu0 %v586
  %679 = vmatprep.subr.bf16.mxu0 0
  %680 = vmatpush1.bf16.msra.mxu0 0
  %681 = vmatprep.subr.bf16.mxu0 0
  %682 = vmatpush1.bf16.msra.mxu0 0
  %683 = vmatprep.subr.bf16.mxu0 0
  %684 = vmatpush1.bf16.msra.mxu0 0
  %685 = vmatprep.subr.bf16.mxu0 0
  %686 = vmatpush1.bf16.msra.mxu0 0
  %687 = vmatprep.subr.bf16.mxu0 0
  %688 = vmatpush1.bf16.msra.mxu0 0
  %689 = vmatprep.subr.bf16.mxu0 0
  %690 = vmatpush1.bf16.msra.mxu0 0
  %691 = vmatprep.subr.bf16.mxu0 0
  %692 = vmatpush1.bf16.msra.mxu0 0
  %693 = vmatprep.subr.bf16.mxu0 0
  %694 = vmatpush1.bf16.msra.mxu0 0
  %695 = vmatprep.subr.bf16.mxu0 0
  %696 = vmatpush1.bf16.msra.mxu0 0
  %697 = vmatprep.subr.bf16.mxu0 0
  %698 = vmatpush1.bf16.msra.mxu0 0
  %699 = vmatprep.subr.bf16.mxu0 0
  %700 = vmatpush1.bf16.msra.mxu0 0
  %701 = vmatprep.subr.bf16.mxu0 0
  %702 = vmatpush1.bf16.msra.mxu0 0
  %703 = vmatprep.subr.bf16.mxu0 0
  %704 = vmatpush1.bf16.msra.mxu0 0
  %705 = vmatprep.mubr.bf16.mxu0 0
  %706 = vmatmul.mubr.bf16.gmra.mrb[0].mxu0 %v570
  %v707 = vpop.f32.mrb[0].mxu0
  %v708 = vadd.f32 0.0, %v707
  %v709 = vpop.f32.mrb[0].mxu0
  %v710 = vadd.f32 0.0, %v709
  %v711 = vpop.f32.mrb[0].mxu0
  %v712 = vadd.f32 0.0, %v711
  %v713 = vpop.f32.mrb[0].mxu0
  %v714 = vadd.f32 0.0, %v713
  %715 = vmatprep.mubr.bf16.mxu0 0
  %716 = vmatmul.mubr.bf16.gmra.mrb[0].mxu0 %v573
  %v717 = vpop.f32.mrb[0].mxu0
  %v718 = vadd.f32 0.0, %v717
  %v719 = vpop.f32.mrb[0].mxu0
  %v720 = vadd.f32 0.0, %v719
  %v721 = vpop.f32.mrb[0].mxu0
  %v722 = vadd.f32 0.0, %v721
  %v723 = vpop.f32.mrb[0].mxu0
  %v724 = vadd.f32 0.0, %v723
  %725 = vmatprep.mubr.bf16.mxu0 0
  %726 = vmatmul.mubr.bf16.gmra.mrb[0].mxu0 %v576
  %v727 = vpop.f32.mrb[0].mxu0
  %v728 = vadd.f32 0.0, %v727
  %v729 = vpop.f32.mrb[0].mxu0
  %v730 = vadd.f32 0.0, %v729
  %v731 = vpop.f32.mrb[0].mxu0
  %v732 = vpop.f32.mrb[0].mxu0
  %733 = vdwg.mxu0
  %734 = vmatprep.subr.bf16.mxu0 %v518
  %735 = vmatpush1.bf16.msra.mxu0 %v517
  %736 = vmatprep.subr.bf16.mxu0 %v529
  %737 = vmatpush1.bf16.msra.mxu0 %v528
  %738 = vmatprep.subr.bf16.mxu0 %v595
  %739 = vmatpush1.bf16.msra.mxu0 %v592
  %740 = vmatprep.subr.bf16.mxu0 0
  %741 = vmatpush1.bf16.msra.mxu0 0
  %742 = vmatprep.subr.bf16.mxu0 0
  %743 = vmatpush1.bf16.msra.mxu0 0
  %744 = vmatprep.subr.bf16.mxu0 0
  %745 = vmatpush1.bf16.msra.mxu0 0
  %746 = vmatprep.subr.bf16.mxu0 0
  %747 = vmatpush1.bf16.msra.mxu0 0
  %748 = vmatprep.subr.bf16.mxu0 0
  %749 = vmatpush1.bf16.msra.mxu0 0
  %750 = vmatprep.subr.bf16.mxu0 0
  %751 = vmatpush1.bf16.msra.mxu0 0
  %752 = vmatprep.subr.bf16.mxu0 0
  %753 = vmatpush1.bf16.msra.mxu0 0
  %754 = vmatprep.subr.bf16.mxu0 0
  %755 = vmatpush1.bf16.msra.mxu0 0
  %756 = vmatprep.subr.bf16.mxu0 0
  %757 = vmatpush1.bf16.msra.mxu0 0
  %758 = vmatprep.subr.bf16.mxu0 0
  %759 = vmatpush1.bf16.msra.mxu0 0
  %760 = vmatprep.subr.bf16.mxu0 0
  %761 = vmatpush1.bf16.msra.mxu0 0
  %762 = vmatprep.subr.bf16.mxu0 0
  %763 = vmatpush1.bf16.msra.mxu0 0
  %764 = vmatprep.subr.bf16.mxu0 0
  %765 = vmatpush1.bf16.msra.mxu0 0
  %766 = vmatprep.mubr.bf16.mxu0 0
  %767 = vmatmul.mubr.bf16.gmra.mrb[0].mxu0 %v570
  %v768 = vpop.f32.mrb[0].mxu0
  %v769 = vadd.f32 0.0, %v768
  %v770 = vpop.f32.mrb[0].mxu0
  %v771 = vadd.f32 0.0, %v770
  %v772 = vpop.f32.mrb[0].mxu0
  %v773 = vadd.f32 0.0, %v772
  %v774 = vpop.f32.mrb[0].mxu0
  %v775 = vadd.f32 0.0, %v774
  %776 = vmatprep.mubr.bf16.mxu0 0
  %777 = vmatmul.mubr.bf16.gmra.mrb[0].mxu0 %v573
  %v778 = vpop.f32.mrb[0].mxu0
  %v779 = vadd.f32 0.0, %v778
  %v780 = vpop.f32.mrb[0].mxu0
  %v781 = vadd.f32 0.0, %v780
  %v782 = vpop.f32.mrb[0].mxu0
  %v783 = vadd.f32 0.0, %v782
  %v784 = vpop.f32.mrb[0].mxu0
  %v785 = vadd.f32 0.0, %v784
  %786 = vmatprep.mubr.bf16.mxu0 0
  %787 = vmatmul.mubr.bf16.gmra.mrb[0].mxu0 %v576
  %v788 = vpop.f32.mrb[0].mxu0
  %v789 = vadd.f32 0.0, %v788
  %v790 = vpop.f32.mrb[0].mxu0
  %v791 = vadd.f32 0.0, %v790
  %v792 = vpop.f32.mrb[0].mxu0
  %v793 = vpop.f32.mrb[0].mxu0
  %794 = vdwg.mxu0
  %795 = vmatprep.subr.bf16.mxu0 %v520
  %796 = vmatpush1.bf16.msra.mxu0 %v519
  %797 = vmatprep.subr.bf16.mxu0 %v531
  %798 = vmatpush1.bf16.msra.mxu0 %v530
  %799 = vmatprep.subr.bf16.mxu0 %v601
  %800 = vmatpush1.bf16.msra.mxu0 %v598
  %801 = vmatprep.subr.bf16.mxu0 0
  %802 = vmatpush1.bf16.msra.mxu0 0
  %803 = vmatprep.subr.bf16.mxu0 0
  %804 = vmatpush1.bf16.msra.mxu0 0
  %805 = vmatprep.subr.bf16.mxu0 0
  %806 = vmatpush1.bf16.msra.mxu0 0
  %807 = vmatprep.subr.bf16.mxu0 0
  %808 = vmatpush1.bf16.msra.mxu0 0
  %809 = vmatprep.subr.bf16.mxu0 0
  %810 = vmatpush1.bf16.msra.mxu0 0
  %811 = vmatprep.subr.bf16.mxu0 0
  %812 = vmatpush1.bf16.msra.mxu0 0
  %813 = vmatprep.subr.bf16.mxu0 0
  %814 = vmatpush1.bf16.msra.mxu0 0
  %815 = vmatprep.subr.bf16.mxu0 0
  %816 = vmatpush1.bf16.msra.mxu0 0
  %817 = vmatprep.subr.bf16.mxu0 0
  %818 = vmatpush1.bf16.msra.mxu0 0
  %819 = vmatprep.subr.bf16.mxu0 0
  %820 = vmatpush1.bf16.msra.mxu0 0
  %821 = vmatprep.subr.bf16.mxu0 0
  %822 = vmatpush1.bf16.msra.mxu0 0
  %823 = vmatprep.subr.bf16.mxu0 0
  %824 = vmatpush1.bf16.msra.mxu0 0
  %825 = vmatprep.subr.bf16.mxu0 0
  %826 = vmatpush1.bf16.msra.mxu0 0
  %827 = vmatprep.mubr.bf16.mxu0 0
  %828 = vmatmul.mubr.bf16.gmra.mrb[0].mxu0 %v570
  %v829 = vpop.f32.mrb[0].mxu0
  %v830 = vadd.f32 0.0, %v829
  %v831 = vpop.f32.mrb[0].mxu0
  %v832 = vadd.f32 0.0, %v831
  %v833 = vpop.f32.mrb[0].mxu0
  %v834 = vadd.f32 0.0, %v833
  %v835 = vpop.f32.mrb[0].mxu0
  %v836 = vadd.f32 0.0, %v835
  %837 = vmatprep.mubr.bf16.mxu0 0
  %838 = vmatmul.mubr.bf16.gmra.mrb[0].mxu0 %v573
  %v839 = vpop.f32.mrb[0].mxu0
  %v840 = vadd.f32 0.0, %v839
  %v841 = vpop.f32.mrb[0].mxu0
  %v842 = vadd.f32 0.0, %v841
  %v843 = vpop.f32.mrb[0].mxu0
  %v844 = vadd.f32 0.0, %v843
  %v845 = vpop.f32.mrb[0].mxu0
  %v846 = vadd.f32 0.0, %v845
  %847 = vmatprep.mubr.bf16.mxu0 0
  %848 = vmatmul.mubr.bf16.gmra.mrb[0].mxu0 %v576
  %v849 = vpop.f32.mrb[0].mxu0
  %v850 = vadd.f32 0.0, %v849
  %v851 = vpop.f32.mrb[0].mxu0
  %v852 = vadd.f32 0.0, %v851
  %v853 = vpop.f32.mrb[0].mxu0
  %v854 = vpop.f32.mrb[0].mxu0
  %855 = vdwg.mxu0
  %856 = vmatprep.subr.bf16.mxu0 %v522
  %857 = vmatpush1.bf16.msra.mxu0 %v521
  %858 = vmatprep.subr.bf16.mxu0 %v533
  %859 = vmatpush1.bf16.msra.mxu0 %v532
  %860 = vmatprep.subr.bf16.mxu0 %v607
  %861 = vmatpush1.bf16.msra.mxu0 %v604
  %862 = vmatprep.subr.bf16.mxu0 0
  %863 = vmatpush1.bf16.msra.mxu0 0
  %864 = vmatprep.subr.bf16.mxu0 0
  %865 = vmatpush1.bf16.msra.mxu0 0
  %866 = vmatprep.subr.bf16.mxu0 0
  %867 = vmatpush1.bf16.msra.mxu0 0
  %868 = vmatprep.subr.bf16.mxu0 0
  %869 = vmatpush1.bf16.msra.mxu0 0
  %870 = vmatprep.subr.bf16.mxu0 0
  %871 = vmatpush1.bf16.msra.mxu0 0
  %872 = vmatprep.subr.bf16.mxu0 0
  %873 = vmatpush1.bf16.msra.mxu0 0
  %874 = vmatprep.subr.bf16.mxu0 0
  %875 = vmatpush1.bf16.msra.mxu0 0
  %876 = vmatprep.subr.bf16.mxu0 0
  %877 = vmatpush1.bf16.msra.mxu0 0
  %878 = vmatprep.subr.bf16.mxu0 0
  %879 = vmatpush1.bf16.msra.mxu0 0
  %880 = vmatprep.subr.bf16.mxu0 0
  %881 = vmatpush1.bf16.msra.mxu0 0
  %882 = vmatprep.subr.bf16.mxu0 0
  %883 = vmatpush1.bf16.msra.mxu0 0
  %884 = vmatprep.subr.bf16.mxu0 0
  %885 = vmatpush1.bf16.msra.mxu0 0
  %886 = vmatprep.subr.bf16.mxu0 0
  %887 = vmatpush1.bf16.msra.mxu0 0
  %888 = vmatprep.mubr.bf16.mxu0 0
  %889 = vmatmul.mubr.bf16.gmra.mrb[0].mxu0 %v570
  %v890 = vpop.f32.mrb[0].mxu0
  %v891 = vadd.f32 0.0, %v890
  %v892 = vpop.f32.mrb[0].mxu0
  %v893 = vadd.f32 0.0, %v892
  %v894 = vpop.f32.mrb[0].mxu0
  %v895 = vadd.f32 0.0, %v894
  %v896 = vpop.f32.mrb[0].mxu0
  %v897 = vadd.f32 0.0, %v896
  %898 = vmatprep.mubr.bf16.mxu0 0
  %899 = vmatmul.mubr.bf16.gmra.mrb[0].mxu0 %v573
  %v900 = vpop.f32.mrb[0].mxu0
  %v901 = vadd.f32 0.0, %v900
  %v902 = vpop.f32.mrb[0].mxu0
  %v903 = vadd.f32 0.0, %v902
  %v904 = vpop.f32.mrb[0].mxu0
  %v905 = vadd.f32 0.0, %v904
  %v906 = vpop.f32.mrb[0].mxu0
  %v907 = vadd.f32 0.0, %v906
  %908 = vmatprep.mubr.bf16.mxu0 0
  %909 = vmatmul.mubr.bf16.gmra.mrb[0].mxu0 %v576
  %v910 = vpop.f32.mrb[0].mxu0
  %v911 = vadd.f32 0.0, %v910
  %v912 = vpop.f32.mrb[0].mxu0
  %v913 = vadd.f32 0.0, %v912
  %v914 = vpop.f32.mrb[0].mxu0
  %v915 = vpop.f32.mrb[0].mxu0
  %916 = vdwg.mxu0
  %917 = vmatprep.subr.bf16.mxu0 0
  %918 = vmatpush1.bf16.msra.mxu0 %v523
  %919 = vmatprep.subr.bf16.mxu0 0
  %920 = vmatpush1.bf16.msra.mxu0 %v534
  %921 = vmatprep.subr.bf16.mxu0 0
  %922 = vmatpush1.bf16.msra.mxu0 %v610
  %923 = vmatprep.subr.bf16.mxu0 0
  %924 = vmatpush1.bf16.msra.mxu0 0
  %925 = vmatprep.subr.bf16.mxu0 0
  %926 = vmatpush1.bf16.msra.mxu0 0
  %927 = vmatprep.subr.bf16.mxu0 0
  %928 = vmatpush1.bf16.msra.mxu0 0
  %929 = vmatprep.subr.bf16.mxu0 0
  %930 = vmatpush1.bf16.msra.mxu0 0
  %931 = vmatprep.subr.bf16.mxu0 0
  %932 = vmatpush1.bf16.msra.mxu0 0
  %933 = vmatprep.subr.bf16.mxu0 0
  %934 = vmatpush1.bf16.msra.mxu0 0
  %935 = vmatprep.subr.bf16.mxu0 0
  %936 = vmatpush1.bf16.msra.mxu0 0
  %937 = vmatprep.subr.bf16.mxu0 0
  %938 = vmatpush1.bf16.msra.mxu0 0
  %939 = vmatprep.subr.bf16.mxu0 0
  %940 = vmatpush1.bf16.msra.mxu0 0
  %941 = vmatprep.subr.bf16.mxu0 0
  %942 = vmatpush1.bf16.msra.mxu0 0
  %943 = vmatprep.subr.bf16.mxu0 0
  %944 = vmatpush1.bf16.msra.mxu0 0
  %945 = vmatprep.subr.bf16.mxu0 0
  %946 = vmatpush1.bf16.msra.mxu0 0
  %947 = vmatprep.subr.bf16.mxu0 0
  %948 = vmatpush1.bf16.msra.mxu0 0
  %949 = vmatprep.mubr.bf16.mxu0 0
  %950 = vmatmul.mubr.bf16.gmra.mrb[0].mxu0 %v570
  %v951 = vpop.f32.mrb[0].mxu0
  %v952 = vadd.f32 0.0, %v951
  %v953 = vpop.f32.mrb[0].mxu0
  %v954 = vpop.f32.mrb[0].mxu0
  %v955 = vadd.f32 0.0, %v954
  %v956 = vpop.f32.mrb[0].mxu0
  %957 = vmatprep.mubr.bf16.mxu0 0
  %958 = vmatmul.mubr.bf16.gmra.mrb[0].mxu0 %v573
  %v959 = vpop.f32.mrb[0].mxu0
  %v960 = vadd.f32 0.0, %v959
  %v961 = vpop.f32.mrb[0].mxu0
  %v962 = vpop.f32.mrb[0].mxu0
  %v963 = vadd.f32 0.0, %v962
  %v964 = vpop.f32.mrb[0].mxu0
  %965 = vmatprep.mubr.bf16.mxu0 0
  %966 = vmatmul.mubr.bf16.gmra.mrb[0].mxu0 %v576
  %v967 = vpop.f32.mrb[0].mxu0
  %v968 = vadd.f32 0.0, %v967
  %v969 = vpop.f32.mrb[0].mxu0
  %v970 = vpop.f32.mrb[0].mxu0
  %v971 = vpop.f32.mrb[0].mxu0
  %972 = vdwg.mxu0
  %973 = vst [vmem:[#allocation3] sm:$0xff] %v647
  %974 = vst [vmem:[#allocation3 + $0x8] sm:$0xff] %v649
  %975 = vst [vmem:[#allocation3 + $0x10] sm:$0xff] %v708
  %976 = vst [vmem:[#allocation3 + $0x18] sm:$0xff] %v710
  %977 = vst [vmem:[#allocation3 + $0x20] sm:$0xff] %v769
  %978 = vst [vmem:[#allocation3 + $0x28] sm:$0xff] %v771
  %979 = vst [vmem:[#allocation3 + $0x30] sm:$0xff] %v830
  %980 = vst [vmem:[#allocation3 + $0x38] sm:$0xff] %v832
  %981 = vst [vmem:[#allocation3 + $0x40] sm:$0xff] %v891
  %982 = vst [vmem:[#allocation3 + $0x48] sm:$0xff] %v893
  %983 = vst [vmem:[#allocation3 + $0x50] sm:$0xff] %v952
  %984 = vst [vmem:[#allocation3 + $0x58] sm:$0xff] %v651
  %985 = vst [vmem:[#allocation3 + $0x60] sm:$0xff] %v653
  %986 = vst [vmem:[#allocation3 + $0x68] sm:$0xff] %v712
  %987 = vst [vmem:[#allocation3 + $0x70] sm:$0xff] %v714
  %988 = vst [vmem:[#allocation3 + $0x78] sm:$0xff] %v773
  %989 = vst [vmem:[#allocation3 + $0x80] sm:$0xff] %v775
  %990 = vst [vmem:[#allocation3 + $0x88] sm:$0xff] %v834
  %991 = vst [vmem:[#allocation3 + $0x90] sm:$0xff] %v836
  %992 = vst [vmem:[#allocation3 + $0x98] sm:$0xff] %v895
  %993 = vst [vmem:[#allocation3 + $0xa0] sm:$0xff] %v897
  %994 = vst [vmem:[#allocation3 + $0xa8] sm:$0xff] %v955
  %995 = vst [vmem:[#allocation3 + $0xb0] sm:$0xff] %v657
  %996 = vst [vmem:[#allocation3 + $0xb8] sm:$0xff] %v659
  %997 = vst [vmem:[#allocation3 + $0xc0] sm:$0xff] %v718
  %998 = vst [vmem:[#allocation3 + $0xc8] sm:$0xff] %v720
  %999 = vst [vmem:[#allocation3 + $0xd0] sm:$0xff] %v779
  %1000 = vst [vmem:[#allocation3 + $0xd8] sm:$0xff] %v781
  %1001 = vst [vmem:[#allocation3 + $0xe0] sm:$0xff] %v840
  %1002 = vst [vmem:[#allocation3 + $0xe8] sm:$0xff] %v842
  %1003 = vst [vmem:[#allocation3 + $0xf0] sm:$0xff] %v901
  %1004 = vst [vmem:[#allocation3 + $0xf8] sm:$0xff] %v903
  %1005 = vst [vmem:[#allocation3 + $0x100] sm:$0xff] %v960
  %1006 = vst [vmem:[#allocation3 + $0x108] sm:$0xff] %v661
  %1007 = vst [vmem:[#allocation3 + $0x110] sm:$0xff] %v663
  %1008 = vst [vmem:[#allocation3 + $0x118] sm:$0xff] %v722
  %1009 = vst [vmem:[#allocation3 + $0x120] sm:$0xff] %v724
  %1010 = vst [vmem:[#allocation3 + $0x128] sm:$0xff] %v783
  %1011 = vst [vmem:[#allocation3 + $0x130] sm:$0xff] %v785
  %1012 = vst [vmem:[#allocation3 + $0x138] sm:$0xff] %v844
  %1013 = vst [vmem:[#allocation3 + $0x140] sm:$0xff] %v846
  %1014 = vst [vmem:[#allocation3 + $0x148] sm:$0xff] %v905
  %1015 = vst [vmem:[#allocation3 + $0x150] sm:$0xff] %v907
  %1016 = vst [vmem:[#allocation3 + $0x158] sm:$0xff] %v963
  %1017 = vst [vmem:[#allocation3 + $0x160] sm:$0xff] %v667
  %1018 = vst [vmem:[#allocation3 + $0x168] sm:$0xff] %v669
  %1019 = vst [vmem:[#allocation3 + $0x170] sm:$0xff] %v728
  %1020 = vst [vmem:[#allocation3 + $0x178] sm:$0xff] %v730
  %1021 = vst [vmem:[#allocation3 + $0x180] sm:$0xff] %v789
  %1022 = vst [vmem:[#allocation3 + $0x188] sm:$0xff] %v791
  %1023 = vst [vmem:[#allocation3 + $0x190] sm:$0xff] %v850
  %1024 = vst [vmem:[#allocation3 + $0x198] sm:$0xff] %v852
  %1025 = vst [vmem:[#allocation3 + $0x1a0] sm:$0xff] %v911
  %1026 = vst [vmem:[#allocation3 + $0x1a8] sm:$0xff] %v913
  %1027 = vst [vmem:[#allocation3 + $0x1b0] sm:$0xff] %v968
  %v1028 = vld [vmem:[#allocation3] sm:$0xff]
  %v1029 = vld [vmem:[#allocation3 + $0x8] sm:$0xff]
  %v1030 = vld [vmem:[#allocation3 + $0x10] sm:$0xff]
  %v1031 = vld [vmem:[#allocation3 + $0x18] sm:$0xff]
  %v1032 = vld [vmem:[#allocation3 + $0x20] sm:$0xff]
  %v1033 = vld [vmem:[#allocation3 + $0x28] sm:$0xff]
  %v1034 = vld [vmem:[#allocation3 + $0x30] sm:$0xff]
  %v1035 = vld [vmem:[#allocation3 + $0x38] sm:$0xff]
  %v1036 = vld [vmem:[#allocation3 + $0x40] sm:$0xff]
  %v1037 = vld [vmem:[#allocation3 + $0x48] sm:$0xff]
  %v1038 = vld [vmem:[#allocation3 + $0x58] sm:$0xff]
  %v1039 = vld [vmem:[#allocation3 + $0x60] sm:$0xff]
  %v1040 = vld [vmem:[#allocation3 + $0x68] sm:$0xff]
  %v1041 = vld [vmem:[#allocation3 + $0x70] sm:$0xff]
  %v1042 = vld [vmem:[#allocation3 + $0x78] sm:$0xff]
  %v1043 = vld [vmem:[#allocation3 + $0x80] sm:$0xff]
  %v1044 = vld [vmem:[#allocation3 + $0x88] sm:$0xff]
  %v1045 = vld [vmem:[#allocation3 + $0x90] sm:$0xff]
  %v1046 = vld [vmem:[#allocation3 + $0x98] sm:$0xff]
  %v1047 = vld [vmem:[#allocation3 + $0xa0] sm:$0xff]
  %v1048 = vld [vmem:[#allocation3 + $0xa8] sm:$0xff]
  %1060 = vrot.lane.b32.xlu0 %v1038, 127
  %v1061 = vpop.permute.xlu0 %1060
  %1062 = vrot.lane.b32.xlu0 %v1039, 127
  %v1063 = vpop.permute.xlu0 %1062
  %1064 = vrot.lane.b32.xlu0 %v1040, 127
  %v1065 = vpop.permute.xlu0 %1064
  %1066 = vrot.lane.b32.xlu0 %v1041, 127
  %v1067 = vpop.permute.xlu0 %1066
  %1068 = vrot.lane.b32.xlu0 %v1042, 127
  %v1069 = vpop.permute.xlu0 %1068
  %1070 = vrot.lane.b32.xlu0 %v1043, 127
  %v1071 = vpop.permute.xlu0 %1070
  %1072 = vrot.lane.b32.xlu0 %v1044, 127
  %v1073 = vpop.permute.xlu0 %1072
  %1074 = vrot.lane.b32.xlu0 %v1045, 127
  %v1075 = vpop.permute.xlu0 %1074
  %1076 = vrot.lane.b32.xlu0 %v1046, 127
  %v1077 = vpop.permute.xlu0 %1076
  %1078 = vrot.lane.b32.xlu0 %v1047, 127
  %v1079 = vpop.permute.xlu0 %1078
  %1080 = vrot.lane.b32.xlu0 %v1048, 127
  %v1081 = vpop.permute.xlu0 %1080
  %vm1082 = vcmask 1039360
  %v1083 = vsel %vm1082, %v1061, %v1063
  %v1084 = vsel %vm1082, %v1063, %v1065
  %v1085 = vsel %vm1082, %v1065, %v1067
  %v1086 = vsel %vm1082, %v1067, %v1069
  %v1087 = vsel %vm1082, %v1069, %v1071
  %v1088 = vsel %vm1082, %v1071, %v1073
  %v1089 = vsel %vm1082, %v1073, %v1075
  %v1090 = vsel %vm1082, %v1075, %v1077
  %v1091 = vsel %vm1082, %v1077, %v1079
  %v1092 = vsel %vm1082, %v1079, %v1081
  %v1103 = vadd.f32 %v1028, %v1083
  %v1104 = vadd.f32 %v1029, %v1084
  %v1105 = vadd.f32 %v1030, %v1085
  %v1106 = vadd.f32 %v1031, %v1086
  %v1107 = vadd.f32 %v1032, %v1087
  %v1108 = vadd.f32 %v1033, %v1088
  %v1109 = vadd.f32 %v1034, %v1089
  %v1110 = vadd.f32 %v1035, %v1090
  %v1111 = vadd.f32 %v1036, %v1091
  %v1112 = vadd.f32 %v1037, %v1092
  %v1113 = vld [vmem:[#allocation3 + $0xb0] sm:$0xff]
  %v1114 = vld [vmem:[#allocation3 + $0xb8] sm:$0xff]
  %v1115 = vld [vmem:[#allocation3 + $0xc0] sm:$0xff]
  %v1116 = vld [vmem:[#allocation3 + $0xc8] sm:$0xff]
  %v1117 = vld [vmem:[#allocation3 + $0xd0] sm:$0xff]
  %v1118 = vld [vmem:[#allocation3 + $0xd8] sm:$0xff]
  %v1119 = vld [vmem:[#allocation3 + $0xe0] sm:$0xff]
  %v1120 = vld [vmem:[#allocation3 + $0xe8] sm:$0xff]
  %v1121 = vld [vmem:[#allocation3 + $0xf0] sm:$0xff]
  %v1122 = vld [vmem:[#allocation3 + $0xf8] sm:$0xff]
  %v1123 = vld [vmem:[#allocation3 + $0x100] sm:$0xff]
  %1135 = vrot.lane.b32.xlu0 %v1113, 126
  %v1136 = vpop.permute.xlu0 %1135
  %1137 = vrot.lane.b32.xlu0 %v1114, 126
  %v1138 = vpop.permute.xlu0 %1137
  %1139 = vrot.lane.b32.xlu0 %v1115, 126
  %v1140 = vpop.permute.xlu0 %1139
  %1141 = vrot.lane.b32.xlu0 %v1116, 126
  %v1142 = vpop.permute.xlu0 %1141
  %1143 = vrot.lane.b32.xlu0 %v1117, 126
  %v1144 = vpop.permute.xlu0 %1143
  %1145 = vrot.lane.b32.xlu0 %v1118, 126
  %v1146 = vpop.permute.xlu0 %1145
  %1147 = vrot.lane.b32.xlu0 %v1119, 126
  %v1148 = vpop.permute.xlu0 %1147
  %1149 = vrot.lane.b32.xlu0 %v1120, 126
  %v1150 = vpop.permute.xlu0 %1149
  %1151 = vrot.lane.b32.xlu0 %v1121, 126
  %v1152 = vpop.permute.xlu0 %1151
  %1153 = vrot.lane.b32.xlu0 %v1122, 126
  %v1154 = vpop.permute.xlu0 %1153
  %1155 = vrot.lane.b32.xlu0 %v1123, 126
  %v1156 = vpop.permute.xlu0 %1155
  %vm1157 = vcmask 1031168
  %v1158 = vsel %vm1157, %v1136, %v1138
  %v1159 = vsel %vm1157, %v1138, %v1140
  %v1160 = vsel %vm1157, %v1140, %v1142
  %v1161 = vsel %vm1157, %v1142, %v1144
  %v1162 = vsel %vm1157, %v1144, %v1146
  %v1163 = vsel %vm1157, %v1146, %v1148
  %v1164 = vsel %vm1157, %v1148, %v1150
  %v1165 = vsel %vm1157, %v1150, %v1152
  %v1166 = vsel %vm1157, %v1152, %v1154
  %v1167 = vsel %vm1157, %v1154, %v1156
  %v1178 = vadd.f32 %v1103, %v1158
  %v1179 = vadd.f32 %v1104, %v1159
  %v1180 = vadd.f32 %v1105, %v1160
  %v1181 = vadd.f32 %v1106, %v1161
  %v1182 = vadd.f32 %v1107, %v1162
  %v1183 = vadd.f32 %v1108, %v1163
  %v1184 = vadd.f32 %v1109, %v1164
  %v1185 = vadd.f32 %v1110, %v1165
  %v1186 = vadd.f32 %v1111, %v1166
  %v1187 = vadd.f32 %v1112, %v1167
  %v1188 = vld [vmem:[#allocation3 + $0x108] sm:$0xff]
  %v1189 = vld [vmem:[#allocation3 + $0x110] sm:$0xff]
  %v1190 = vld [vmem:[#allocation3 + $0x118] sm:$0xff]
  %v1191 = vld [vmem:[#allocation3 + $0x120] sm:$0xff]
  %v1192 = vld [vmem:[#allocation3 + $0x128] sm:$0xff]
  %v1193 = vld [vmem:[#allocation3 + $0x130] sm:$0xff]
  %v1194 = vld [vmem:[#allocation3 + $0x138] sm:$0xff]
  %v1195 = vld [vmem:[#allocation3 + $0x140] sm:$0xff]
  %v1196 = vld [vmem:[#allocation3 + $0x148] sm:$0xff]
  %v1197 = vld [vmem:[#allocation3 + $0x150] sm:$0xff]
  %v1198 = vld [vmem:[#allocation3 + $0x158] sm:$0xff]
  %1210 = vrot.lane.b32.xlu0 %v1188, 125
  %v1211 = vpop.permute.xlu0 %1210
  %1212 = vrot.lane.b32.xlu0 %v1189, 125
  %v1213 = vpop.permute.xlu0 %1212
  %1214 = vrot.lane.b32.xlu0 %v1190, 125
  %v1215 = vpop.permute.xlu0 %1214
  %1216 = vrot.lane.b32.xlu0 %v1191, 125
  %v1217 = vpop.permute.xlu0 %1216
  %1218 = vrot.lane.b32.xlu0 %v1192, 125
  %v1219 = vpop.permute.xlu0 %1218
  %1220 = vrot.lane.b32.xlu0 %v1193, 125
  %v1221 = vpop.permute.xlu0 %1220
  %1222 = vrot.lane.b32.xlu0 %v1194, 125
  %v1223 = vpop.permute.xlu0 %1222
  %1224 = vrot.lane.b32.xlu0 %v1195, 125
  %v1225 = vpop.permute.xlu0 %1224
  %1226 = vrot.lane.b32.xlu0 %v1196, 125
  %v1227 = vpop.permute.xlu0 %1226
  %1228 = vrot.lane.b32.xlu0 %v1197, 125
  %v1229 = vpop.permute.xlu0 %1228
  %1230 = vrot.lane.b32.xlu0 %v1198, 125
  %v1231 = vpop.permute.xlu0 %1230
  %vm1232 = vcmask 1022976
  %v1233 = vsel %vm1232, %v1211, %v1213
  %v1234 = vsel %vm1232, %v1213, %v1215
  %v1235 = vsel %vm1232, %v1215, %v1217
  %v1236 = vsel %vm1232, %v1217, %v1219
  %v1237 = vsel %vm1232, %v1219, %v1221
  %v1238 = vsel %vm1232, %v1221, %v1223
  %v1239 = vsel %vm1232, %v1223, %v1225
  %v1240 = vsel %vm1232, %v1225, %v1227
  %v1241 = vsel %vm1232, %v1227, %v1229
  %v1242 = vsel %vm1232, %v1229, %v1231
  %v1253 = vadd.f32 %v1178, %v1233
  %v1254 = vadd.f32 %v1179, %v1234
  %v1255 = vadd.f32 %v1180, %v1235
  %v1256 = vadd.f32 %v1181, %v1236
  %v1257 = vadd.f32 %v1182, %v1237
  %v1258 = vadd.f32 %v1183, %v1238
  %v1259 = vadd.f32 %v1184, %v1239
  %v1260 = vadd.f32 %v1185, %v1240
  %v1261 = vadd.f32 %v1186, %v1241
  %v1262 = vadd.f32 %v1187, %v1242
  %v1263 = vld [vmem:[#allocation3 + $0x160] sm:$0xff]
  %v1264 = vld [vmem:[#allocation3 + $0x168] sm:$0xff]
  %v1265 = vld [vmem:[#allocation3 + $0x170] sm:$0xff]
  %v1266 = vld [vmem:[#allocation3 + $0x178] sm:$0xff]
  %v1267 = vld [vmem:[#allocation3 + $0x180] sm:$0xff]
  %v1268 = vld [vmem:[#allocation3 + $0x188] sm:$0xff]
  %v1269 = vld [vmem:[#allocation3 + $0x190] sm:$0xff]
  %v1270 = vld [vmem:[#allocation3 + $0x198] sm:$0xff]
  %v1271 = vld [vmem:[#allocation3 + $0x1a0] sm:$0xff]
  %v1272 = vld [vmem:[#allocation3 + $0x1a8] sm:$0xff]
  %v1273 = vld [vmem:[#allocation3 + $0x1b0] sm:$0xff]
  %1285 = vrot.lane.b32.xlu0 %v1263, 124
  %v1286 = vpop.permute.xlu0 %1285
  %1287 = vrot.lane.b32.xlu0 %v1264, 124
  %v1288 = vpop.permute.xlu0 %1287
  %1289 = vrot.lane.b32.xlu0 %v1265, 124
  %v1290 = vpop.permute.xlu0 %1289
  %1291 = vrot.lane.b32.xlu0 %v1266, 124
  %v1292 = vpop.permute.xlu0 %1291
  %1293 = vrot.lane.b32.xlu0 %v1267, 124
  %v1294 = vpop.permute.xlu0 %1293
  %1295 = vrot.lane.b32.xlu0 %v1268, 124
  %v1296 = vpop.permute.xlu0 %1295
  %1297 = vrot.lane.b32.xlu0 %v1269, 124
  %v1298 = vpop.permute.xlu0 %1297
  %1299 = vrot.lane.b32.xlu0 %v1270, 124
  %v1300 = vpop.permute.xlu0 %1299
  %1301 = vrot.lane.b32.xlu0 %v1271, 124
  %v1302 = vpop.permute.xlu0 %1301
  %1303 = vrot.lane.b32.xlu0 %v1272, 124
  %v1304 = vpop.permute.xlu0 %1303
  %1305 = vrot.lane.b32.xlu0 %v1273, 124
  %v1306 = vpop.permute.xlu0 %1305
  %vm1307 = vcmask 1014784
  %v1308 = vsel %vm1307, %v1286, %v1288
  %v1309 = vsel %vm1307, %v1288, %v1290
  %v1310 = vsel %vm1307, %v1290, %v1292
  %v1311 = vsel %vm1307, %v1292, %v1294
  %v1312 = vsel %vm1307, %v1294, %v1296
  %v1313 = vsel %vm1307, %v1296, %v1298
  %v1314 = vsel %vm1307, %v1298, %v1300
  %v1315 = vsel %vm1307, %v1300, %v1302
  %v1316 = vsel %vm1307, %v1302, %v1304
  %v1317 = vsel %vm1307, %v1304, %v1306
  %v1328 = vadd.f32 %v1253, %v1308
  %v1329 = vadd.f32 %v1254, %v1309
  %v1330 = vadd.f32 %v1255, %v1310
  %v1331 = vadd.f32 %v1256, %v1311
  %v1332 = vadd.f32 %v1257, %v1312
  %v1333 = vadd.f32 %v1258, %v1313
  %v1334 = vadd.f32 %v1259, %v1314
  %v1335 = vadd.f32 %v1260, %v1315
  %v1336 = vadd.f32 %v1261, %v1316
  %v1337 = vadd.f32 %v1262, %v1317
  %v1338 = vld [vmem:[%s2] sm:$0xff]
  %1340 = vset.pattern.permute.xlu0 0
  %1341 = vperm.xlu0 %1340, %v1338
  %v1342 = vpop.permute.xlu0 %1341
  %v1344 = vadd.f32 %v1328, %v1342
  %v1345 = vadd.f32 %v1329, %v1342
  %v1346 = vadd.f32 %v1330, %v1342
  %v1347 = vadd.f32 %v1331, %v1342
  %v1348 = vadd.f32 %v1332, %v1342
  %v1349 = vadd.f32 %v1333, %v1342
  %v1350 = vadd.f32 %v1334, %v1342
  %v1351 = vadd.f32 %v1335, %v1342
  %v1352 = vadd.f32 %v1336, %v1342
  %v1353 = vadd.f32 %v1337, %v1342
  %v1354 = vmax.f32 %v1344, 0.0
  %v1355 = vmax.f32 %v1345, 0.0
  %v1356 = vmax.f32 %v1346, 0.0
  %v1357 = vmax.f32 %v1347, 0.0
  %v1358 = vmax.f32 %v1348, 0.0
  %v1359 = vmax.f32 %v1349, 0.0
  %v1360 = vmax.f32 %v1350, 0.0
  %v1361 = vmax.f32 %v1351, 0.0
  %v1362 = vmax.f32 %v1352, 0.0
  %v1363 = vmax.f32 %v1353, 0.0
  %1364 = vst [vmem:[#allocation4] sm:$0xff] %v1354
  %1365 = vst [vmem:[#allocation4 + $0x8] sm:$0xff] %v1355
  %1366 = vst [vmem:[#allocation4 + $0x10] sm:$0xff] %v1356
  %1367 = vst [vmem:[#allocation4 + $0x18] sm:$0xff] %v1357
  %1368 = vst [vmem:[#allocation4 + $0x20] sm:$0xff] %v1358
  %1369 = vst [vmem:[#allocation4 + $0x28] sm:$0xff] %v1359
  %1370 = vst [vmem:[#allocation4 + $0x30] sm:$0xff] %v1360
  %1371 = vst [vmem:[#allocation4 + $0x38] sm:$0xff] %v1361
  %1372 = vst [vmem:[#allocation4 + $0x40] sm:$0xff] %v1362
  %1373 = vst [vmem:[#allocation4 + $0x48] sm:$0xff] %v1363
  %v1374 = vld [vmem:[#allocation4] sm:$0xff]
  %v1375 = vld [vmem:[#allocation4 + $0x8] sm:$0xff]
  %v1376 = vld [vmem:[#allocation4 + $0x10] sm:$0xff]
  %v1377 = vld [vmem:[#allocation4 + $0x18] sm:$0xff]
  %v1378 = vld [vmem:[#allocation4 + $0x20] sm:$0xff]
  %v1379 = vld [vmem:[#allocation4 + $0x28] sm:$0xff]
  %v1380 = vld [vmem:[#allocation4 + $0x30] sm:$0xff]
  %v1381 = vld [vmem:[#allocation4 + $0x38] sm:$0xff]
  %v1382 = vld [vmem:[#allocation4 + $0x40] sm:$0xff]
  %v1383 = vld [vmem:[#allocation4] sm:$0xff]
  %v1384 = vld [vmem:[#allocation4 + $0x8] sm:$0xff]
  %v1385 = vld [vmem:[#allocation4 + $0x10] sm:$0xff]
  %v1386 = vld [vmem:[#allocation4 + $0x18] sm:$0xff]
  %v1387 = vld [vmem:[#allocation4 + $0x20] sm:$0xff]
  %v1388 = vld [vmem:[#allocation4 + $0x28] sm:$0xff]
  %v1389 = vld [vmem:[#allocation4 + $0x30] sm:$0xff]
  %v1390 = vld [vmem:[#allocation4 + $0x38] sm:$0xff]
  %v1391 = vld [vmem:[#allocation4 + $0x40] sm:$0xff]
  %v1392 = vld [vmem:[#allocation4 + $0x48] sm:$0xff]
  %1403 = vrot.lane.b32.xlu0 %v1383, 104
  %v1404 = vpop.permute.xlu0 %1403
  %1405 = vrot.lane.b32.xlu0 %v1384, 104
  %v1406 = vpop.permute.xlu0 %1405
  %1407 = vrot.lane.b32.xlu0 %v1385, 104
  %v1408 = vpop.permute.xlu0 %1407
  %1409 = vrot.lane.b32.xlu0 %v1386, 104
  %v1410 = vpop.permute.xlu0 %1409
  %1411 = vrot.lane.b32.xlu0 %v1387, 104
  %v1412 = vpop.permute.xlu0 %1411
  %1413 = vrot.lane.b32.xlu0 %v1388, 104
  %v1414 = vpop.permute.xlu0 %1413
  %1415 = vrot.lane.b32.xlu0 %v1389, 104
  %v1416 = vpop.permute.xlu0 %1415
  %1417 = vrot.lane.b32.xlu0 %v1390, 104
  %v1418 = vpop.permute.xlu0 %1417
  %1419 = vrot.lane.b32.xlu0 %v1391, 104
  %v1420 = vpop.permute.xlu0 %1419
  %1421 = vrot.lane.b32.xlu0 %v1392, 104
  %v1422 = vpop.permute.xlu0 %1421
  %vm1423 = vcmask 850944
  %v1424 = vsel %vm1423, %v1404, %v1406
  %v1425 = vsel %vm1423, %v1406, %v1408
  %v1426 = vsel %vm1423, %v1408, %v1410
  %v1427 = vsel %vm1423, %v1410, %v1412
  %v1428 = vsel %vm1423, %v1412, %v1414
  %v1429 = vsel %vm1423, %v1414, %v1416
  %v1430 = vsel %vm1423, %v1416, %v1418
  %v1431 = vsel %vm1423, %v1418, %v1420
  %v1432 = vsel %vm1423, %v1420, %v1422
  %v1442 = vmax.f32 %v1374, %v1424
  %v1443 = vmax.f32 %v1375, %v1425
  %v1444 = vmax.f32 %v1376, %v1426
  %v1445 = vmax.f32 %v1377, %v1427
  %v1446 = vmax.f32 %v1378, %v1428
  %v1447 = vmax.f32 %v1379, %v1429
  %v1448 = vmax.f32 %v1380, %v1430
  %v1449 = vmax.f32 %v1381, %v1431
  %v1450 = vmax.f32 %v1382, %v1432
  %1451 = vrot.lane.b32.xlu0 %v1383, 80
  %v1452 = vpop.permute.xlu0 %1451
  %1453 = vrot.lane.b32.xlu0 %v1384, 80
  %v1454 = vpop.permute.xlu0 %1453
  %1455 = vrot.lane.b32.xlu0 %v1385, 80
  %v1456 = vpop.permute.xlu0 %1455
  %1457 = vrot.lane.b32.xlu0 %v1386, 80
  %v1458 = vpop.permute.xlu0 %1457
  %1459 = vrot.lane.b32.xlu0 %v1387, 80
  %v1460 = vpop.permute.xlu0 %1459
  %1461 = vrot.lane.b32.xlu0 %v1388, 80
  %v1462 = vpop.permute.xlu0 %1461
  %1463 = vrot.lane.b32.xlu0 %v1389, 80
  %v1464 = vpop.permute.xlu0 %1463
  %1465 = vrot.lane.b32.xlu0 %v1390, 80
  %v1466 = vpop.permute.xlu0 %1465
  %1467 = vrot.lane.b32.xlu0 %v1391, 80
  %v1468 = vpop.permute.xlu0 %1467
  %1469 = vrot.lane.b32.xlu0 %v1392, 80
  %v1470 = vpop.permute.xlu0 %1469
  %vm1471 = vcmask 654336
  %v1472 = vsel %vm1471, %v1452, %v1454
  %v1473 = vsel %vm1471, %v1454, %v1456
  %v1474 = vsel %vm1471, %v1456, %v1458
  %v1475 = vsel %vm1471, %v1458, %v1460
  %v1476 = vsel %vm1471, %v1460, %v1462
  %v1477 = vsel %vm1471, %v1462, %v1464
  %v1478 = vsel %vm1471, %v1464, %v1466
  %v1479 = vsel %vm1471, %v1466, %v1468
  %v1480 = vsel %vm1471, %v1468, %v1470
  %v1490 = vmax.f32 %v1442, %v1472
  %v1491 = vmax.f32 %v1443, %v1473
  %v1492 = vmax.f32 %v1444, %v1474
  %v1493 = vmax.f32 %v1445, %v1475
  %v1494 = vmax.f32 %v1446, %v1476
  %v1495 = vmax.f32 %v1447, %v1477
  %v1496 = vmax.f32 %v1448, %v1478
  %v1497 = vmax.f32 %v1449, %v1479
  %v1498 = vmax.f32 %v1450, %v1480
  %1499 = vrot.lane.b32.xlu0 %v1383, 56
  %v1500 = vpop.permute.xlu0 %1499
  %1501 = vrot.lane.b32.xlu0 %v1384, 56
  %v1502 = vpop.permute.xlu0 %1501
  %1503 = vrot.lane.b32.xlu0 %v1385, 56
  %v1504 = vpop.permute.xlu0 %1503
  %1505 = vrot.lane.b32.xlu0 %v1386, 56
  %v1506 = vpop.permute.xlu0 %1505
  %1507 = vrot.lane.b32.xlu0 %v1387, 56
  %v1508 = vpop.permute.xlu0 %1507
  %1509 = vrot.lane.b32.xlu0 %v1388, 56
  %v1510 = vpop.permute.xlu0 %1509
  %1511 = vrot.lane.b32.xlu0 %v1389, 56
  %v1512 = vpop.permute.xlu0 %1511
  %1513 = vrot.lane.b32.xlu0 %v1390, 56
  %v1514 = vpop.permute.xlu0 %1513
  %1515 = vrot.lane.b32.xlu0 %v1391, 56
  %v1516 = vpop.permute.xlu0 %1515
  %1517 = vrot.lane.b32.xlu0 %v1392, 56
  %v1518 = vpop.permute.xlu0 %1517
  %vm1519 = vcmask 457728
  %v1520 = vsel %vm1519, %v1500, %v1502
  %v1521 = vsel %vm1519, %v1502, %v1504
  %v1522 = vsel %vm1519, %v1504, %v1506
  %v1523 = vsel %vm1519, %v1506, %v1508
  %v1524 = vsel %vm1519, %v1508, %v1510
  %v1525 = vsel %vm1519, %v1510, %v1512
  %v1526 = vsel %vm1519, %v1512, %v1514
  %v1527 = vsel %vm1519, %v1514, %v1516
  %v1528 = vsel %vm1519, %v1516, %v1518
  %v1538 = vmax.f32 %v1490, %v1520
  %v1539 = vmax.f32 %v1491, %v1521
  %v1540 = vmax.f32 %v1492, %v1522
  %v1541 = vmax.f32 %v1493, %v1523
  %v1542 = vmax.f32 %v1494, %v1524
  %v1543 = vmax.f32 %v1495, %v1525
  %v1544 = vmax.f32 %v1496, %v1526
  %v1545 = vmax.f32 %v1497, %v1527
  %v1546 = vmax.f32 %v1498, %v1528
  %1547 = vrot.lane.b32.xlu0 %v1383, 32
  %v1548 = vpop.permute.xlu0 %1547
  %1549 = vrot.lane.b32.xlu0 %v1384, 32
  %v1550 = vpop.permute.xlu0 %1549
  %1551 = vrot.lane.b32.xlu0 %v1385, 32
  %v1552 = vpop.permute.xlu0 %1551
  %1553 = vrot.lane.b32.xlu0 %v1386, 32
  %v1554 = vpop.permute.xlu0 %1553
  %1555 = vrot.lane.b32.xlu0 %v1387, 32
  %v1556 = vpop.permute.xlu0 %1555
  %1557 = vrot.lane.b32.xlu0 %v1388, 32
  %v1558 = vpop.permute.xlu0 %1557
  %1559 = vrot.lane.b32.xlu0 %v1389, 32
  %v1560 = vpop.permute.xlu0 %1559
  %1561 = vrot.lane.b32.xlu0 %v1390, 32
  %v1562 = vpop.permute.xlu0 %1561
  %1563 = vrot.lane.b32.xlu0 %v1391, 32
  %v1564 = vpop.permute.xlu0 %1563
  %1565 = vrot.lane.b32.xlu0 %v1392, 32
  %v1566 = vpop.permute.xlu0 %1565
  %vm1567 = vcmask 261120
  %v1568 = vsel %vm1567, %v1548, %v1550
  %v1569 = vsel %vm1567, %v1550, %v1552
  %v1570 = vsel %vm1567, %v1552, %v1554
  %v1571 = vsel %vm1567, %v1554, %v1556
  %v1572 = vsel %vm1567, %v1556, %v1558
  %v1573 = vsel %vm1567, %v1558, %v1560
  %v1574 = vsel %vm1567, %v1560, %v1562
  %v1575 = vsel %vm1567, %v1562, %v1564
  %v1576 = vsel %vm1567, %v1564, %v1566
  %v1586 = vmax.f32 %v1538, %v1568
  %v1587 = vmax.f32 %v1539, %v1569
  %v1588 = vmax.f32 %v1540, %v1570
  %v1589 = vmax.f32 %v1541, %v1571
  %v1590 = vmax.f32 %v1542, %v1572
  %v1591 = vmax.f32 %v1543, %v1573
  %v1592 = vmax.f32 %v1544, %v1574
  %v1593 = vmax.f32 %v1545, %v1575
  %v1594 = vmax.f32 %v1546, %v1576
  %1595 = vst [vmem:[#allocation5] sm:$0xff] %v1586
  %1596 = vst [vmem:[#allocation5 + $0x8] sm:$0xff] %v1587
  %1597 = vst [vmem:[#allocation5 + $0x10] sm:$0xff] %v1588
  %1598 = vst [vmem:[#allocation5 + $0x18] sm:$0xff] %v1589
  %1599 = vst [vmem:[#allocation5 + $0x20] sm:$0xff] %v1590
  %1600 = vst [vmem:[#allocation5 + $0x28] sm:$0xff] %v1591
  %1601 = vst [vmem:[#allocation5 + $0x30] sm:$0xff] %v1592
  %1602 = vst [vmem:[#allocation5 + $0x38] sm:$0xff] %v1593
  %1603 = vst [vmem:[#allocation5 + $0x40] sm:$0xff] %v1594
  %v1604 = vld [vmem:[#allocation5] sm:$0xff]
  %v1605 = vld [vmem:[#allocation5 + $0x8] sm:$0xff]
  %v1606 = vld [vmem:[#allocation5 + $0x10] sm:$0xff]
  %v1607 = vld [vmem:[#allocation5 + $0x18] sm:$0xff]
  %v1608 = vld [vmem:[#allocation5 + $0x20] sm:$0xff]
  %v1609 = vld [vmem:[#allocation5 + $0x28] sm:$0xff]
  %v1610 = vld [vmem:[#allocation5 + $0x30] sm:$0xff]
  %v1611 = vld [vmem:[#allocation5 + $0x38] sm:$0xff]
  %v1612 = vld [vmem:[#allocation5] sm:$0xff]
  %v1613 = vld [vmem:[#allocation5 + $0x8] sm:$0xff]
  %v1614 = vld [vmem:[#allocation5 + $0x10] sm:$0xff]
  %v1615 = vld [vmem:[#allocation5 + $0x18] sm:$0xff]
  %v1616 = vld [vmem:[#allocation5 + $0x20] sm:$0xff]
  %v1617 = vld [vmem:[#allocation5 + $0x28] sm:$0xff]
  %v1618 = vld [vmem:[#allocation5 + $0x30] sm:$0xff]
  %v1619 = vld [vmem:[#allocation5 + $0x38] sm:$0xff]
  %v1620 = vld [vmem:[#allocation5 + $0x40] sm:$0xff]
  %1630 = vrot.lane.b32.xlu0 %v1612, 127
  %v1631 = vpop.permute.xlu0 %1630
  %1632 = vrot.lane.b32.xlu0 %v1613, 127
  %v1633 = vpop.permute.xlu0 %1632
  %1634 = vrot.lane.b32.xlu0 %v1614, 127
  %v1635 = vpop.permute.xlu0 %1634
  %1636 = vrot.lane.b32.xlu0 %v1615, 127
  %v1637 = vpop.permute.xlu0 %1636
  %1638 = vrot.lane.b32.xlu0 %v1616, 127
  %v1639 = vpop.permute.xlu0 %1638
  %1640 = vrot.lane.b32.xlu0 %v1617, 127
  %v1641 = vpop.permute.xlu0 %1640
  %1642 = vrot.lane.b32.xlu0 %v1618, 127
  %v1643 = vpop.permute.xlu0 %1642
  %1644 = vrot.lane.b32.xlu0 %v1619, 127
  %v1645 = vpop.permute.xlu0 %1644
  %1646 = vrot.lane.b32.xlu0 %v1620, 127
  %v1647 = vpop.permute.xlu0 %1646
  %v1648 = vsel %vm1082, %v1631, %v1633
  %v1649 = vsel %vm1082, %v1633, %v1635
  %v1650 = vsel %vm1082, %v1635, %v1637
  %v1651 = vsel %vm1082, %v1637, %v1639
  %v1652 = vsel %vm1082, %v1639, %v1641
  %v1653 = vsel %vm1082, %v1641, %v1643
  %v1654 = vsel %vm1082, %v1643, %v1645
  %v1655 = vsel %vm1082, %v1645, %v1647
  %v1664 = vmax.f32 %v1604, %v1648
  %v1665 = vmax.f32 %v1605, %v1649
  %v1666 = vmax.f32 %v1606, %v1650
  %v1667 = vmax.f32 %v1607, %v1651
  %v1668 = vmax.f32 %v1608, %v1652
  %v1669 = vmax.f32 %v1609, %v1653
  %v1670 = vmax.f32 %v1610, %v1654
  %v1671 = vmax.f32 %v1611, %v1655
  %1672 = vrot.lane.b32.xlu0 %v1612, 126
  %v1673 = vpop.permute.xlu0 %1672
  %1674 = vrot.lane.b32.xlu0 %v1613, 126
  %v1675 = vpop.permute.xlu0 %1674
  %1676 = vrot.lane.b32.xlu0 %v1614, 126
  %v1677 = vpop.permute.xlu0 %1676
  %1678 = vrot.lane.b32.xlu0 %v1615, 126
  %v1679 = vpop.permute.xlu0 %1678
  %1680 = vrot.lane.b32.xlu0 %v1616, 126
  %v1681 = vpop.permute.xlu0 %1680
  %1682 = vrot.lane.b32.xlu0 %v1617, 126
  %v1683 = vpop.permute.xlu0 %1682
  %1684 = vrot.lane.b32.xlu0 %v1618, 126
  %v1685 = vpop.permute.xlu0 %1684
  %1686 = vrot.lane.b32.xlu0 %v1619, 126
  %v1687 = vpop.permute.xlu0 %1686
  %1688 = vrot.lane.b32.xlu0 %v1620, 126
  %v1689 = vpop.permute.xlu0 %1688
  %v1690 = vsel %vm1157, %v1673, %v1675
  %v1691 = vsel %vm1157, %v1675, %v1677
  %v1692 = vsel %vm1157, %v1677, %v1679
  %v1693 = vsel %vm1157, %v1679, %v1681
  %v1694 = vsel %vm1157, %v1681, %v1683
  %v1695 = vsel %vm1157, %v1683, %v1685
  %v1696 = vsel %vm1157, %v1685, %v1687
  %v1697 = vsel %vm1157, %v1687, %v1689
  %v1706 = vmax.f32 %v1664, %v1690
  %v1707 = vmax.f32 %v1665, %v1691
  %v1708 = vmax.f32 %v1666, %v1692
  %v1709 = vmax.f32 %v1667, %v1693
  %v1710 = vmax.f32 %v1668, %v1694
  %v1711 = vmax.f32 %v1669, %v1695
  %v1712 = vmax.f32 %v1670, %v1696
  %v1713 = vmax.f32 %v1671, %v1697
  %1714 = vrot.lane.b32.xlu0 %v1612, 125
  %v1715 = vpop.permute.xlu0 %1714
  %1716 = vrot.lane.b32.xlu0 %v1613, 125
  %v1717 = vpop.permute.xlu0 %1716
  %1718 = vrot.lane.b32.xlu0 %v1614, 125
  %v1719 = vpop.permute.xlu0 %1718
  %1720 = vrot.lane.b32.xlu0 %v1615, 125
  %v1721 = vpop.permute.xlu0 %1720
  %1722 = vrot.lane.b32.xlu0 %v1616, 125
  %v1723 = vpop.permute.xlu0 %1722
  %1724 = vrot.lane.b32.xlu0 %v1617, 125
  %v1725 = vpop.permute.xlu0 %1724
  %1726 = vrot.lane.b32.xlu0 %v1618, 125
  %v1727 = vpop.permute.xlu0 %1726
  %1728 = vrot.lane.b32.xlu0 %v1619, 125
  %v1729 = vpop.permute.xlu0 %1728
  %1730 = vrot.lane.b32.xlu0 %v1620, 125
  %v1731 = vpop.permute.xlu0 %1730
  %v1732 = vsel %vm1232, %v1715, %v1717
  %v1733 = vsel %vm1232, %v1717, %v1719
  %v1734 = vsel %vm1232, %v1719, %v1721
  %v1735 = vsel %vm1232, %v1721, %v1723
  %v1736 = vsel %vm1232, %v1723, %v1725
  %v1737 = vsel %vm1232, %v1725, %v1727
  %v1738 = vsel %vm1232, %v1727, %v1729
  %v1739 = vsel %vm1232, %v1729, %v1731
  %v1748 = vmax.f32 %v1706, %v1732
  %v1749 = vmax.f32 %v1707, %v1733
  %v1750 = vmax.f32 %v1708, %v1734
  %v1751 = vmax.f32 %v1709, %v1735
  %v1752 = vmax.f32 %v1710, %v1736
  %v1753 = vmax.f32 %v1711, %v1737
  %v1754 = vmax.f32 %v1712, %v1738
  %v1755 = vmax.f32 %v1713, %v1739
  %1756 = vrot.lane.b32.xlu0 %v1612, 124
  %v1757 = vpop.permute.xlu0 %1756
  %1758 = vrot.lane.b32.xlu0 %v1613, 124
  %v1759 = vpop.permute.xlu0 %1758
  %1760 = vrot.lane.b32.xlu0 %v1614, 124
  %v1761 = vpop.permute.xlu0 %1760
  %1762 = vrot.lane.b32.xlu0 %v1615, 124
  %v1763 = vpop.permute.xlu0 %1762
  %1764 = vrot.lane.b32.xlu0 %v1616, 124
  %v1765 = vpop.permute.xlu0 %1764
  %1766 = vrot.lane.b32.xlu0 %v1617, 124
  %v1767 = vpop.permute.xlu0 %1766
  %1768 = vrot.lane.b32.xlu0 %v1618, 124
  %v1769 = vpop.permute.xlu0 %1768
  %1770 = vrot.lane.b32.xlu0 %v1619, 124
  %v1771 = vpop.permute.xlu0 %1770
  %1772 = vrot.lane.b32.xlu0 %v1620, 124
  %v1773 = vpop.permute.xlu0 %1772
  %v1774 = vsel %vm1307, %v1757, %v1759
  %v1775 = vsel %vm1307, %v1759, %v1761
  %v1776 = vsel %vm1307, %v1761, %v1763
  %v1777 = vsel %vm1307, %v1763, %v1765
  %v1778 = vsel %vm1307, %v1765, %v1767
  %v1779 = vsel %vm1307, %v1767, %v1769
  %v1780 = vsel %vm1307, %v1769, %v1771
  %v1781 = vsel %vm1307, %v1771, %v1773
  %v1790 = vmax.f32 %v1748, %v1774
  %v1791 = vmax.f32 %v1749, %v1775
  %v1792 = vmax.f32 %v1750, %v1776
  %v1793 = vmax.f32 %v1751, %v1777
  %v1794 = vmax.f32 %v1752, %v1778
  %v1795 = vmax.f32 %v1753, %v1779
  %v1796 = vmax.f32 %v1754, %v1780
  %v1797 = vmax.f32 %v1755, %v1781
  %1798 = vst [vmem:[#allocation6] sm:$0xff] %v1790
  %1799 = vst [vmem:[#allocation6 + $0x8] sm:$0xff] %v1791
  %1800 = vst [vmem:[#allocation6 + $0x10] sm:$0xff] %v1792
  %1801 = vst [vmem:[#allocation6 + $0x18] sm:$0xff] %v1793
  %1802 = vst [vmem:[#allocation6 + $0x20] sm:$0xff] %v1794
  %1803 = vst [vmem:[#allocation6 + $0x28] sm:$0xff] %v1795
  %1804 = vst [vmem:[#allocation6 + $0x30] sm:$0xff] %v1796
  %1805 = vst [vmem:[#allocation6 + $0x38] sm:$0xff] %v1797
  %v1806 = vld [vmem:[%s5] sm:$0xff]
  %vm1807 = vcmp.gt.f32.partialorder %v1806, 0.5
  %v1808 = vld [vmem:[#allocation6] sm:$0xff]
  %v1809 = vld [vmem:[#allocation6 + $0x8] sm:$0xff]
  %v1810 = vld [vmem:[#allocation6 + $0x10] sm:$0xff]
  %v1811 = vld [vmem:[#allocation6 + $0x18] sm:$0xff]
  %v1812 = vld [vmem:[#allocation6 + $0x20] sm:$0xff]
  %v1813 = vld [vmem:[#allocation6 + $0x28] sm:$0xff]
  %v1814 = vld [vmem:[#allocation6 + $0x30] sm:$0xff]
  %v1815 = vld [vmem:[#allocation6 + $0x38] sm:$0xff]
  %v1816 = vsel %vm1807, 1, 0
  %v1817 = vlaneseq
  %v1818 = vshrl.u32 %v1817, 7
  %v1819 = vsub.s32 0, %v1818
  %v1820 = vrot.slane %v1816, %v1819
  %v1821 = vlaneseq
  %v1822 = vshrl.u32 %v1821, 7
  %v1823 = vsub.s32 1, %v1822
  %v1824 = vrot.slane %v1816, %v1823
  %v1825 = vlaneseq
  %v1826 = vshrl.u32 %v1825, 7
  %v1827 = vsub.s32 2, %v1826
  %v1828 = vrot.slane %v1816, %v1827
  %v1829 = vlaneseq
  %v1830 = vshrl.u32 %v1829, 7
  %v1831 = vsub.s32 3, %v1830
  %v1832 = vrot.slane %v1816, %v1831
  %v1833 = vlaneseq
  %v1834 = vshrl.u32 %v1833, 7
  %v1835 = vsub.s32 4, %v1834
  %v1836 = vrot.slane %v1816, %v1835
  %v1837 = vlaneseq
  %v1838 = vshrl.u32 %v1837, 7
  %v1839 = vsub.s32 5, %v1838
  %v1840 = vrot.slane %v1816, %v1839
  %v1841 = vlaneseq
  %v1842 = vshrl.u32 %v1841, 7
  %v1843 = vsub.s32 6, %v1842
  %v1844 = vrot.slane %v1816, %v1843
  %v1845 = vlaneseq
  %v1846 = vshrl.u32 %v1845, 7
  %v1847 = vsub.s32 7, %v1846
  %v1848 = vrot.slane %v1816, %v1847
  %vm1849 = vcmp.eq.s32.totalorder %v1820, 1
  %vm1850 = vcmp.eq.s32.totalorder %v1824, 1
  %vm1851 = vcmp.eq.s32.totalorder %v1828, 1
  %vm1852 = vcmp.eq.s32.totalorder %v1832, 1
  %vm1853 = vcmp.eq.s32.totalorder %v1836, 1
  %vm1854 = vcmp.eq.s32.totalorder %v1840, 1
  %vm1855 = vcmp.eq.s32.totalorder %v1844, 1
  %vm1856 = vcmp.eq.s32.totalorder %v1848, 1
  %v1857 = vsel %vm1849, %v1808, 0.0
  %v1858 = vsel %vm1850, %v1809, 0.0
  %v1859 = vsel %vm1851, %v1810, 0.0
  %v1860 = vsel %vm1852, %v1811, 0.0
  %v1861 = vsel %vm1853, %v1812, 0.0
  %v1862 = vsel %vm1854, %v1813, 0.0
  %v1863 = vsel %vm1855, %v1814, 0.0
  %v1864 = vsel %vm1856, %v1815, 0.0
  %v1865 = vadd.f32 %v1857, %v1858
  %v1866 = vadd.f32 %v1865, %v1859
  %v1867 = vadd.f32 %v1866, %v1860
  %v1868 = vadd.f32 %v1867, %v1861
  %v1869 = vadd.f32 %v1868, %v1862
  %v1870 = vadd.f32 %v1869, %v1863
  %v1871 = vadd.f32 %v1870, %v1864
  %1872 = vadd.xlane.f32.xlu0 %v1871
  %v1873 = vpop.xlane.xlu0 %1872
  %v1874 = vmul.f32 %v1857, %v1857
  %v1875 = vmul.f32 %v1858, %v1858
  %v1876 = vmul.f32 %v1859, %v1859
  %v1877 = vmul.f32 %v1860, %v1860
  %v1878 = vmul.f32 %v1861, %v1861
  %v1879 = vmul.f32 %v1862, %v1862
  %v1880 = vmul.f32 %v1863, %v1863
  %v1881 = vmul.f32 %v1864, %v1864
  %v1882 = vadd.f32 %v1874, %v1875
  %v1883 = vadd.f32 %v1882, %v1876
  %v1884 = vadd.f32 %v1883, %v1877
  %v1885 = vadd.f32 %v1884, %v1878
  %v1886 = vadd.f32 %v1885, %v1879
  %v1887 = vadd.f32 %v1886, %v1880
  %v1888 = vadd.f32 %v1887, %v1881
  %1889 = vadd.xlane.f32.xlu0 %v1888
  %v1890 = vpop.xlane.xlu0 %1889
  %v1891 = vmul.f32 %v1873, 0.001953125
  %v1892 = vmul.f32 %v1890, 0.001953125
  %v1893 = vmul.f32 %v1891, %v1891
  %v1894 = vsub.f32 %v1892, %v1893
  %v1895 = vld [vmem:[%s3] sm:$0xff]
  %v1896 = vadd.f32 %v1894, 1e-05
  %v1897 = vrsqrt.pop %v1896
  %v1898 = vmul.f32 %v1895, %v1897
  %v1899 = vld [vmem:[%s4] sm:$0xff]
  %v1900 = vmul.f32 %v1891, %v1898
  %v1901 = vsub.f32 %v1899, %v1900
  %v1902 = vld [vmem:[#allocation6] sm:$0xff]
  %v1903 = vld [vmem:[#allocation6 + $0x8] sm:$0xff]
  %v1904 = vld [vmem:[#allocation6 + $0x10] sm:$0xff]
  %1906 = vset.pattern.permute.xlu0 0
  %1907 = vperm.xlu0 %1906, %v1898
  %v1908 = vpop.permute.xlu0 %1907
  %v1910 = vmul.f32 %v1902, %v1908
  %v1911 = vmul.f32 %v1903, %v1908
  %v1912 = vmul.f32 %v1904, %v1908
  %1914 = vset.pattern.permute.xlu0 0
  %1915 = vperm.xlu0 %1914, %v1901
  %v1916 = vpop.permute.xlu0 %1915
  %v1918 = vadd.f32 %v1910, %v1916
  %v1919 = vadd.f32 %v1911, %v1916
  %v1920 = vadd.f32 %v1912, %v1916
  %1921 = vst [vmem:[%s6] sm:$0xff] %v1918
  %1922 = vst [vmem:[%s6 + $0x8] sm:$0xff] %v1919
  %1923 = vst [vmem:[%s6 + $0x10] sm:$0xff] %v1920
  %v1924 = vld [vmem:[#allocation6 + $0x20] sm:$0xff]
  %v1925 = vld [vmem:[#allocation6 + $0x28] sm:$0xff]
  %v1926 = vld [vmem:[#allocation6 + $0x30] sm:$0xff]
  %v1927 = vld [vmem:[#allocation6 + $0x38] sm:$0xff]
  %v1928 = vmul.f32 %v1924, %v1908
  %v1929 = vmul.f32 %v1925, %v1908
  %v1930 = vmul.f32 %v1926, %v1908
  %v1931 = vmul.f32 %v1927, %v1908
  %v1932 = vadd.f32 %v1928, %v1916
  %v1933 = vadd.f32 %v1929, %v1916
  %v1934 = vadd.f32 %v1930, %v1916
  %v1935 = vadd.f32 %v1931, %v1916
  %1940 = vrot.lane.b32.xlu0 %v1932, 64
  %v1941 = vpop.permute.xlu0 %1940
  %1942 = vrot.lane.b32.xlu0 %v1933, 64
  %v1943 = vpop.permute.xlu0 %1942
  %1944 = vrot.lane.b32.xlu0 %v1934, 64
  %v1945 = vpop.permute.xlu0 %1944
  %1946 = vrot.lane.b32.xlu0 %v1935, 64
  %v1947 = vpop.permute.xlu0 %1946
  %vm1948 = vcmask 523264
  %v1949 = vsel %vm1948, %v1941, %v1943
  %v1950 = vsel %vm1948, %v1943, %v1945
  %v1951 = vsel %vm1948, %v1945, %v1947
  %1955 = vst [vmem:[%s6 + $0x18] sm:$0xff] %v1949
  %1956 = vst [vmem:[%s6 + $0x20] sm:$0xff] %v1950
  %1957 = vst [vmem:[%s6 + $0x28] sm:$0xff] %v1951
  // Predicated region
  $region26: #{b_encoder_conv_forward.2} parent=0 // pred_check
    _
  $region27: #{b_encoder_conv_forward.2} parent=0 // pred_check_branch
    %1959 = sbr.rel (0) target = $region29
  $region28: #{b_encoder_conv_forward.2} parent=0 // pred_region
    _
  $region29: #{b_encoder_conv_forward.2} parent=0 // pred_fallthru
    _
  // Predicated region
  $region30: #{b_encoder_conv_forward.2} parent=0 // pred_check
    _
  $region31: #{b_encoder_conv_forward.2} parent=0 // pred_check_branch
    %1961 = sbr.rel (0) target = $region33
  $region32: #{b_encoder_conv_forward.2} parent=0 // pred_region
    _
  $region33: #{b_encoder_conv_forward.2} parent=0 // pred_fallthru
    _

</llo_original>
